<compile_context>
chip_gen: v6e
topology: v6e:2x2x1
jax: 0.10.0
libtpu: 0.0.40
codegen_flags: <defaults>
</compile_context>

<pallas_src>
import functools
import math

import jax
import jax.numpy as jnp
import numpy as np
from jax.experimental import pallas as pl
from jax.experimental.pallas import tpu as pltpu


PER_LAYER_PARAMS = ("ln1_g", "ln1_b", "wqkv", "bqkv", "wo", "bo",
                    "ln2_g", "ln2_b", "w1", "b1", "w2", "b2")
FINAL_PARAMS = ("lnf_g", "lnf_b", "proj")
PARAM_ORDER = PER_LAYER_PARAMS + FINAL_PARAMS


# --------------------- shared math (kernel == reference) -------------------- #

def _mm(a, w):
    """MXU matmul: bf16 operands, f32 accumulation."""
    return jnp.dot(a.astype(jnp.bfloat16), w.astype(jnp.bfloat16),
                   preferred_element_type=jnp.float32)


def _mm_nt(a, b):
    """a @ b.T, bf16 operands, f32 accumulation (contract last dims)."""
    return jax.lax.dot_general(
        a.astype(jnp.bfloat16), b.astype(jnp.bfloat16),
        dimension_numbers=(((1,), (1,)), ((), ())),
        preferred_element_type=jnp.float32)


def _layer_norm(x, g, b, eps=1e-5):
    mu = jnp.mean(x, axis=-1, keepdims=True)
    var = jnp.mean(jnp.square(x - mu), axis=-1, keepdims=True)
    return (x - mu) * jax.lax.rsqrt(var + eps) * g + b


def _quick_gelu(x, recip):
    # CLIP QuickGELU: x * sigmoid(1.702 x) = x / (1 + exp(-1.702 x))
    return x * recip(1.0 + jnp.exp(-1.702 * x))


def _layer_block(x, mask, p, *, num_heads, recip):
    """One pre-LN residual transformer block on a stacked (Bt*L, D) slab."""
    M, D = x.shape
    hd = D // num_heads
    scale = 1.0 / math.sqrt(hd)

    # ---- fused QKV projection: one lane-dense (D, 3D) matmul ---- #
    h = _layer_norm(x, p["ln1_g"], p["ln1_b"])
    qkv = _mm(h, p["wqkv"]) + p["bqkv"]                       # (M, 3D) f32

    # ---- per-head scores / context (32-lane slices ride the XLU) ---- #
    ctx = []
    for hh in range(num_heads):
        lo = hh * hd
        qh = qkv[:, lo:lo + hd]
        kh = qkv[:, D + lo:D + lo + hd]
        vh = qkv[:, 2 * D + lo:2 * D + lo + hd]
        s = _mm_nt(qh, kh) * scale                            # (M, M)
        s = jnp.where(mask, s, -1e30)                         # block-diag causal
        s = s - jnp.max(s, axis=-1, keepdims=True)
        e = jnp.exp(s)
        pr = e * recip(jnp.sum(e, axis=-1, keepdims=True))
        ctx.append(_mm(pr, vh))                               # (M, hd)
    ctx = jnp.concatenate(ctx, axis=-1)                       # (M, D)

    # ---- fused output projection: one (D, D) matmul ---- #
    x = x + _mm(ctx, p["wo"]) + p["bo"]

    # ---- pre-LN MLP with QuickGELU ---- #
    h2 = _layer_norm(x, p["ln2_g"], p["ln2_b"])
    h2 = _quick_gelu(_mm(h2, p["w1"]) + p["b1"], recip)
    return x + _mm(h2, p["w2"]) + p["b2"]


def _final_head(rows, lnf_g, lnf_b, proj):
    """ln_final + text_projection on already-gathered EOT rows (Bt, D)."""
    return _mm(_layer_norm(rows, lnf_g, lnf_b), proj)         # (Bt, Dp)


# --------------------- shared wrapper/reference preprocessing --------------- #

def _make_mask(batch_tile, seq_len):
    """Block-diagonal causal mask over the stacked (Bt*L, Bt*L) scores."""
    r = np.arange(batch_tile * seq_len)
    same = (r[:, None] // seq_len) == (r[None, :] // seq_len)
    causal = r[None, :] <= r[:, None]
    return jnp.asarray((same & causal).astype(np.int32))


def _prep_inputs(params, prompts, tokenized_prompts, batch_tile):
    B, L, D = prompts.shape
    Bt = batch_tile
    nbt = pl.cdiv(B, Bt)
    B_pad = nbt * Bt
    # Like CLIP: EOT position = argmax over token ids (assumes EOT has the
    # largest id in the vocabulary).  Trivial XLA reduce; rides into the
    # kernel via scalar prefetch (SMEM).
    eot = jnp.argmax(tokenized_prompts, axis=-1).astype(jnp.int32)
    p = prompts.astype(jnp.bfloat16)
    if B_pad != B:
        p = jnp.pad(p, ((0, B_pad - B), (0, 0), (0, 0)))
        eot = jnp.pad(eot, (0, B_pad - B))
    p_flat = p.reshape(B_pad * L, D)                          # (B_pad*L, D) bf16
    pos_tiled = jnp.tile(params["pos"], (Bt, 1))              # (Bt*L, D) f32
    mask = _make_mask(Bt, L)                                  # (Bt*L, Bt*L) i32
    return p_flat, pos_tiled, mask, eot, nbt, B_pad


def _default_batch_tile(B, L):
    # Stack sequences so the matmul M dim approaches ~128 rows.
    return max(1, min(B, 128 // L)) if L <= 128 else 1


# ------------------------------ Pallas kernel ------------------------------- #

def _text_encoder_kernel(eot_ref, prompts_ref, pos_ref, mask_ref, *rest,
                         num_heads, seq_len, batch_tile):
    x_sc = rest[-1]                      # (Bt*L, D) f32 residual-stream carry
    out_ref = rest[-2]
    prefs = dict(zip(PARAM_ORDER, rest[:-2]))

    bt = pl.program_id(0)
    layer = pl.program_id(1)
    n_layers = pl.num_programs(1)
    L, Bt = seq_len, batch_tile
    M = Bt * L

    recip = lambda v: pl.reciprocal(v, approx=True)           # EUP slot
    mask = mask_ref[...] != 0

    # Layer 0: materialize the residual stream into the VMEM scratch.
    @pl.when(layer == 0)
    def _():
        x_sc[...] = prompts_ref[...].astype(jnp.float32) + pos_ref[...]

    layer_p = {k: prefs[k][0] for k in PER_LAYER_PARAMS}      # this layer's slabs
    x = _layer_block(x_sc[...], mask, layer_p,
                     num_heads=num_heads, recip=recip)
    x_sc[...] = x                                             # carry to next layer

    # Last layer: gather EOT rows, then ln_final + text_projection on (Bt, D).
    @pl.when(layer == n_layers - 1)
    def _():
        rid = jax.lax.broadcasted_iota(jnp.int32, (M, 1), 0)
        rows = []
        for i in range(Bt):
            tgt = i * L + eot_ref[bt * Bt + i]
            sel = (rid == tgt).astype(jnp.float32)
            rows.append(jnp.sum(sel * x, axis=0, keepdims=True))   # (1, D)
        rows = jnp.concatenate(rows, axis=0)                       # (Bt, D)
        out = _final_head(rows, prefs["lnf_g"][...], prefs["lnf_b"][...],
                          prefs["proj"][...])
        out_ref[0] = out.astype(out_ref.dtype)


def text_encoder_forward(params, prompts, tokenized_prompts, *,
                         num_heads=4, batch_tile=None):
    """prompts: (B, L, D) f32, tokenized_prompts: (B, L) int32 -> (B, Dp) f32."""
    B, L, D = prompts.shape
    n_layers = params["ln1_g"].shape[0]
    Dp = params["proj"].shape[1]
    Bt = batch_tile if batch_tile is not None else _default_batch_tile(B, L)
    p_flat, pos_tiled, mask, eot, nbt, B_pad = _prep_inputs(
        params, prompts, tokenized_prompts, Bt)
    M = Bt * L

    def layer_spec(arr):   # streamed per-layer weight slab (double-buffered)
        nd = arr.ndim
        return pl.BlockSpec((1,) + arr.shape[1:],
                            lambda bt, l, eot, nd=nd: (l,) + (0,) * (nd - 1))

    def const_spec(arr):   # small resident block, index constant across grid
        nd = arr.ndim
        return pl.BlockSpec(arr.shape, lambda bt, l, eot, nd=nd: (0,) * nd)

    in_specs = [pl.BlockSpec((M, D), lambda bt, l, eot: (bt, 0)),  # prompt slab
                const_spec(pos_tiled),
                const_spec(mask)]
    operands = [p_flat, pos_tiled, mask]
    for name in PER_LAYER_PARAMS:
        in_specs.append(layer_spec(params[name]))
        operands.append(params[name])
    for name in FINAL_PARAMS:
        in_specs.append(const_spec(params[name]))
        operands.append(params[name])

    kernel = functools.partial(_text_encoder_kernel, num_heads=num_heads,
                               seq_len=L, batch_tile=Bt)
    out = pl.pallas_call(
        kernel,
        out_shape=jax.ShapeDtypeStruct((nbt, Bt, Dp), jnp.float32),
        grid_spec=pltpu.PrefetchScalarGridSpec(
            num_scalar_prefetch=1,
            grid=(nbt, n_layers),                 # batch tiles x layers
            in_specs=in_specs,
            out_specs=pl.BlockSpec((1, Bt, Dp), lambda bt, l, eot: (bt, 0, 0)),
            scratch_shapes=[pltpu.VMEM((M, D), jnp.float32)],
        ),
        compiler_params=pltpu.CompilerParams(
            dimension_semantics=("parallel", "arbitrary")),
    )(eot, *operands)
    return out.reshape(B_pad, Dp)[:B]


# --------------------------- parameter construction ------------------------- #

def init_params(key, *, num_layers=2, width=128, num_heads=4, mlp_ratio=4,
                proj_dim=128, seq_len=8):
    hidden = mlp_ratio * width
    ks = iter(jax.random.split(key, 24))

    def nrm(shape, std):
        return std * jax.random.normal(next(ks), shape, jnp.float32)

    def w(shape, std):                     # weights shipped as bf16
        return nrm(shape, std).astype(jnp.bfloat16)

    return {
        "pos":   nrm((seq_len, width), 0.01),
        "ln1_g": 1.0 + nrm((num_layers, 1, width), 0.02),
        "ln1_b": nrm((num_layers, 1, width), 0.02),
        "wqkv":  w((num_layers, width, 3 * width), width ** -0.5),
        "bqkv":  nrm((num_layers, 1, 3 * width), 0.02),
        "wo":    w((num_layers, width, width), width ** -0.5),
        "bo":    nrm((num_layers, 1, width), 0.02),
        "ln2_g": 1.0 + nrm((num_layers, 1, width), 0.02),
        "ln2_b": nrm((num_layers, 1, width), 0.02),
        "w1":    w((num_layers, width, hidden), width ** -0.5),
        "b1":    nrm((num_layers, 1, hidden), 0.02),
        "w2":    w((num_layers, hidden, width), hidden ** -0.5),
        "b2":    nrm((num_layers, 1, width), 0.02),
        "lnf_g": 1.0 + nrm((1, width), 0.02),
        "lnf_b": nrm((1, width), 0.02),
        "proj":  w((width, proj_dim), width ** -0.5),
    }


# ------------------------------ pure-JAX reference -------------------------- #

def reference_forward(params, prompts, tokenized_prompts, *,
                      num_heads=4, batch_tile=None):
    B, L, D = prompts.shape
    n_layers = params["ln1_g"].shape[0]
    Bt = batch_tile if batch_tile is not None else _default_batch_tile(B, L)
    p_flat, pos_tiled, mask_i, eot, nbt, B_pad = _prep_inputs(
        params, prompts, tokenized_prompts, Bt)
    mask = mask_i != 0
    M = Bt * L
    recip = lambda v: 1.0 / v      # exact divide (kernel uses EUP approx recip)

    outs = []
    for t in range(nbt):
        x = p_flat[t * M:(t + 1) * M].astype(jnp.float32) + pos_tiled
        for l in range(n_layers):
            layer_p = {k: params[k][l] for k in PER_LAYER_PARAMS}
            x = _layer_block(x, mask, layer_p, num_heads=num_heads, recip=recip)
        rows = jnp.stack([x[i * L + eot[t * Bt + i]] for i in range(Bt)], axis=0)
        outs.append(_final_head(rows, params["lnf_g"], params["lnf_b"],
                                params["proj"]))
    return jnp.concatenate(outs, axis=0)[:B]


# ----------------------------------- main ------------------------------------ #

if __name__ == "__main__":
    key = jax.random.PRNGKey(0)
    kp, kx, kt = jax.random.split(key, 3)

    B, L, D, H, NL, DP = 2, 8, 128, 4, 2, 128
    params = init_params(kp, num_layers=NL, width=D, num_heads=H,
                         proj_dim=DP, seq_len=L)
    prompts = 0.1 * jax.random.normal(kx, (B, L, D), jnp.float32)
    tokenized_prompts = jax.random.randint(kt, (B, L), 1, 49408, dtype=jnp.int32)

    out = text_encoder_forward(params, prompts, tokenized_prompts, num_heads=H)
    out = jax.block_until_ready(out)

    ref = reference_forward(params, prompts, tokenized_prompts, num_heads=H)
    ref = jax.block_until_ready(ref)

    assert out.shape == ref.shape, (out.shape, ref.shape)
    # Kernel and reference share the same bf16-MXU / f32-epilogue math; the
    # only numeric difference is the kernel's EUP approximate reciprocal
    # (softmax denominator, QuickGELU sigmoid) vs. the reference's exact
    # divide, hence the slightly loosened tolerance.
    np.testing.assert_allclose(np.asarray(out), np.asarray(ref),
                               rtol=2e-2, atol=2e-2)
    print("KERNEL_OK")
</pallas_src>

<mosaic_0001>
module attributes {stable_mosaic.version = 11 : i64} {
  func.func @_text_encoder_kernel(%arg0: i32, %arg1: i32, %arg2: memref<2xi32, #tpu.memory_space<smem>>, %arg3: memref<16x128xbf16, #tpu.memory_space<vmem>>, %arg4: memref<16x128xf32, #tpu.memory_space<vmem>>, %arg5: memref<16x16xi32, #tpu.memory_space<vmem>>, %arg6: memref<1x1x128xf32, #tpu.memory_space<vmem>>, %arg7: memref<1x1x128xf32, #tpu.memory_space<vmem>>, %arg8: memref<1x128x384xbf16, #tpu.memory_space<vmem>>, %arg9: memref<1x1x384xf32, #tpu.memory_space<vmem>>, %arg10: memref<1x128x128xbf16, #tpu.memory_space<vmem>>, %arg11: memref<1x1x128xf32, #tpu.memory_space<vmem>>, %arg12: memref<1x1x128xf32, #tpu.memory_space<vmem>>, %arg13: memref<1x1x128xf32, #tpu.memory_space<vmem>>, %arg14: memref<1x128x512xbf16, #tpu.memory_space<vmem>>, %arg15: memref<1x1x512xf32, #tpu.memory_space<vmem>>, %arg16: memref<1x512x128xbf16, #tpu.memory_space<vmem>>, %arg17: memref<1x1x128xf32, #tpu.memory_space<vmem>>, %arg18: memref<1x128xf32, #tpu.memory_space<vmem>>, %arg19: memref<1x128xf32, #tpu.memory_space<vmem>>, %arg20: memref<128x128xbf16, #tpu.memory_space<vmem>>, %arg21: memref<1x2x128xf32, #tpu.memory_space<vmem>>, %arg22: memref<16x128xf32, #tpu.memory_space<vmem>>) attributes {dimension_semantics = [#tpu.dimension_semantics<parallel>, #tpu.dimension_semantics<arbitrary>], iteration_bounds = array<i64: 1, 2>, scalar_prefetch = 1 : i64, scratch_operands = 1 : i64, tpu.core_type = #tpu.core_type<tc>, window_params = [{transform_indices = @transform_0, window_bounds = array<i64: 16, 128>}, {pipeline_mode = #tpu.pipeline_mode<synchronous>, transform_indices = @transform_1, window_bounds = array<i64: 16, 128>}, {pipeline_mode = #tpu.pipeline_mode<synchronous>, transform_indices = @transform_2, window_bounds = array<i64: 16, 16>}, {transform_indices = @transform_3, window_bounds = array<i64: 1, 1, 128>}, {transform_indices = @transform_4, window_bounds = array<i64: 1, 1, 128>}, {transform_indices = @transform_5, window_bounds = array<i64: 1, 128, 384>}, {transform_indices = @transform_6, window_bounds = array<i64: 1, 1, 384>}, {transform_indices = @transform_7, window_bounds = array<i64: 1, 128, 128>}, {transform_indices = @transform_8, window_bounds = array<i64: 1, 1, 128>}, {transform_indices = @transform_9, window_bounds = array<i64: 1, 1, 128>}, {transform_indices = @transform_10, window_bounds = array<i64: 1, 1, 128>}, {transform_indices = @transform_11, window_bounds = array<i64: 1, 128, 512>}, {transform_indices = @transform_12, window_bounds = array<i64: 1, 1, 512>}, {transform_indices = @transform_13, window_bounds = array<i64: 1, 512, 128>}, {transform_indices = @transform_14, window_bounds = array<i64: 1, 1, 128>}, {pipeline_mode = #tpu.pipeline_mode<synchronous>, transform_indices = @transform_15, window_bounds = array<i64: 1, 128>}, {pipeline_mode = #tpu.pipeline_mode<synchronous>, transform_indices = @transform_16, window_bounds = array<i64: 1, 128>}, {pipeline_mode = #tpu.pipeline_mode<synchronous>, transform_indices = @transform_17, window_bounds = array<i64: 128, 128>}, {transform_indices = @transform_18, window_bounds = array<i64: 1, 2, 128>}]} {
    %c0 = arith.constant 0 : index
    %c0_0 = arith.constant 0 : index
    %0 = vector.load %arg5[%c0, %c0_0] : memref<16x16xi32, #tpu.memory_space<vmem>>, vector<16x16xi32>
    %c0_i32 = arith.constant 0 : i32
    %1 = vector.broadcast %c0_i32 : i32 to vector<16x16xi32>
    %2 = arith.cmpi ne, %0, %1 : vector<16x16xi32>
    %c0_i32_1 = arith.constant 0 : i32
    %3 = arith.cmpi eq, %arg1, %c0_i32_1 : i32
    %4 = arith.extui %3 : i1 to i32
    %c0_i32_2 = arith.constant 0 : i32
    %5 = arith.cmpi ne, %4, %c0_i32_2 : i32
    scf.if %5 {
      %c0_83 = arith.constant 0 : index
      %c0_84 = arith.constant 0 : index
      %197 = vector.load %arg3[%c0_83, %c0_84] : memref<16x128xbf16, #tpu.memory_space<vmem>>, vector<16x128xbf16>
      %198 = arith.extf %197 : vector<16x128xbf16> to vector<16x128xf32>
      %c0_85 = arith.constant 0 : index
      %c0_86 = arith.constant 0 : index
      %199 = vector.load %arg4[%c0_85, %c0_86] : memref<16x128xf32, #tpu.memory_space<vmem>>, vector<16x128xf32>
      %200 = arith.addf %198, %199 : vector<16x128xf32>
      %c0_87 = arith.constant 0 : index
      %c0_88 = arith.constant 0 : index
      %201 = vector.load %arg22[%c0_87, %c0_88] : memref<16x128xf32, #tpu.memory_space<vmem>>, vector<16x128xf32>
      tpu.vector_store %arg22[%c0_87, %c0_88], %200 {strides = array<i32>} : memref<16x128xf32, #tpu.memory_space<vmem>>, vector<16x128xf32>,
    } else {
    }
    %c0_3 = arith.constant 0 : index
    %c0_4 = arith.constant 0 : index
    %c0_5 = arith.constant 0 : index
    %6 = vector.load %arg6[%c0_3, %c0_4, %c0_5] : memref<1x1x128xf32, #tpu.memory_space<vmem>>, vector<1x1x128xf32>
    %7 = vector.shape_cast %6 : vector<1x1x128xf32> to vector<1x128xf32>
    %c0_6 = arith.constant 0 : index
    %c0_7 = arith.constant 0 : index
    %c0_8 = arith.constant 0 : index
    %8 = vector.load %arg7[%c0_6, %c0_7, %c0_8] : memref<1x1x128xf32, #tpu.memory_space<vmem>>, vector<1x1x128xf32>
    %9 = vector.shape_cast %8 : vector<1x1x128xf32> to vector<1x128xf32>
    %c0_9 = arith.constant 0 : index
    %c0_10 = arith.constant 0 : index
    %c0_11 = arith.constant 0 : index
    %10 = vector.load %arg8[%c0_9, %c0_10, %c0_11] : memref<1x128x384xbf16, #tpu.memory_space<vmem>>, vector<1x128x384xbf16>
    %11 = vector.shape_cast %10 : vector<1x128x384xbf16> to vector<128x384xbf16>
    %c0_12 = arith.constant 0 : index
    %c0_13 = arith.constant 0 : index
    %c0_14 = arith.constant 0 : index
    %12 = vector.load %arg9[%c0_12, %c0_13, %c0_14] : memref<1x1x384xf32, #tpu.memory_space<vmem>>, vector<1x1x384xf32>
    %13 = vector.shape_cast %12 : vector<1x1x384xf32> to vector<1x384xf32>
    %c0_15 = arith.constant 0 : index
    %c0_16 = arith.constant 0 : index
    %c0_17 = arith.constant 0 : index
    %14 = vector.load %arg10[%c0_15, %c0_16, %c0_17] : memref<1x128x128xbf16, #tpu.memory_space<vmem>>, vector<1x128x128xbf16>
    %15 = vector.shape_cast %14 : vector<1x128x128xbf16> to vector<128x128xbf16>
    %c0_18 = arith.constant 0 : index
    %c0_19 = arith.constant 0 : index
    %c0_20 = arith.constant 0 : index
    %16 = vector.load %arg11[%c0_18, %c0_19, %c0_20] : memref<1x1x128xf32, #tpu.memory_space<vmem>>, vector<1x1x128xf32>
    %17 = vector.shape_cast %16 : vector<1x1x128xf32> to vector<1x128xf32>
    %c0_21 = arith.constant 0 : index
    %c0_22 = arith.constant 0 : index
    %c0_23 = arith.constant 0 : index
    %18 = vector.load %arg12[%c0_21, %c0_22, %c0_23] : memref<1x1x128xf32, #tpu.memory_space<vmem>>, vector<1x1x128xf32>
    %19 = vector.shape_cast %18 : vector<1x1x128xf32> to vector<1x128xf32>
    %c0_24 = arith.constant 0 : index
    %c0_25 = arith.constant 0 : index
    %c0_26 = arith.constant 0 : index
    %20 = vector.load %arg13[%c0_24, %c0_25, %c0_26] : memref<1x1x128xf32, #tpu.memory_space<vmem>>, vector<1x1x128xf32>
    %21 = vector.shape_cast %20 : vector<1x1x128xf32> to vector<1x128xf32>
    %c0_27 = arith.constant 0 : index
    %c0_28 = arith.constant 0 : index
    %c0_29 = arith.constant 0 : index
    %22 = vector.load %arg14[%c0_27, %c0_28, %c0_29] : memref<1x128x512xbf16, #tpu.memory_space<vmem>>, vector<1x128x512xbf16>
    %23 = vector.shape_cast %22 : vector<1x128x512xbf16> to vector<128x512xbf16>
    %c0_30 = arith.constant 0 : index
    %c0_31 = arith.constant 0 : index
    %c0_32 = arith.constant 0 : index
    %24 = vector.load %arg15[%c0_30, %c0_31, %c0_32] : memref<1x1x512xf32, #tpu.memory_space<vmem>>, vector<1x1x512xf32>
    %25 = vector.shape_cast %24 : vector<1x1x512xf32> to vector<1x512xf32>
    %c0_33 = arith.constant 0 : index
    %c0_34 = arith.constant 0 : index
    %c0_35 = arith.constant 0 : index
    %26 = vector.load %arg16[%c0_33, %c0_34, %c0_35] : memref<1x512x128xbf16, #tpu.memory_space<vmem>>, vector<1x512x128xbf16>
    %27 = vector.shape_cast %26 : vector<1x512x128xbf16> to vector<512x128xbf16>
    %c0_36 = arith.constant 0 : index
    %c0_37 = arith.constant 0 : index
    %c0_38 = arith.constant 0 : index
    %28 = vector.load %arg17[%c0_36, %c0_37, %c0_38] : memref<1x1x128xf32, #tpu.memory_space<vmem>>, vector<1x1x128xf32>
    %29 = vector.shape_cast %28 : vector<1x1x128xf32> to vector<1x128xf32>
    %c0_39 = arith.constant 0 : index
    %c0_40 = arith.constant 0 : index
    %30 = vector.load %arg22[%c0_39, %c0_40] : memref<16x128xf32, #tpu.memory_space<vmem>>, vector<16x128xf32>
    %cst = arith.constant dense<0.000000e+00> : vector<16xf32>
    %31 = vector.multi_reduction <add>, %30, %cst [1] : vector<16x128xf32> to vector<16xf32>
    %32 = vector.shape_cast %31 : vector<16xf32> to vector<16x1xf32>
    %cst_41 = arith.constant 1.280000e+02 : f32
    %33 = vector.broadcast %cst_41 : f32 to vector<16x1xf32>
    %34 = arith.divf %32, %33 : vector<16x1xf32>
    %35 = vector.broadcast %34 : vector<16x1xf32> to vector<16x128xf32>
    %36 = arith.subf %30, %35 : vector<16x128xf32>
    %37 = arith.mulf %36, %36 : vector<16x128xf32>
    %cst_42 = arith.constant dense<0.000000e+00> : vector<16xf32>
    %38 = vector.multi_reduction <add>, %37, %cst_42 [1] : vector<16x128xf32> to vector<16xf32>
    %39 = vector.shape_cast %38 : vector<16xf32> to vector<16x1xf32>
    %cst_43 = arith.constant 1.280000e+02 : f32
    %40 = vector.broadcast %cst_43 : f32 to vector<16x1xf32>
    %41 = arith.divf %39, %40 : vector<16x1xf32>
    %42 = vector.broadcast %34 : vector<16x1xf32> to vector<16x128xf32>
    %43 = arith.subf %30, %42 : vector<16x128xf32>
    %cst_44 = arith.constant 9.99999974E-6 : f32
    %44 = vector.broadcast %cst_44 : f32 to vector<16x1xf32>
    %45 = arith.addf %41, %44 : vector<16x1xf32>
    %46 = math.rsqrt %45 : vector<16x1xf32>
    %47 = vector.broadcast %46 : vector<16x1xf32> to vector<16x128xf32>
    %48 = arith.mulf %43, %47 : vector<16x128xf32>
    %49 = vector.broadcast %7 : vector<1x128xf32> to vector<16x128xf32>
    %50 = arith.mulf %48, %49 : vector<16x128xf32>
    %51 = vector.broadcast %9 : vector<1x128xf32> to vector<16x128xf32>
    %52 = arith.addf %50, %51 : vector<16x128xf32>
    %53 = arith.truncf %52 : vector<16x128xf32> to vector<16x128xbf16>
    %cst_45 = arith.constant dense<0.000000e+00> : vector<16x384xf32>
    %54 = tpu.matmul %53, %11, %cst_45 {dimension_numbers = #tpu.dot_dimension_numbers<[1], [0], [0], [1], [0, 0, 1, 1], [], []>} : vector<16x128xbf16>, vector<128x384xbf16>, vector<16x384xf32> -> vector<16x384xf32>
    %55 = vector.broadcast %13 : vector<1x384xf32> to vector<16x384xf32>
    %56 = arith.addf %54, %55 : vector<16x384xf32>
    %57 = vector.extract_strided_slice %56 {offsets = [0, 0], sizes = [16, 32], strides = [1, 1]} : vector<16x384xf32> to vector<16x32xf32>
    %58 = vector.extract_strided_slice %56 {offsets = [0, 128], sizes = [16, 32], strides = [1, 1]} : vector<16x384xf32> to vector<16x32xf32>
    %59 = vector.extract_strided_slice %56 {offsets = [0, 256], sizes = [16, 32], strides = [1, 1]} : vector<16x384xf32> to vector<16x32xf32>
    %60 = arith.truncf %57 : vector<16x32xf32> to vector<16x32xbf16>
    %61 = arith.truncf %58 : vector<16x32xf32> to vector<16x32xbf16>
    %cst_46 = arith.constant dense<0.000000e+00> : vector<16x16xf32>
    %62 = tpu.matmul %60, %61, %cst_46 {dimension_numbers = #tpu.dot_dimension_numbers<[1], [1], [0], [0], [0, 0, 1, 0], [], []>} : vector<16x32xbf16>, vector<16x32xbf16>, vector<16x16xf32> -> vector<16x16xf32>
    %cst_47 = arith.constant 0.176776692 : f32
    %63 = vector.broadcast %cst_47 : f32 to vector<16x16xf32>
    %64 = arith.mulf %62, %63 : vector<16x16xf32>
    %cst_48 = arith.constant -1.000000e+30 : f32
    %65 = vector.broadcast %cst_48 : f32 to vector<16x16xf32>
    %66 = arith.select %2, %64, %65 : vector<16x16xi1>, vector<16x16xf32>
    %cst_49 = arith.constant dense<0xFF800000> : vector<16xf32>
    %67 = vector.multi_reduction <maximumf>, %66, %cst_49 [1] : vector<16x16xf32> to vector<16xf32>
    %68 = vector.shape_cast %67 : vector<16xf32> to vector<16x1xf32>
    %69 = vector.broadcast %68 : vector<16x1xf32> to vector<16x16xf32>
    %70 = arith.subf %66, %69 : vector<16x16xf32>
    %71 = math.exp %70 : vector<16x16xf32>
    %cst_50 = arith.constant dense<0.000000e+00> : vector<16xf32>
    %72 = vector.multi_reduction <add>, %71, %cst_50 [1] : vector<16x16xf32> to vector<16xf32>
    %73 = vector.shape_cast %72 : vector<16xf32> to vector<16x1xf32>
    %74 = tpu.reciprocal %73 {approx = true} : vector<16x1xf32> -> vector<16x1xf32>
    %75 = vector.broadcast %74 : vector<16x1xf32> to vector<16x16xf32>
    %76 = arith.mulf %71, %75 : vector<16x16xf32>
    %77 = arith.truncf %76 : vector<16x16xf32> to vector<16x16xbf16>
    %78 = arith.truncf %59 : vector<16x32xf32> to vector<16x32xbf16>
    %cst_51 = arith.constant dense<0.000000e+00> : vector<16x32xf32>
    %79 = tpu.matmul %77, %78, %cst_51 {dimension_numbers = #tpu.dot_dimension_numbers<[1], [0], [0], [1], [0, 0, 1, 1], [], []>} : vector<16x16xbf16>, vector<16x32xbf16>, vector<16x32xf32> -> vector<16x32xf32>
    %80 = vector.extract_strided_slice %56 {offsets = [0, 32], sizes = [16, 32], strides = [1, 1]} : vector<16x384xf32> to vector<16x32xf32>
    %81 = vector.extract_strided_slice %56 {offsets = [0, 160], sizes = [16, 32], strides = [1, 1]} : vector<16x384xf32> to vector<16x32xf32>
    %82 = vector.extract_strided_slice %56 {offsets = [0, 288], sizes = [16, 32], strides = [1, 1]} : vector<16x384xf32> to vector<16x32xf32>
    %83 = arith.truncf %80 : vector<16x32xf32> to vector<16x32xbf16>
    %84 = arith.truncf %81 : vector<16x32xf32> to vector<16x32xbf16>
    %cst_52 = arith.constant dense<0.000000e+00> : vector<16x16xf32>
    %85 = tpu.matmul %83, %84, %cst_52 {dimension_numbers = #tpu.dot_dimension_numbers<[1], [1], [0], [0], [0, 0, 1, 0], [], []>} : vector<16x32xbf16>, vector<16x32xbf16>, vector<16x16xf32> -> vector<16x16xf32>
    %cst_53 = arith.constant 0.176776692 : f32
    %86 = vector.broadcast %cst_53 : f32 to vector<16x16xf32>
    %87 = arith.mulf %85, %86 : vector<16x16xf32>
    %cst_54 = arith.constant -1.000000e+30 : f32
    %88 = vector.broadcast %cst_54 : f32 to vector<16x16xf32>
    %89 = arith.select %2, %87, %88 : vector<16x16xi1>, vector<16x16xf32>
    %cst_55 = arith.constant dense<0xFF800000> : vector<16xf32>
    %90 = vector.multi_reduction <maximumf>, %89, %cst_55 [1] : vector<16x16xf32> to vector<16xf32>
    %91 = vector.shape_cast %90 : vector<16xf32> to vector<16x1xf32>
    %92 = vector.broadcast %91 : vector<16x1xf32> to vector<16x16xf32>
    %93 = arith.subf %89, %92 : vector<16x16xf32>
    %94 = math.exp %93 : vector<16x16xf32>
    %cst_56 = arith.constant dense<0.000000e+00> : vector<16xf32>
    %95 = vector.multi_reduction <add>, %94, %cst_56 [1] : vector<16x16xf32> to vector<16xf32>
    %96 = vector.shape_cast %95 : vector<16xf32> to vector<16x1xf32>
    %97 = tpu.reciprocal %96 {approx = true} : vector<16x1xf32> -> vector<16x1xf32>
    %98 = vector.broadcast %97 : vector<16x1xf32> to vector<16x16xf32>
    %99 = arith.mulf %94, %98 : vector<16x16xf32>
    %100 = arith.truncf %99 : vector<16x16xf32> to vector<16x16xbf16>
    %101 = arith.truncf %82 : vector<16x32xf32> to vector<16x32xbf16>
    %cst_57 = arith.constant dense<0.000000e+00> : vector<16x32xf32>
    %102 = tpu.matmul %100, %101, %cst_57 {dimension_numbers = #tpu.dot_dimension_numbers<[1], [0], [0], [1], [0, 0, 1, 1], [], []>} : vector<16x16xbf16>, vector<16x32xbf16>, vector<16x32xf32> -> vector<16x32xf32>
    %103 = vector.extract_strided_slice %56 {offsets = [0, 64], sizes = [16, 32], strides = [1, 1]} : vector<16x384xf32> to vector<16x32xf32>
    %104 = vector.extract_strided_slice %56 {offsets = [0, 192], sizes = [16, 32], strides = [1, 1]} : vector<16x384xf32> to vector<16x32xf32>
    %105 = vector.extract_strided_slice %56 {offsets = [0, 320], sizes = [16, 32], strides = [1, 1]} : vector<16x384xf32> to vector<16x32xf32>
    %106 = arith.truncf %103 : vector<16x32xf32> to vector<16x32xbf16>
    %107 = arith.truncf %104 : vector<16x32xf32> to vector<16x32xbf16>
    %cst_58 = arith.constant dense<0.000000e+00> : vector<16x16xf32>
    %108 = tpu.matmul %106, %107, %cst_58 {dimension_numbers = #tpu.dot_dimension_numbers<[1], [1], [0], [0], [0, 0, 1, 0], [], []>} : vector<16x32xbf16>, vector<16x32xbf16>, vector<16x16xf32> -> vector<16x16xf32>
    %cst_59 = arith.constant 0.176776692 : f32
    %109 = vector.broadcast %cst_59 : f32 to vector<16x16xf32>
    %110 = arith.mulf %108, %109 : vector<16x16xf32>
    %cst_60 = arith.constant -1.000000e+30 : f32
    %111 = vector.broadcast %cst_60 : f32 to vector<16x16xf32>
    %112 = arith.select %2, %110, %111 : vector<16x16xi1>, vector<16x16xf32>
    %cst_61 = arith.constant dense<0xFF800000> : vector<16xf32>
    %113 = vector.multi_reduction <maximumf>, %112, %cst_61 [1] : vector<16x16xf32> to vector<16xf32>
    %114 = vector.shape_cast %113 : vector<16xf32> to vector<16x1xf32>
    %115 = vector.broadcast %114 : vector<16x1xf32> to vector<16x16xf32>
    %116 = arith.subf %112, %115 : vector<16x16xf32>
    %117 = math.exp %116 : vector<16x16xf32>
    %cst_62 = arith.constant dense<0.000000e+00> : vector<16xf32>
    %118 = vector.multi_reduction <add>, %117, %cst_62 [1] : vector<16x16xf32> to vector<16xf32>
    %119 = vector.shape_cast %118 : vector<16xf32> to vector<16x1xf32>
    %120 = tpu.reciprocal %119 {approx = true} : vector<16x1xf32> -> vector<16x1xf32>
    %121 = vector.broadcast %120 : vector<16x1xf32> to vector<16x16xf32>
    %122 = arith.mulf %117, %121 : vector<16x16xf32>
    %123 = arith.truncf %122 : vector<16x16xf32> to vector<16x16xbf16>
    %124 = arith.truncf %105 : vector<16x32xf32> to vector<16x32xbf16>
    %cst_63 = arith.constant dense<0.000000e+00> : vector<16x32xf32>
    %125 = tpu.matmul %123, %124, %cst_63 {dimension_numbers = #tpu.dot_dimension_numbers<[1], [0], [0], [1], [0, 0, 1, 1], [], []>} : vector<16x16xbf16>, vector<16x32xbf16>, vector<16x32xf32> -> vector<16x32xf32>
    %126 = vector.extract_strided_slice %56 {offsets = [0, 96], sizes = [16, 32], strides = [1, 1]} : vector<16x384xf32> to vector<16x32xf32>
    %127 = vector.extract_strided_slice %56 {offsets = [0, 224], sizes = [16, 32], strides = [1, 1]} : vector<16x384xf32> to vector<16x32xf32>
    %128 = vector.extract_strided_slice %56 {offsets = [0, 352], sizes = [16, 32], strides = [1, 1]} : vector<16x384xf32> to vector<16x32xf32>
    %129 = arith.truncf %126 : vector<16x32xf32> to vector<16x32xbf16>
    %130 = arith.truncf %127 : vector<16x32xf32> to vector<16x32xbf16>
    %cst_64 = arith.constant dense<0.000000e+00> : vector<16x16xf32>
    %131 = tpu.matmul %129, %130, %cst_64 {dimension_numbers = #tpu.dot_dimension_numbers<[1], [1], [0], [0], [0, 0, 1, 0], [], []>} : vector<16x32xbf16>, vector<16x32xbf16>, vector<16x16xf32> -> vector<16x16xf32>
    %cst_65 = arith.constant 0.176776692 : f32
    %132 = vector.broadcast %cst_65 : f32 to vector<16x16xf32>
    %133 = arith.mulf %131, %132 : vector<16x16xf32>
    %cst_66 = arith.constant -1.000000e+30 : f32
    %134 = vector.broadcast %cst_66 : f32 to vector<16x16xf32>
    %135 = arith.select %2, %133, %134 : vector<16x16xi1>, vector<16x16xf32>
    %cst_67 = arith.constant dense<0xFF800000> : vector<16xf32>
    %136 = vector.multi_reduction <maximumf>, %135, %cst_67 [1] : vector<16x16xf32> to vector<16xf32>
    %137 = vector.shape_cast %136 : vector<16xf32> to vector<16x1xf32>
    %138 = vector.broadcast %137 : vector<16x1xf32> to vector<16x16xf32>
    %139 = arith.subf %135, %138 : vector<16x16xf32>
    %140 = math.exp %139 : vector<16x16xf32>
    %cst_68 = arith.constant dense<0.000000e+00> : vector<16xf32>
    %141 = vector.multi_reduction <add>, %140, %cst_68 [1] : vector<16x16xf32> to vector<16xf32>
    %142 = vector.shape_cast %141 : vector<16xf32> to vector<16x1xf32>
    %143 = tpu.reciprocal %142 {approx = true} : vector<16x1xf32> -> vector<16x1xf32>
    %144 = vector.broadcast %143 : vector<16x1xf32> to vector<16x16xf32>
    %145 = arith.mulf %140, %144 : vector<16x16xf32>
    %146 = arith.truncf %145 : vector<16x16xf32> to vector<16x16xbf16>
    %147 = arith.truncf %128 : vector<16x32xf32> to vector<16x32xbf16>
    %cst_69 = arith.constant dense<0.000000e+00> : vector<16x32xf32>
    %148 = tpu.matmul %146, %147, %cst_69 {dimension_numbers = #tpu.dot_dimension_numbers<[1], [0], [0], [1], [0, 0, 1, 1], [], []>} : vector<16x16xbf16>, vector<16x32xbf16>, vector<16x32xf32> -> vector<16x32xf32>
    %149 = tpu.concatenate %79, %102, %125, %148 in 1 : vector<16x32xf32>, vector<16x32xf32>, vector<16x32xf32>, vector<16x32xf32> -> vector<16x128xf32>
    %150 = arith.truncf %149 : vector<16x128xf32> to vector<16x128xbf16>
    %cst_70 = arith.constant dense<0.000000e+00> : vector<16x128xf32>
    %151 = tpu.matmul %150, %15, %cst_70 {dimension_numbers = #tpu.dot_dimension_numbers<[1], [0], [0], [1], [0, 0, 1, 1], [], []>} : vector<16x128xbf16>, vector<128x128xbf16>, vector<16x128xf32> -> vector<16x128xf32>
    %152 = arith.addf %30, %151 : vector<16x128xf32>
    %153 = vector.broadcast %17 : vector<1x128xf32> to vector<16x128xf32>
    %154 = arith.addf %152, %153 : vector<16x128xf32>
    %cst_71 = arith.constant dense<0.000000e+00> : vector<16xf32>
    %155 = vector.multi_reduction <add>, %154, %cst_71 [1] : vector<16x128xf32> to vector<16xf32>
    %156 = vector.shape_cast %155 : vector<16xf32> to vector<16x1xf32>
    %cst_72 = arith.constant 1.280000e+02 : f32
    %157 = vector.broadcast %cst_72 : f32 to vector<16x1xf32>
    %158 = arith.divf %156, %157 : vector<16x1xf32>
    %159 = vector.broadcast %158 : vector<16x1xf32> to vector<16x128xf32>
    %160 = arith.subf %154, %159 : vector<16x128xf32>
    %161 = arith.mulf %160, %160 : vector<16x128xf32>
    %cst_73 = arith.constant dense<0.000000e+00> : vector<16xf32>
    %162 = vector.multi_reduction <add>, %161, %cst_73 [1] : vector<16x128xf32> to vector<16xf32>
    %163 = vector.shape_cast %162 : vector<16xf32> to vector<16x1xf32>
    %cst_74 = arith.constant 1.280000e+02 : f32
    %164 = vector.broadcast %cst_74 : f32 to vector<16x1xf32>
    %165 = arith.divf %163, %164 : vector<16x1xf32>
    %166 = vector.broadcast %158 : vector<16x1xf32> to vector<16x128xf32>
    %167 = arith.subf %154, %166 : vector<16x128xf32>
    %cst_75 = arith.constant 9.99999974E-6 : f32
    %168 = vector.broadcast %cst_75 : f32 to vector<16x1xf32>
    %169 = arith.addf %165, %168 : vector<16x1xf32>
    %170 = math.rsqrt %169 : vector<16x1xf32>
    %171 = vector.broadcast %170 : vector<16x1xf32> to vector<16x128xf32>
    %172 = arith.mulf %167, %171 : vector<16x128xf32>
    %173 = vector.broadcast %19 : vector<1x128xf32> to vector<16x128xf32>
    %174 = arith.mulf %172, %173 : vector<16x128xf32>
    %175 = vector.broadcast %21 : vector<1x128xf32> to vector<16x128xf32>
    %176 = arith.addf %174, %175 : vector<16x128xf32>
    %177 = arith.truncf %176 : vector<16x128xf32> to vector<16x128xbf16>
    %cst_76 = arith.constant dense<0.000000e+00> : vector<16x512xf32>
    %178 = tpu.matmul %177, %23, %cst_76 {dimension_numbers = #tpu.dot_dimension_numbers<[1], [0], [0], [1], [0, 0, 1, 1], [], []>} : vector<16x128xbf16>, vector<128x512xbf16>, vector<16x512xf32> -> vector<16x512xf32>
    %179 = vector.broadcast %25 : vector<1x512xf32> to vector<16x512xf32>
    %180 = arith.addf %178, %179 : vector<16x512xf32>
    %cst_77 = arith.constant -1.702000e+00 : f32
    %181 = vector.broadcast %cst_77 : f32 to vector<16x512xf32>
    %182 = arith.mulf %181, %180 : vector<16x512xf32>
    %183 = math.exp %182 : vector<16x512xf32>
    %cst_78 = arith.constant 1.000000e+00 : f32
    %184 = vector.broadcast %cst_78 : f32 to vector<16x512xf32>
    %185 = arith.addf %184, %183 : vector<16x512xf32>
    %186 = tpu.reciprocal %185 {approx = true} : vector<16x512xf32> -> vector<16x512xf32>
    %187 = arith.mulf %180, %186 : vector<16x512xf32>
    %188 = arith.truncf %187 : vector<16x512xf32> to vector<16x512xbf16>
    %cst_79 = arith.constant dense<0.000000e+00> : vector<16x128xf32>
    %189 = tpu.matmul %188, %27, %cst_79 {dimension_numbers = #tpu.dot_dimension_numbers<[1], [0], [0], [1], [0, 0, 1, 1], [], []>} : vector<16x512xbf16>, vector<512x128xbf16>, vector<16x128xf32> -> vector<16x128xf32>
    %190 = arith.addf %154, %189 : vector<16x128xf32>
    %191 = vector.broadcast %29 : vector<1x128xf32> to vector<16x128xf32>
    %192 = arith.addf %190, %191 : vector<16x128xf32>
    %c0_80 = arith.constant 0 : index
    %c0_81 = arith.constant 0 : index
    %193 = vector.load %arg22[%c0_80, %c0_81] : memref<16x128xf32, #tpu.memory_space<vmem>>, vector<16x128xf32>
    tpu.vector_store %arg22[%c0_80, %c0_81], %192 {strides = array<i32>} : memref<16x128xf32, #tpu.memory_space<vmem>>, vector<16x128xf32>,
    %c1_i32 = arith.constant 1 : i32
    %194 = arith.cmpi eq, %arg1, %c1_i32 : i32
    %195 = arith.extui %194 : i1 to i32
    %c0_i32_82 = arith.constant 0 : i32
    %196 = arith.cmpi ne, %195, %c0_i32_82 : i32
    scf.if %196 {
      %197 = tpu.iota {dimensions = array<i32: 0>} : vector<16x1xi32>
      %c2_i32 = arith.constant 2 : i32
      %198 = arith.muli %arg0, %c2_i32 : i32
      %c0_i32_83 = arith.constant 0 : i32
      %199 = arith.addi %198, %c0_i32_83 : i32
      %200 = arith.index_cast %199 : i32 to index
      %201 = memref.load %arg2[%200] : memref<2xi32, #tpu.memory_space<smem>>
      %c0_i32_84 = arith.constant 0 : i32
      %202 = arith.addi %c0_i32_84, %201 : i32
      %203 = vector.broadcast %202 : i32 to vector<16x1xi32>
      %204 = arith.cmpi eq, %197, %203 : vector<16x1xi32>
      %205 = arith.extui %204 : vector<16x1xi1> to vector<16x1xi32>
      %206 = arith.sitofp %205 : vector<16x1xi32> to vector<16x1xf32>
      %207 = vector.broadcast %206 : vector<16x1xf32> to vector<16x128xf32>
      %208 = arith.mulf %207, %192 : vector<16x128xf32>
      %cst_85 = arith.constant dense<0.000000e+00> : vector<128xf32>
      %209 = vector.multi_reduction <add>, %208, %cst_85 [0] : vector<16x128xf32> to vector<128xf32>
      %210 = vector.shape_cast %209 : vector<128xf32> to vector<1x128xf32>
      %c2_i32_86 = arith.constant 2 : i32
      %211 = arith.muli %arg0, %c2_i32_86 : i32
      %c1_i32_87 = arith.constant 1 : i32
      %212 = arith.addi %211, %c1_i32_87 : i32
      %213 = arith.index_cast %212 : i32 to index
      %214 = memref.load %arg2[%213] : memref<2xi32, #tpu.memory_space<smem>>
      %c8_i32 = arith.constant 8 : i32
      %215 = arith.addi %c8_i32, %214 : i32
      %216 = vector.broadcast %215 : i32 to vector<16x1xi32>
      %217 = arith.cmpi eq, %197, %216 : vector<16x1xi32>
      %218 = arith.extui %217 : vector<16x1xi1> to vector<16x1xi32>
      %219 = arith.sitofp %218 : vector<16x1xi32> to vector<16x1xf32>
      %220 = vector.broadcast %219 : vector<16x1xf32> to vector<16x128xf32>
      %221 = arith.mulf %220, %192 : vector<16x128xf32>
      %cst_88 = arith.constant dense<0.000000e+00> : vector<128xf32>
      %222 = vector.multi_reduction <add>, %221, %cst_88 [0] : vector<16x128xf32> to vector<128xf32>
      %223 = vector.shape_cast %222 : vector<128xf32> to vector<1x128xf32>
      %224 = tpu.concatenate %210, %223 in 0 : vector<1x128xf32>, vector<1x128xf32> -> vector<2x128xf32>
      %c0_89 = arith.constant 0 : index
      %c0_90 = arith.constant 0 : index
      %225 = vector.load %arg18[%c0_89, %c0_90] : memref<1x128xf32, #tpu.memory_space<vmem>>, vector<1x128xf32>
      %c0_91 = arith.constant 0 : index
      %c0_92 = arith.constant 0 : index
      %226 = vector.load %arg19[%c0_91, %c0_92] : memref<1x128xf32, #tpu.memory_space<vmem>>, vector<1x128xf32>
      %c0_93 = arith.constant 0 : index
      %c0_94 = arith.constant 0 : index
      %227 = vector.load %arg20[%c0_93, %c0_94] : memref<128x128xbf16, #tpu.memory_space<vmem>>, vector<128x128xbf16>
      %cst_95 = arith.constant dense<0.000000e+00> : vector<2xf32>
      %228 = vector.multi_reduction <add>, %224, %cst_95 [1] : vector<2x128xf32> to vector<2xf32>
      %229 = vector.shape_cast %228 : vector<2xf32> to vector<2x1xf32>
      %cst_96 = arith.constant 1.280000e+02 : f32
      %230 = vector.broadcast %cst_96 : f32 to vector<2x1xf32>
      %231 = arith.divf %229, %230 : vector<2x1xf32>
      %232 = vector.broadcast %231 : vector<2x1xf32> to vector<2x128xf32>
      %233 = arith.subf %224, %232 : vector<2x128xf32>
      %234 = arith.mulf %233, %233 : vector<2x128xf32>
      %cst_97 = arith.constant dense<0.000000e+00> : vector<2xf32>
      %235 = vector.multi_reduction <add>, %234, %cst_97 [1] : vector<2x128xf32> to vector<2xf32>
      %236 = vector.shape_cast %235 : vector<2xf32> to vector<2x1xf32>
      %cst_98 = arith.constant 1.280000e+02 : f32
      %237 = vector.broadcast %cst_98 : f32 to vector<2x1xf32>
      %238 = arith.divf %236, %237 : vector<2x1xf32>
      %239 = vector.broadcast %231 : vector<2x1xf32> to vector<2x128xf32>
      %240 = arith.subf %224, %239 : vector<2x128xf32>
      %cst_99 = arith.constant 9.99999974E-6 : f32
      %241 = vector.broadcast %cst_99 : f32 to vector<2x1xf32>
      %242 = arith.addf %238, %241 : vector<2x1xf32>
      %243 = math.rsqrt %242 : vector<2x1xf32>
      %244 = vector.broadcast %243 : vector<2x1xf32> to vector<2x128xf32>
      %245 = arith.mulf %240, %244 : vector<2x128xf32>
      %246 = vector.broadcast %225 : vector<1x128xf32> to vector<2x128xf32>
      %247 = arith.mulf %245, %246 : vector<2x128xf32>
      %248 = vector.broadcast %226 : vector<1x128xf32> to vector<2x128xf32>
      %249 = arith.addf %247, %248 : vector<2x128xf32>
      %250 = arith.truncf %249 : vector<2x128xf32> to vector<2x128xbf16>
      %cst_100 = arith.constant dense<0.000000e+00> : vector<2x128xf32>
      %251 = tpu.matmul %250, %227, %cst_100 {dimension_numbers = #tpu.dot_dimension_numbers<[1], [0], [0], [1], [0, 0, 1, 1], [], []>} : vector<2x128xbf16>, vector<128x128xbf16>, vector<2x128xf32> -> vector<2x128xf32>
      %c0_101 = arith.constant 0 : index
      %c0_102 = arith.constant 0 : index
      %c0_103 = arith.constant 0 : index
      %252 = vector.load %arg21[%c0_101, %c0_102, %c0_103] : memref<1x2x128xf32, #tpu.memory_space<vmem>>, vector<1x2x128xf32>
      %253 = vector.shape_cast %252 : vector<1x2x128xf32> to vector<2x128xf32>
      %254 = vector.shape_cast %251 : vector<2x128xf32> to vector<1x2x128xf32>
      tpu.vector_store %arg21[%c0_101, %c0_102, %c0_103], %254 {strides = array<i32>} : memref<1x2x128xf32, #tpu.memory_space<vmem>>, vector<1x2x128xf32>,
    } else {
    }
    return
  }
  func.func @transform_0(%arg0: i32, %arg1: i32, %arg2: memref<2xi32, #tpu.memory_space<smem>>) -> (i32, i32) {
    %c0_i32 = arith.constant 0 : i32
    %c0_i32_0 = arith.constant 0 : i32
    return %arg0, %c0_i32 : i32, i32
  }
  func.func @transform_1(%arg0: i32, %arg1: i32, %arg2: memref<2xi32, #tpu.memory_space<smem>>) -> (i32, i32) {
    %c0_i32 = arith.constant 0 : i32
    %c0_i32_0 = arith.constant 0 : i32
    %c0_i32_1 = arith.constant 0 : i32
    return %c0_i32, %c0_i32_0 : i32, i32
  }
  func.func @transform_2(%arg0: i32, %arg1: i32, %arg2: memref<2xi32, #tpu.memory_space<smem>>) -> (i32, i32) {
    %c0_i32 = arith.constant 0 : i32
    %c0_i32_0 = arith.constant 0 : i32
    %c0_i32_1 = arith.constant 0 : i32
    return %c0_i32, %c0_i32_0 : i32, i32
  }
  func.func @transform_3(%arg0: i32, %arg1: i32, %arg2: memref<2xi32, #tpu.memory_space<smem>>) -> (i32, i32, i32) {
    %c0_i32 = arith.constant 0 : i32
    %c0_i32_0 = arith.constant 0 : i32
    %c0_i32_1 = arith.constant 0 : i32
    return %arg1, %c0_i32, %c0_i32_0 : i32, i32, i32
  }
  func.func @transform_4(%arg0: i32, %arg1: i32, %arg2: memref<2xi32, #tpu.memory_space<smem>>) -> (i32, i32, i32) {
    %c0_i32 = arith.constant 0 : i32
    %c0_i32_0 = arith.constant 0 : i32
    %c0_i32_1 = arith.constant 0 : i32
    return %arg1, %c0_i32, %c0_i32_0 : i32, i32, i32
  }
  func.func @transform_5(%arg0: i32, %arg1: i32, %arg2: memref<2xi32, #tpu.memory_space<smem>>) -> (i32, i32, i32) {
    %c0_i32 = arith.constant 0 : i32
    %c0_i32_0 = arith.constant 0 : i32
    %c0_i32_1 = arith.constant 0 : i32
    return %arg1, %c0_i32, %c0_i32_0 : i32, i32, i32
  }
  func.func @transform_6(%arg0: i32, %arg1: i32, %arg2: memref<2xi32, #tpu.memory_space<smem>>) -> (i32, i32, i32) {
    %c0_i32 = arith.constant 0 : i32
    %c0_i32_0 = arith.constant 0 : i32
    %c0_i32_1 = arith.constant 0 : i32
    return %arg1, %c0_i32, %c0_i32_0 : i32, i32, i32
  }
  func.func @transform_7(%arg0: i32, %arg1: i32, %arg2: memref<2xi32, #tpu.memory_space<smem>>) -> (i32, i32, i32) {
    %c0_i32 = arith.constant 0 : i32
    %c0_i32_0 = arith.constant 0 : i32
    %c0_i32_1 = arith.constant 0 : i32
    return %arg1, %c0_i32, %c0_i32_0 : i32, i32, i32
  }
  func.func @transform_8(%arg0: i32, %arg1: i32, %arg2: memref<2xi32, #tpu.memory_space<smem>>) -> (i32, i32, i32) {
    %c0_i32 = arith.constant 0 : i32
    %c0_i32_0 = arith.constant 0 : i32
    %c0_i32_1 = arith.constant 0 : i32
    return %arg1, %c0_i32, %c0_i32_0 : i32, i32, i32
  }
  func.func @transform_9(%arg0: i32, %arg1: i32, %arg2: memref<2xi32, #tpu.memory_space<smem>>) -> (i32, i32, i32) {
    %c0_i32 = arith.constant 0 : i32
    %c0_i32_0 = arith.constant 0 : i32
    %c0_i32_1 = arith.constant 0 : i32
    return %arg1, %c0_i32, %c0_i32_0 : i32, i32, i32
  }
  func.func @transform_10(%arg0: i32, %arg1: i32, %arg2: memref<2xi32, #tpu.memory_space<smem>>) -> (i32, i32, i32) {
    %c0_i32 = arith.constant 0 : i32
    %c0_i32_0 = arith.constant 0 : i32
    %c0_i32_1 = arith.constant 0 : i32
    return %arg1, %c0_i32, %c0_i32_0 : i32, i32, i32
  }
  func.func @transform_11(%arg0: i32, %arg1: i32, %arg2: memref<2xi32, #tpu.memory_space<smem>>) -> (i32, i32, i32) {
    %c0_i32 = arith.constant 0 : i32
    %c0_i32_0 = arith.constant 0 : i32
    %c0_i32_1 = arith.constant 0 : i32
    return %arg1, %c0_i32, %c0_i32_0 : i32, i32, i32
  }
  func.func @transform_12(%arg0: i32, %arg1: i32, %arg2: memref<2xi32, #tpu.memory_space<smem>>) -> (i32, i32, i32) {
    %c0_i32 = arith.constant 0 : i32
    %c0_i32_0 = arith.constant 0 : i32
    %c0_i32_1 = arith.constant 0 : i32
    return %arg1, %c0_i32, %c0_i32_0 : i32, i32, i32
  }
  func.func @transform_13(%arg0: i32, %arg1: i32, %arg2: memref<2xi32, #tpu.memory_space<smem>>) -> (i32, i32, i32) {
    %c0_i32 = arith.constant 0 : i32
    %c0_i32_0 = arith.constant 0 : i32
    %c0_i32_1 = arith.constant 0 : i32
    return %arg1, %c0_i32, %c0_i32_0 : i32, i32, i32
  }
  func.func @transform_14(%arg0: i32, %arg1: i32, %arg2: memref<2xi32, #tpu.memory_space<smem>>) -> (i32, i32, i32) {
    %c0_i32 = arith.constant 0 : i32
    %c0_i32_0 = arith.constant 0 : i32
    %c0_i32_1 = arith.constant 0 : i32
    return %arg1, %c0_i32, %c0_i32_0 : i32, i32, i32
  }
  func.func @transform_15(%arg0: i32, %arg1: i32, %arg2: memref<2xi32, #tpu.memory_space<smem>>) -> (i32, i32) {
    %c0_i32 = arith.constant 0 : i32
    %c0_i32_0 = arith.constant 0 : i32
    %c0_i32_1 = arith.constant 0 : i32
    return %c0_i32, %c0_i32_0 : i32, i32
  }
  func.func @transform_16(%arg0: i32, %arg1: i32, %arg2: memref<2xi32, #tpu.memory_space<smem>>) -> (i32, i32) {
    %c0_i32 = arith.constant 0 : i32
    %c0_i32_0 = arith.constant 0 : i32
    %c0_i32_1 = arith.constant 0 : i32
    return %c0_i32, %c0_i32_0 : i32, i32
  }
  func.func @transform_17(%arg0: i32, %arg1: i32, %arg2: memref<2xi32, #tpu.memory_space<smem>>) -> (i32, i32) {
    %c0_i32 = arith.constant 0 : i32
    %c0_i32_0 = arith.constant 0 : i32
    %c0_i32_1 = arith.constant 0 : i32
    return %c0_i32, %c0_i32_0 : i32, i32
  }
  func.func @transform_18(%arg0: i32, %arg1: i32, %arg2: memref<2xi32, #tpu.memory_space<smem>>) -> (i32, i32, i32) {
    %c0_i32 = arith.constant 0 : i32
    %c0_i32_0 = arith.constant 0 : i32
    %c0_i32_1 = arith.constant 0 : i32
    return %arg0, %c0_i32, %c0_i32_0 : i32, i32, i32
  }
}

</mosaic_0001>

<llo_original>
// kernel: tpu_custom_call.1
$region0: #{tpu_custom_call.1}
  #allocation0 [shape = 'u32[]', space=smem, size = 0x4, offset = 0x4, fixed_abs, tag = 'smem constant byte address 0x4 - core index']
  #allocation1 [shape = 'u32[144,128]{1,0:T(1,128)}', space=vmem, size = 0x12000, scoped, tag = 'internal scratch']
  #allocation2 [shape = 'f32[16,128]{1,0:T(8,128)}', space=vmem, size = 0x2000, scoped, tag = 'scratch operand']
  #allocation3 [shape = 's32[1]{0}', space=sflag, size = 0x4, scoped, tag = 'scoped memory for tpu_custom_call.1']
  #allocation4 [shape = 'u8[512]{0}', space=smem, size = 0x200, scoped, tag = 'prefetched SMEM operand 0']
  %s0 = inlined_call_operand.hbm [shape: s32[2], index: 0, kind: input, shape index: {}]
  %s1 = inlined_call_operand.hbm [shape: bf16[16,128], index: 1, kind: input, shape index: {}]
  %s2 = inlined_call_operand.hbm [shape: f32[16,128], index: 2, kind: input, shape index: {}]
  %s3 = inlined_call_operand.hbm [shape: s32[16,16], index: 3, kind: input, shape index: {}]
  %s4 = inlined_call_operand.vmem [shape: f32[2,1,128], index: 4, kind: input, shape index: {}]
  %s5 = inlined_call_operand.hbm [shape: f32[2,1,128], index: 5, kind: input, shape index: {}]
  %s6 = inlined_call_operand.hbm [shape: bf16[2,128,384], index: 6, kind: input, shape index: {}]
  %s7 = inlined_call_operand.vmem [shape: f32[2,1,384], index: 7, kind: input, shape index: {}]
  %s8 = inlined_call_operand.hbm [shape: bf16[2,128,128], index: 8, kind: input, shape index: {}]
  %s9 = inlined_call_operand.hbm [shape: f32[2,1,128], index: 9, kind: input, shape index: {}]
  %s10 = inlined_call_operand.vmem [shape: f32[2,1,128], index: 10, kind: input, shape index: {}]
  %s11 = inlined_call_operand.vmem [shape: f32[2,1,128], index: 11, kind: input, shape index: {}]
  %s12 = inlined_call_operand.hbm [shape: bf16[2,128,512], index: 12, kind: input, shape index: {}]
  %s13 = inlined_call_operand.vmem [shape: f32[2,1,512], index: 13, kind: input, shape index: {}]
  %s14 = inlined_call_operand.hbm [shape: bf16[2,512,128], index: 14, kind: input, shape index: {}]
  %s15 = inlined_call_operand.vmem [shape: f32[2,1,128], index: 15, kind: input, shape index: {}]
  %s16 = inlined_call_operand.vmem [shape: f32[1,128], index: 16, kind: input, shape index: {}]
  %s17 = inlined_call_operand.vmem [shape: f32[1,128], index: 17, kind: input, shape index: {}]
  %s18 = inlined_call_operand.hbm [shape: bf16[128,128], index: 18, kind: input, shape index: {}]
  %s19 = inlined_call_operand.hbm [shape: f32[1,2,128], index: 19, kind: output, shape index: {}]
  %s20 = sld [smem:[#allocation0]]
  $region153: #{tpu_custom_call.1} parent=0
    _
  %s22 = ssub.s32 1, %s20
  %s23 = scalar_select 0, %s22, %s20
  %25 = dma.hbm_to_smem %s0, 16, [#allocation4], [#allocation3]
  %26 = dma.done [#allocation3], 16
  %27 = sfence
  $region1: #{tpu_custom_call.1} parent=0
    #allocation5 [shape = 'u8[4096]{0}', space=vmem, size = 0x1000, scoped, tag = 'input window, operand 1, single buffered']
    #allocation6 [shape = 's32[2]{0}', space=sflag, size = 0x8, scoped, tag = 'scoped memory for tpu_custom_call.1']
    #allocation7 [shape = 's32[2]{0}', space=sflag, size = 0x8, scoped, tag = 'scoped memory for tpu_custom_call.1']
    #allocation8 [shape = 'u8[8192]{0}', space=vmem, size = 0x2000, scoped, tag = 'input window, operand 2, single buffered']
    #allocation9 [shape = 's32[1]{0}', space=sflag, size = 0x4, scoped, tag = 'scoped memory for tpu_custom_call.1']
    #allocation10 [shape = 'u8[8192]{0}', space=vmem, size = 0x2000, scoped, tag = 'input window, operand 3, single buffered']
    #allocation11 [shape = 'u8[1024]{0}', space=vmem, size = 0x400, scoped, tag = 'input window, operand 5']
    #allocation12 [shape = 's32[2]{0}', space=sflag, size = 0x8, scoped, tag = 'scoped memory for tpu_custom_call.1']
    #allocation13 [shape = 'u8[196608]{0}', space=vmem, size = 0x30000, scoped, tag = 'input window, operand 6']
    #allocation14 [shape = 'u8[65536]{0}', space=vmem, size = 0x10000, scoped, tag = 'input window, operand 8']
    #allocation15 [shape = 's32[2]{0}', space=sflag, size = 0x8, scoped, tag = 'scoped memory for tpu_custom_call.1']
    #allocation16 [shape = 'u8[1024]{0}', space=vmem, size = 0x400, scoped, tag = 'input window, operand 9']
    #allocation17 [shape = 'u8[262144]{0}', space=vmem, size = 0x40000, scoped, tag = 'input window, operand 12']
    #allocation18 [shape = 's32[2]{0}', space=sflag, size = 0x8, scoped, tag = 'scoped memory for tpu_custom_call.1']
    #allocation19 [shape = 'u8[262144]{0}', space=vmem, size = 0x40000, scoped, tag = 'input window, operand 14']
    #allocation20 [shape = 'u8[32768]{0}', space=vmem, size = 0x8000, scoped, tag = 'input window, operand 18, single buffered']
    #allocation21 [shape = 's32[1]{0}', space=sflag, size = 0x4, scoped, tag = 'scoped memory for tpu_custom_call.1']
    #allocation22 [shape = 'u8[1024]{0}', space=vmem, size = 0x400, scoped, tag = 'output window, operand 0, single buffered']
    %28 = vsyncpa [#allocation6], 0
    %29 = vsyncpa [#allocation9], 0
    %30 = vsyncpa [#allocation12], 0
    %s31 = scalar_lea.sflag [#allocation12], 1
    %32 = vsyncpa %s31, 0
    %33 = vsyncpa [#allocation15], 0
    %s34 = scalar_lea.sflag [#allocation15], 1
    %35 = vsyncpa %s34, 0
    %36 = vsyncpa [#allocation18], 0
    %s37 = scalar_lea.sflag [#allocation18], 1
    %38 = vsyncpa %s37, 0
    %39 = vsyncpa [#allocation21], 0
    %40 = vsyncpa [#allocation7], 0
    loop: start=0, step=1, limit=4
    $region2: #{tpu_custom_call.1} parent=1 // loop_pre_header
      _
    $region3: #{tpu_custom_call.1} parent=1 // loop_header
      %s42 = sphi 0, %s46
      %p43 = scmp.ge.s32.totalorder %s42, 4
      %s49 = sphi 0, %s61
      %s50 = sphi 0, %s57
      %s51 = sphi 0, %s49
      %s52 = sphi 0, %s50
      %s53 = sphi 0, %s51
      %s54 = sphi 0, %s52
      %s64 = sphi 0, %s66
      %s67 = sphi 0, %s64
      %s68 = sphi 0, %s67
      %s84 = sphi 0, %s68
      %s88 = sphi 0, %s88
      %s90 = sphi 0, %s88
      %s91 = sphi 0, %s90
      %s105 = sphi 0, %s91
      %s109 = sphi 0, %s109
      %s111 = sphi 0, %s109
      %s112 = sphi 0, %s111
      %s126 = sphi 0, %s112
      %s132 = sphi 0, %s134
      %s135 = sphi 0, %s132
      %s136 = sphi 0, %s135
      %s152 = sphi 0, %s136
      %s158 = sphi 0, %s160
      %s161 = sphi 0, %s158
      %s162 = sphi 0, %s161
      %s178 = sphi 0, %s162
      %s184 = sphi 0, %s186
      %s187 = sphi 0, %s184
      %s188 = sphi 0, %s187
      %s204 = sphi 0, %s188
      %s210 = sphi 0, %s212
      %s213 = sphi 0, %s210
      %s214 = sphi 0, %s213
      %s230 = sphi 0, %s214
      %s236 = sphi 0, %s238
      %s239 = sphi 0, %s236
      %s240 = sphi 0, %s239
      %s256 = sphi 0, %s240
      %s262 = sphi 0, %s264
      %s265 = sphi 0, %s262
      %s266 = sphi 0, %s265
      %s282 = sphi 0, %s266
      %s288 = sphi 0, %s290
      %s291 = sphi 0, %s288
      %s292 = sphi 0, %s291
      %s308 = sphi 0, %s292
      %s314 = sphi 0, %s316
      %s317 = sphi 0, %s314
      %s318 = sphi 0, %s317
      %s334 = sphi 0, %s318
      %s340 = sphi 0, %s342
      %s343 = sphi 0, %s340
      %s344 = sphi 0, %s343
      %s360 = sphi 0, %s344
      %s366 = sphi 0, %s368
      %s369 = sphi 0, %s366
      %s370 = sphi 0, %s369
      %s386 = sphi 0, %s370
      %s392 = sphi 0, %s394
      %s395 = sphi 0, %s392
      %s396 = sphi 0, %s395
      %s412 = sphi 0, %s396
      %s418 = sphi 0, %s420
      %s421 = sphi 0, %s418
      %s422 = sphi 0, %s421
      %s438 = sphi 0, %s422
      %s442 = sphi 0, %s442
      %s444 = sphi 0, %s442
      %s445 = sphi 0, %s444
      %s459 = sphi 0, %s445
      %s463 = sphi 0, %s463
      %s465 = sphi 0, %s463
      %s466 = sphi 0, %s465
      %s480 = sphi 0, %s466
      %s484 = sphi 0, %s484
      %s486 = sphi 0, %s484
      %s487 = sphi 0, %s486
      %s501 = sphi 0, %s487
      %s507 = sphi 0, %s509
      %s510 = sphi 0, %s507
      %s511 = sphi 0, %s510
      %s527 = sphi 0, %s511
    $region4: #{tpu_custom_call.1} parent=1 // loop_header_branch
      %45 = sbr.rel (%p43) target = $region8
    $region5: #{tpu_custom_call.1} parent=1 // loop_body
      %s47 = ssub.s32 %s42, 1
      %s48 = ssub.s32 %s42, 2
      %s55 = sadd.s32 1, %s50
      %p56 = scmp.ge.s32.totalorder %s55, 2
      %s57 = scalar_select %p56, 0, %s55
      %s58 = sadd.s32 1, %s49
      %s59 = scalar_select %p56, %s58, %s49
      %p60 = scmp.ge.s32.totalorder %s59, 1
      %s61 = scalar_select %p60, 0, %s59
      %s62 = ssub.s32 %s49, %s61
      %p63 = scmp.eq.s32.totalorder %s62, 0
      %s65 = sadd.s32 %s64, 1
      %s66 = scalar_select %p63, %s64, %s65
      %p69 = pneg %p63
      %p70 = scmp.eq.s32.totalorder %s42, 1
      %p71 = por %p69, %p70
      %p72 = scmp.ne.s32.totalorder %s64, %s67
      %p73 = scmp.eq.s32.totalorder %s42, 0
      %p74 = por %p72, %p73
      %p75 = scmp.ne.s32.totalorder %s64, %s67
      %p76 = scmp.eq.s32.totalorder %s47, 1
      %p77 = por %p75, %p76
      %p78 = scmp.ne.s32.totalorder %s67, %s68
      %p79 = scmp.eq.s32.totalorder %s47, 0
      %p80 = por %p78, %p79
      %p81 = scmp.ne.s32.totalorder %s67, %s68
      %p82 = scmp.eq.s32.totalorder %s48, 1
      %p83 = por %p81, %p82
      %p85 = scmp.ne.s32.totalorder %s68, %s84
      %p86 = scmp.eq.s32.totalorder %s48, 0
      %p87 = por %p85, %p86
      %s89 = sadd.s32 %s88, 1
      %p92 = scmp.eq.s32.totalorder %s42, 1
      %p93 = scmp.ne.s32.totalorder %s88, %s90
      %p94 = scmp.eq.s32.totalorder %s42, 0
      %p95 = por %p93, %p94
      %p96 = scmp.ne.s32.totalorder %s88, %s90
      %p97 = scmp.eq.s32.totalorder %s47, 1
      %p98 = por %p96, %p97
      %p99 = scmp.ne.s32.totalorder %s90, %s91
      %p100 = scmp.eq.s32.totalorder %s47, 0
      %p101 = por %p99, %p100
      %p102 = scmp.ne.s32.totalorder %s90, %s91
      %p103 = scmp.eq.s32.totalorder %s48, 1
      %p104 = por %p102, %p103
      %p106 = scmp.ne.s32.totalorder %s91, %s105
      %p107 = scmp.eq.s32.totalorder %s48, 0
      %p108 = por %p106, %p107
      %s110 = sadd.s32 %s109, 1
      %p113 = scmp.eq.s32.totalorder %s42, 1
      %p114 = scmp.ne.s32.totalorder %s109, %s111
      %p115 = scmp.eq.s32.totalorder %s42, 0
      %p116 = por %p114, %p115
      %p117 = scmp.ne.s32.totalorder %s109, %s111
      %p118 = scmp.eq.s32.totalorder %s47, 1
      %p119 = por %p117, %p118
      %p120 = scmp.ne.s32.totalorder %s111, %s112
      %p121 = scmp.eq.s32.totalorder %s47, 0
      %p122 = por %p120, %p121
      %p123 = scmp.ne.s32.totalorder %s111, %s112
      %p124 = scmp.eq.s32.totalorder %s48, 1
      %p125 = por %p123, %p124
      %p127 = scmp.ne.s32.totalorder %s112, %s126
      %p128 = scmp.eq.s32.totalorder %s48, 0
      %p129 = por %p127, %p128
      %s130 = ssub.s32 %s50, %s57
      %p131 = scmp.eq.s32.totalorder %s130, 0
      %s133 = sadd.s32 %s132, 1
      %s134 = scalar_select %p131, %s132, %s133
      %p137 = pneg %p131
      %p138 = scmp.eq.s32.totalorder %s42, 1
      %p139 = por %p137, %p138
      %p140 = scmp.ne.s32.totalorder %s132, %s135
      %p141 = scmp.eq.s32.totalorder %s42, 0
      %p142 = por %p140, %p141
      %p143 = scmp.ne.s32.totalorder %s132, %s135
      %p144 = scmp.eq.s32.totalorder %s47, 1
      %p145 = por %p143, %p144
      %p146 = scmp.ne.s32.totalorder %s135, %s136
      %p147 = scmp.eq.s32.totalorder %s47, 0
      %p148 = por %p146, %p147
      %p149 = scmp.ne.s32.totalorder %s135, %s136
      %p150 = scmp.eq.s32.totalorder %s48, 1
      %p151 = por %p149, %p150
      %p153 = scmp.ne.s32.totalorder %s136, %s152
      %p154 = scmp.eq.s32.totalorder %s48, 0
      %p155 = por %p153, %p154
      %s156 = ssub.s32 %s50, %s57
      %p157 = scmp.eq.s32.totalorder %s156, 0
      %s159 = sadd.s32 %s158, 1
      %s160 = scalar_select %p157, %s158, %s159
      %p163 = pneg %p157
      %p164 = scmp.eq.s32.totalorder %s42, 1
      %p165 = por %p163, %p164
      %p166 = scmp.ne.s32.totalorder %s158, %s161
      %p167 = scmp.eq.s32.totalorder %s42, 0
      %p168 = por %p166, %p167
      %p169 = scmp.ne.s32.totalorder %s158, %s161
      %p170 = scmp.eq.s32.totalorder %s47, 1
      %p171 = por %p169, %p170
      %p172 = scmp.ne.s32.totalorder %s161, %s162
      %p173 = scmp.eq.s32.totalorder %s47, 0
      %p174 = por %p172, %p173
      %p175 = scmp.ne.s32.totalorder %s161, %s162
      %p176 = scmp.eq.s32.totalorder %s48, 1
      %p177 = por %p175, %p176
      %p179 = scmp.ne.s32.totalorder %s162, %s178
      %p180 = scmp.eq.s32.totalorder %s48, 0
      %p181 = por %p179, %p180
      %s182 = ssub.s32 %s50, %s57
      %p183 = scmp.eq.s32.totalorder %s182, 0
      %s185 = sadd.s32 %s184, 1
      %s186 = scalar_select %p183, %s184, %s185
      %p189 = pneg %p183
      %p190 = scmp.eq.s32.totalorder %s42, 1
      %p191 = por %p189, %p190
      %p192 = scmp.ne.s32.totalorder %s184, %s187
      %p193 = scmp.eq.s32.totalorder %s42, 0
      %p194 = por %p192, %p193
      %p195 = scmp.ne.s32.totalorder %s184, %s187
      %p196 = scmp.eq.s32.totalorder %s47, 1
      %p197 = por %p195, %p196
      %p198 = scmp.ne.s32.totalorder %s187, %s188
      %p199 = scmp.eq.s32.totalorder %s47, 0
      %p200 = por %p198, %p199
      %p201 = scmp.ne.s32.totalorder %s187, %s188
      %p202 = scmp.eq.s32.totalorder %s48, 1
      %p203 = por %p201, %p202
      %p205 = scmp.ne.s32.totalorder %s188, %s204
      %p206 = scmp.eq.s32.totalorder %s48, 0
      %p207 = por %p205, %p206
      %s208 = ssub.s32 %s50, %s57
      %p209 = scmp.eq.s32.totalorder %s208, 0
      %s211 = sadd.s32 %s210, 1
      %s212 = scalar_select %p209, %s210, %s211
      %p215 = pneg %p209
      %p216 = scmp.eq.s32.totalorder %s42, 1
      %p217 = por %p215, %p216
      %p218 = scmp.ne.s32.totalorder %s210, %s213
      %p219 = scmp.eq.s32.totalorder %s42, 0
      %p220 = por %p218, %p219
      %p221 = scmp.ne.s32.totalorder %s210, %s213
      %p222 = scmp.eq.s32.totalorder %s47, 1
      %p223 = por %p221, %p222
      %p224 = scmp.ne.s32.totalorder %s213, %s214
      %p225 = scmp.eq.s32.totalorder %s47, 0
      %p226 = por %p224, %p225
      %p227 = scmp.ne.s32.totalorder %s213, %s214
      %p228 = scmp.eq.s32.totalorder %s48, 1
      %p229 = por %p227, %p228
      %p231 = scmp.ne.s32.totalorder %s214, %s230
      %p232 = scmp.eq.s32.totalorder %s48, 0
      %p233 = por %p231, %p232
      %s234 = ssub.s32 %s50, %s57
      %p235 = scmp.eq.s32.totalorder %s234, 0
      %s237 = sadd.s32 %s236, 1
      %s238 = scalar_select %p235, %s236, %s237
      %p241 = pneg %p235
      %p242 = scmp.eq.s32.totalorder %s42, 1
      %p243 = por %p241, %p242
      %p244 = scmp.ne.s32.totalorder %s236, %s239
      %p245 = scmp.eq.s32.totalorder %s42, 0
      %p246 = por %p244, %p245
      %p247 = scmp.ne.s32.totalorder %s236, %s239
      %p248 = scmp.eq.s32.totalorder %s47, 1
      %p249 = por %p247, %p248
      %p250 = scmp.ne.s32.totalorder %s239, %s240
      %p251 = scmp.eq.s32.totalorder %s47, 0
      %p252 = por %p250, %p251
      %p253 = scmp.ne.s32.totalorder %s239, %s240
      %p254 = scmp.eq.s32.totalorder %s48, 1
      %p255 = por %p253, %p254
      %p257 = scmp.ne.s32.totalorder %s240, %s256
      %p258 = scmp.eq.s32.totalorder %s48, 0
      %p259 = por %p257, %p258
      %s260 = ssub.s32 %s50, %s57
      %p261 = scmp.eq.s32.totalorder %s260, 0
      %s263 = sadd.s32 %s262, 1
      %s264 = scalar_select %p261, %s262, %s263
      %p267 = pneg %p261
      %p268 = scmp.eq.s32.totalorder %s42, 1
      %p269 = por %p267, %p268
      %p270 = scmp.ne.s32.totalorder %s262, %s265
      %p271 = scmp.eq.s32.totalorder %s42, 0
      %p272 = por %p270, %p271
      %p273 = scmp.ne.s32.totalorder %s262, %s265
      %p274 = scmp.eq.s32.totalorder %s47, 1
      %p275 = por %p273, %p274
      %p276 = scmp.ne.s32.totalorder %s265, %s266
      %p277 = scmp.eq.s32.totalorder %s47, 0
      %p278 = por %p276, %p277
      %p279 = scmp.ne.s32.totalorder %s265, %s266
      %p280 = scmp.eq.s32.totalorder %s48, 1
      %p281 = por %p279, %p280
      %p283 = scmp.ne.s32.totalorder %s266, %s282
      %p284 = scmp.eq.s32.totalorder %s48, 0
      %p285 = por %p283, %p284
      %s286 = ssub.s32 %s50, %s57
      %p287 = scmp.eq.s32.totalorder %s286, 0
      %s289 = sadd.s32 %s288, 1
      %s290 = scalar_select %p287, %s288, %s289
      %p293 = pneg %p287
      %p294 = scmp.eq.s32.totalorder %s42, 1
      %p295 = por %p293, %p294
      %p296 = scmp.ne.s32.totalorder %s288, %s291
      %p297 = scmp.eq.s32.totalorder %s42, 0
      %p298 = por %p296, %p297
      %p299 = scmp.ne.s32.totalorder %s288, %s291
      %p300 = scmp.eq.s32.totalorder %s47, 1
      %p301 = por %p299, %p300
      %p302 = scmp.ne.s32.totalorder %s291, %s292
      %p303 = scmp.eq.s32.totalorder %s47, 0
      %p304 = por %p302, %p303
      %p305 = scmp.ne.s32.totalorder %s291, %s292
      %p306 = scmp.eq.s32.totalorder %s48, 1
      %p307 = por %p305, %p306
      %p309 = scmp.ne.s32.totalorder %s292, %s308
      %p310 = scmp.eq.s32.totalorder %s48, 0
      %p311 = por %p309, %p310
      %s312 = ssub.s32 %s50, %s57
      %p313 = scmp.eq.s32.totalorder %s312, 0
      %s315 = sadd.s32 %s314, 1
      %s316 = scalar_select %p313, %s314, %s315
      %p319 = pneg %p313
      %p320 = scmp.eq.s32.totalorder %s42, 1
      %p321 = por %p319, %p320
      %p322 = scmp.ne.s32.totalorder %s314, %s317
      %p323 = scmp.eq.s32.totalorder %s42, 0
      %p324 = por %p322, %p323
      %p325 = scmp.ne.s32.totalorder %s314, %s317
      %p326 = scmp.eq.s32.totalorder %s47, 1
      %p327 = por %p325, %p326
      %p328 = scmp.ne.s32.totalorder %s317, %s318
      %p329 = scmp.eq.s32.totalorder %s47, 0
      %p330 = por %p328, %p329
      %p331 = scmp.ne.s32.totalorder %s317, %s318
      %p332 = scmp.eq.s32.totalorder %s48, 1
      %p333 = por %p331, %p332
      %p335 = scmp.ne.s32.totalorder %s318, %s334
      %p336 = scmp.eq.s32.totalorder %s48, 0
      %p337 = por %p335, %p336
      %s338 = ssub.s32 %s50, %s57
      %p339 = scmp.eq.s32.totalorder %s338, 0
      %s341 = sadd.s32 %s340, 1
      %s342 = scalar_select %p339, %s340, %s341
      %p345 = pneg %p339
      %p346 = scmp.eq.s32.totalorder %s42, 1
      %p347 = por %p345, %p346
      %p348 = scmp.ne.s32.totalorder %s340, %s343
      %p349 = scmp.eq.s32.totalorder %s42, 0
      %p350 = por %p348, %p349
      %p351 = scmp.ne.s32.totalorder %s340, %s343
      %p352 = scmp.eq.s32.totalorder %s47, 1
      %p353 = por %p351, %p352
      %p354 = scmp.ne.s32.totalorder %s343, %s344
      %p355 = scmp.eq.s32.totalorder %s47, 0
      %p356 = por %p354, %p355
      %p357 = scmp.ne.s32.totalorder %s343, %s344
      %p358 = scmp.eq.s32.totalorder %s48, 1
      %p359 = por %p357, %p358
      %p361 = scmp.ne.s32.totalorder %s344, %s360
      %p362 = scmp.eq.s32.totalorder %s48, 0
      %p363 = por %p361, %p362
      %s364 = ssub.s32 %s50, %s57
      %p365 = scmp.eq.s32.totalorder %s364, 0
      %s367 = sadd.s32 %s366, 1
      %s368 = scalar_select %p365, %s366, %s367
      %p371 = pneg %p365
      %p372 = scmp.eq.s32.totalorder %s42, 1
      %p373 = por %p371, %p372
      %p374 = scmp.ne.s32.totalorder %s366, %s369
      %p375 = scmp.eq.s32.totalorder %s42, 0
      %p376 = por %p374, %p375
      %p377 = scmp.ne.s32.totalorder %s366, %s369
      %p378 = scmp.eq.s32.totalorder %s47, 1
      %p379 = por %p377, %p378
      %p380 = scmp.ne.s32.totalorder %s369, %s370
      %p381 = scmp.eq.s32.totalorder %s47, 0
      %p382 = por %p380, %p381
      %p383 = scmp.ne.s32.totalorder %s369, %s370
      %p384 = scmp.eq.s32.totalorder %s48, 1
      %p385 = por %p383, %p384
      %p387 = scmp.ne.s32.totalorder %s370, %s386
      %p388 = scmp.eq.s32.totalorder %s48, 0
      %p389 = por %p387, %p388
      %s390 = ssub.s32 %s50, %s57
      %p391 = scmp.eq.s32.totalorder %s390, 0
      %s393 = sadd.s32 %s392, 1
      %s394 = scalar_select %p391, %s392, %s393
      %p397 = pneg %p391
      %p398 = scmp.eq.s32.totalorder %s42, 1
      %p399 = por %p397, %p398
      %p400 = scmp.ne.s32.totalorder %s392, %s395
      %p401 = scmp.eq.s32.totalorder %s42, 0
      %p402 = por %p400, %p401
      %p403 = scmp.ne.s32.totalorder %s392, %s395
      %p404 = scmp.eq.s32.totalorder %s47, 1
      %p405 = por %p403, %p404
      %p406 = scmp.ne.s32.totalorder %s395, %s396
      %p407 = scmp.eq.s32.totalorder %s47, 0
      %p408 = por %p406, %p407
      %p409 = scmp.ne.s32.totalorder %s395, %s396
      %p410 = scmp.eq.s32.totalorder %s48, 1
      %p411 = por %p409, %p410
      %p413 = scmp.ne.s32.totalorder %s396, %s412
      %p414 = scmp.eq.s32.totalorder %s48, 0
      %p415 = por %p413, %p414
      %s416 = ssub.s32 %s50, %s57
      %p417 = scmp.eq.s32.totalorder %s416, 0
      %s419 = sadd.s32 %s418, 1
      %s420 = scalar_select %p417, %s418, %s419
      %p423 = pneg %p417
      %p424 = scmp.eq.s32.totalorder %s42, 1
      %p425 = por %p423, %p424
      %p426 = scmp.ne.s32.totalorder %s418, %s421
      %p427 = scmp.eq.s32.totalorder %s42, 0
      %p428 = por %p426, %p427
      %p429 = scmp.ne.s32.totalorder %s418, %s421
      %p430 = scmp.eq.s32.totalorder %s47, 1
      %p431 = por %p429, %p430
      %p432 = scmp.ne.s32.totalorder %s421, %s422
      %p433 = scmp.eq.s32.totalorder %s47, 0
      %p434 = por %p432, %p433
      %p435 = scmp.ne.s32.totalorder %s421, %s422
      %p436 = scmp.eq.s32.totalorder %s48, 1
      %p437 = por %p435, %p436
      %p439 = scmp.ne.s32.totalorder %s422, %s438
      %p440 = scmp.eq.s32.totalorder %s48, 0
      %p441 = por %p439, %p440
      %s443 = sadd.s32 %s442, 1
      %p446 = scmp.eq.s32.totalorder %s42, 1
      %p447 = scmp.ne.s32.totalorder %s442, %s444
      %p448 = scmp.eq.s32.totalorder %s42, 0
      %p449 = por %p447, %p448
      %p450 = scmp.ne.s32.totalorder %s442, %s444
      %p451 = scmp.eq.s32.totalorder %s47, 1
      %p452 = por %p450, %p451
      %p453 = scmp.ne.s32.totalorder %s444, %s445
      %p454 = scmp.eq.s32.totalorder %s47, 0
      %p455 = por %p453, %p454
      %p456 = scmp.ne.s32.totalorder %s444, %s445
      %p457 = scmp.eq.s32.totalorder %s48, 1
      %p458 = por %p456, %p457
      %p460 = scmp.ne.s32.totalorder %s445, %s459
      %p461 = scmp.eq.s32.totalorder %s48, 0
      %p462 = por %p460, %p461
      %s464 = sadd.s32 %s463, 1
      %p467 = scmp.eq.s32.totalorder %s42, 1
      %p468 = scmp.ne.s32.totalorder %s463, %s465
      %p469 = scmp.eq.s32.totalorder %s42, 0
      %p470 = por %p468, %p469
      %p471 = scmp.ne.s32.totalorder %s463, %s465
      %p472 = scmp.eq.s32.totalorder %s47, 1
      %p473 = por %p471, %p472
      %p474 = scmp.ne.s32.totalorder %s465, %s466
      %p475 = scmp.eq.s32.totalorder %s47, 0
      %p476 = por %p474, %p475
      %p477 = scmp.ne.s32.totalorder %s465, %s466
      %p478 = scmp.eq.s32.totalorder %s48, 1
      %p479 = por %p477, %p478
      %p481 = scmp.ne.s32.totalorder %s466, %s480
      %p482 = scmp.eq.s32.totalorder %s48, 0
      %p483 = por %p481, %p482
      %s485 = sadd.s32 %s484, 1
      %p488 = scmp.eq.s32.totalorder %s42, 1
      %p489 = scmp.ne.s32.totalorder %s484, %s486
      %p490 = scmp.eq.s32.totalorder %s42, 0
      %p491 = por %p489, %p490
      %p492 = scmp.ne.s32.totalorder %s484, %s486
      %p493 = scmp.eq.s32.totalorder %s47, 1
      %p494 = por %p492, %p493
      %p495 = scmp.ne.s32.totalorder %s486, %s487
      %p496 = scmp.eq.s32.totalorder %s47, 0
      %p497 = por %p495, %p496
      %p498 = scmp.ne.s32.totalorder %s486, %s487
      %p499 = scmp.eq.s32.totalorder %s48, 1
      %p500 = por %p498, %p499
      %p502 = scmp.ne.s32.totalorder %s487, %s501
      %p503 = scmp.eq.s32.totalorder %s48, 0
      %p504 = por %p502, %p503
      %s505 = ssub.s32 %s49, %s61
      %p506 = scmp.eq.s32.totalorder %s505, 0
      %s508 = sadd.s32 %s507, 1
      %s509 = scalar_select %p506, %s507, %s508
      %p512 = pneg %p506
      %p513 = scmp.eq.s32.totalorder %s42, 1
      %p514 = por %p512, %p513
      %p515 = scmp.ne.s32.totalorder %s507, %s510
      %p516 = scmp.eq.s32.totalorder %s42, 0
      %p517 = por %p515, %p516
      %p518 = scmp.ne.s32.totalorder %s507, %s510
      %p519 = scmp.eq.s32.totalorder %s47, 1
      %p520 = por %p518, %p519
      %p521 = scmp.ne.s32.totalorder %s510, %s511
      %p522 = scmp.eq.s32.totalorder %s47, 0
      %p523 = por %p521, %p522
      %p524 = scmp.ne.s32.totalorder %s510, %s511
      %p525 = scmp.eq.s32.totalorder %s48, 1
      %p526 = por %p524, %p525
      %p528 = scmp.ne.s32.totalorder %s511, %s527
      %p529 = scmp.eq.s32.totalorder %s48, 0
      %p530 = por %p528, %p529
      %p531 = scmp.le.s32.totalorder 1, %s42
      %p532 = scmp.lt.s32.totalorder %s42, 3
      %p533 = pnand %p531, %p532
      %p534 = pneg %p533
      // Predicated region
      $region9: #{tpu_custom_call.1} parent=5 // pred_check
        _
      $region10: #{tpu_custom_call.1} parent=5 // pred_check_branch
        %536 = sbr.rel (%p533) target = $region12
      $region11: #{tpu_custom_call.1} parent=5 // pred_region
        %s537 = ssub.s32 %s42, 1
        // Predicated region
        $region13: #{tpu_custom_call.1} parent=11 // pred_check
          %p538 = pneg %p80
        $region14: #{tpu_custom_call.1} parent=11 // pred_check_branch
          %540 = sbr.rel (%p538) target = $region16
        $region15: #{tpu_custom_call.1} parent=11 // pred_region
          %s541 = smul.u32 2, %s51
          %s543 = ssub.s32 128, 128
          %544 = vsyncadd [#allocation6], %s543
          %s545 = smul.addr %s541, 64
          %s546 = scalar_lea.hbm %s1, %s545
          %s547 = sshll.u32 [#allocation5], 4
          %s548 = int_to_ptr.vmem [resolvable:$true] %s547
          %553 = dma.hbm_to_vmem [thread:$0]  %s546, 128, %s548, [#allocation6], 64, 64, 4
        $region16: #{tpu_custom_call.1} parent=11 // pred_fallthru
          _
        // Predicated region
        $region17: #{tpu_custom_call.1} parent=11 // pred_check
          %p554 = pneg %p101
        $region18: #{tpu_custom_call.1} parent=11 // pred_check_branch
          %556 = sbr.rel (%p554) target = $region20
        $region19: #{tpu_custom_call.1} parent=11 // pred_region
          %s558 = ssub.s32 256, 256
          %559 = vsyncadd [#allocation9], %s558
          %s560 = sshll.u32 [#allocation8], 4
          %s561 = int_to_ptr.vmem [resolvable:$true] %s560
          %566 = dma.hbm_to_vmem [thread:$0]  %s2, 256, %s561, [#allocation9], 128, 128, 8
        $region20: #{tpu_custom_call.1} parent=11 // pred_fallthru
          _
        // Predicated region
        $region21: #{tpu_custom_call.1} parent=11 // pred_check
          %p567 = pneg %p122
        $region22: #{tpu_custom_call.1} parent=11 // pred_check_branch
          %569 = sbr.rel (%p567) target = $region24
        $region23: #{tpu_custom_call.1} parent=11 // pred_region
          %s571 = ssub.s32 256, 256
          %572 = vsyncadd [#allocation9], %s571
          %s573 = sshll.u32 [#allocation10], 4
          %s574 = int_to_ptr.vmem [resolvable:$true] %s573
          %579 = dma.hbm_to_vmem [thread:$0]  %s3, 256, %s574, [#allocation9], 128, 128, 8
        $region24: #{tpu_custom_call.1} parent=11 // pred_fallthru
          _
        // Predicated region
        $region25: #{tpu_custom_call.1} parent=11 // pred_check
          %p580 = pneg %p455
        $region26: #{tpu_custom_call.1} parent=11 // pred_check_branch
          %582 = sbr.rel (%p580) target = $region28
        $region27: #{tpu_custom_call.1} parent=11 // pred_region
          _
        $region28: #{tpu_custom_call.1} parent=11 // pred_fallthru
          _
        // Predicated region
        $region29: #{tpu_custom_call.1} parent=11 // pred_check
          %p583 = pneg %p476
        $region30: #{tpu_custom_call.1} parent=11 // pred_check_branch
          %585 = sbr.rel (%p583) target = $region32
        $region31: #{tpu_custom_call.1} parent=11 // pred_region
          _
        $region32: #{tpu_custom_call.1} parent=11 // pred_fallthru
          _
        // Predicated region
        $region33: #{tpu_custom_call.1} parent=11 // pred_check
          %p586 = pneg %p497
        $region34: #{tpu_custom_call.1} parent=11 // pred_check_branch
          %588 = sbr.rel (%p586) target = $region36
        $region35: #{tpu_custom_call.1} parent=11 // pred_region
          %s590 = ssub.s32 1024, 1024
          %591 = vsyncadd [#allocation21], %s590
          %s592 = sshll.u32 [#allocation20], 4
          %s593 = int_to_ptr.vmem [resolvable:$true] %s592
          %598 = dma.hbm_to_vmem [thread:$0]  %s18, 1024, %s593, [#allocation21], 64, 64, 4
        $region36: #{tpu_custom_call.1} parent=11 // pred_fallthru
          _
      $region12: #{tpu_custom_call.1} parent=5 // pred_fallthru
        _
      %p599 = scmp.lt.s32.totalorder %s42, 2
      // Predicated region
      $region37: #{tpu_custom_call.1} parent=5 // pred_check
        %p600 = pneg %p599
      $region38: #{tpu_custom_call.1} parent=5 // pred_check_branch
        %602 = sbr.rel (%p600) target = $region40
      $region39: #{tpu_custom_call.1} parent=5 // pred_region
        // Predicated region
        $region41: #{tpu_custom_call.1} parent=39 // pred_check
          %p603 = pneg %p142
        $region42: #{tpu_custom_call.1} parent=39 // pred_check_branch
          %605 = sbr.rel (%p603) target = $region44
        $region43: #{tpu_custom_call.1} parent=39 // pred_region
          %p606 = scmp.lt.s32.totalorder %s50, 1
          %s607 = scalar_select %p606, %s50, 1
          %s608 = scalar_lea.vmem %s4, %s607
        $region44: #{tpu_custom_call.1} parent=39 // pred_fallthru
          _
        // Predicated region
        $region45: #{tpu_custom_call.1} parent=39 // pred_check
          %p609 = pneg %p168
        $region46: #{tpu_custom_call.1} parent=39 // pred_check_branch
          %611 = sbr.rel (%p609) target = $region48
        $region47: #{tpu_custom_call.1} parent=39 // pred_region
          %s612 = sand.u32 %s42, 1
          %s613 = scalar_lea.sflag [#allocation12], %s612
          %s614 = sand.u32 %s158, 1
          %s615 = scalar_lea.vmem [#allocation11], %s614
          %s617 = ssub.s32 16, 16
          %618 = vsyncadd %s613, %s617
          %s619 = smul.addr %s50, 16
          %s620 = scalar_lea.hbm %s5, %s619
          %s622 = sshll.u32 %s615, 4
          %s623 = int_to_ptr.vmem [resolvable:$true] %s622
          %625 = dma.hbm_to_vmem [thread:$0]  %s620, 16, %s623, %s613
        $region48: #{tpu_custom_call.1} parent=39 // pred_fallthru
          _
        // Predicated region
        $region49: #{tpu_custom_call.1} parent=39 // pred_check
          %p626 = pneg %p194
        $region50: #{tpu_custom_call.1} parent=39 // pred_check_branch
          %628 = sbr.rel (%p626) target = $region52
        $region51: #{tpu_custom_call.1} parent=39 // pred_region
          %s629 = sand.u32 %s42, 1
          %s630 = scalar_lea.sflag [#allocation12], %s629
          %s631 = sand.u32 %s184, 1
          %s632 = smul.addr %s631, 192
          %s633 = scalar_lea.vmem [#allocation13], %s632
          %s635 = ssub.s32 3072, 3072
          %636 = vsyncadd %s630, %s635
          %s637 = smul.addr %s50, 48
          %s638 = smul.addr %s637, 64
          %s639 = scalar_lea.hbm %s6, %s638
          %s640 = sshll.u32 %s633, 4
          %s641 = int_to_ptr.vmem [resolvable:$true] %s640
          %646 = dma.hbm_to_vmem [thread:$0]  %s639, 3072, %s641, %s630, 192, 192, 12
        $region52: #{tpu_custom_call.1} parent=39 // pred_fallthru
          _
        // Predicated region
        $region53: #{tpu_custom_call.1} parent=39 // pred_check
          %p647 = pneg %p220
        $region54: #{tpu_custom_call.1} parent=39 // pred_check_branch
          %649 = sbr.rel (%p647) target = $region56
        $region55: #{tpu_custom_call.1} parent=39 // pred_region
          %p650 = scmp.lt.s32.totalorder %s50, 1
          %s651 = scalar_select %p650, %s50, 1
          %s652 = smul.addr %s651, 3
          %s653 = scalar_lea.vmem %s7, %s652
        $region56: #{tpu_custom_call.1} parent=39 // pred_fallthru
          _
        // Predicated region
        $region57: #{tpu_custom_call.1} parent=39 // pred_check
          %p654 = pneg %p246
        $region58: #{tpu_custom_call.1} parent=39 // pred_check_branch
          %656 = sbr.rel (%p654) target = $region60
        $region59: #{tpu_custom_call.1} parent=39 // pred_region
          %s657 = sand.u32 %s42, 1
          %s658 = scalar_lea.sflag [#allocation15], %s657
          %s659 = sand.u32 %s236, 1
          %s660 = smul.addr %s659, 64
          %s661 = scalar_lea.vmem [#allocation14], %s660
          %s663 = ssub.s32 1024, 1024
          %664 = vsyncadd %s658, %s663
          %s665 = smul.addr %s50, 16
          %s666 = smul.addr %s665, 64
          %s667 = scalar_lea.hbm %s8, %s666
          %s668 = sshll.u32 %s661, 4
          %s669 = int_to_ptr.vmem [resolvable:$true] %s668
          %674 = dma.hbm_to_vmem [thread:$0]  %s667, 1024, %s669, %s658, 64, 64, 4
        $region60: #{tpu_custom_call.1} parent=39 // pred_fallthru
          _
        // Predicated region
        $region61: #{tpu_custom_call.1} parent=39 // pred_check
          %p675 = pneg %p272
        $region62: #{tpu_custom_call.1} parent=39 // pred_check_branch
          %677 = sbr.rel (%p675) target = $region64
        $region63: #{tpu_custom_call.1} parent=39 // pred_region
          %s678 = sand.u32 %s42, 1
          %s679 = scalar_lea.sflag [#allocation15], %s678
          %s680 = sand.u32 %s262, 1
          %s681 = scalar_lea.vmem [#allocation16], %s680
          %s683 = ssub.s32 16, 16
          %684 = vsyncadd %s679, %s683
          %s685 = smul.addr %s50, 16
          %s686 = scalar_lea.hbm %s9, %s685
          %s688 = sshll.u32 %s681, 4
          %s689 = int_to_ptr.vmem [resolvable:$true] %s688
          %691 = dma.hbm_to_vmem [thread:$0]  %s686, 16, %s689, %s679
        $region64: #{tpu_custom_call.1} parent=39 // pred_fallthru
          _
        // Predicated region
        $region65: #{tpu_custom_call.1} parent=39 // pred_check
          %p692 = pneg %p298
        $region66: #{tpu_custom_call.1} parent=39 // pred_check_branch
          %694 = sbr.rel (%p692) target = $region68
        $region67: #{tpu_custom_call.1} parent=39 // pred_region
          %p695 = scmp.lt.s32.totalorder %s50, 1
          %s696 = scalar_select %p695, %s50, 1
          %s697 = scalar_lea.vmem %s10, %s696
        $region68: #{tpu_custom_call.1} parent=39 // pred_fallthru
          _
        // Predicated region
        $region69: #{tpu_custom_call.1} parent=39 // pred_check
          %p698 = pneg %p324
        $region70: #{tpu_custom_call.1} parent=39 // pred_check_branch
          %700 = sbr.rel (%p698) target = $region72
        $region71: #{tpu_custom_call.1} parent=39 // pred_region
          %p701 = scmp.lt.s32.totalorder %s50, 1
          %s702 = scalar_select %p701, %s50, 1
          %s703 = scalar_lea.vmem %s11, %s702
        $region72: #{tpu_custom_call.1} parent=39 // pred_fallthru
          _
        // Predicated region
        $region73: #{tpu_custom_call.1} parent=39 // pred_check
          %p704 = pneg %p350
        $region74: #{tpu_custom_call.1} parent=39 // pred_check_branch
          %706 = sbr.rel (%p704) target = $region76
        $region75: #{tpu_custom_call.1} parent=39 // pred_region
          %s707 = sand.u32 %s42, 1
          %s708 = scalar_lea.sflag [#allocation18], %s707
          %s709 = sand.u32 %s340, 1
          %s710 = smul.addr %s709, 256
          %s711 = scalar_lea.vmem [#allocation17], %s710
          %s713 = ssub.s32 4096, 4096
          %714 = vsyncadd %s708, %s713
          %s715 = smul.addr %s50, 64
          %s716 = smul.addr %s715, 64
          %s717 = scalar_lea.hbm %s12, %s716
          %s718 = sshll.u32 %s711, 4
          %s719 = int_to_ptr.vmem [resolvable:$true] %s718
          %724 = dma.hbm_to_vmem [thread:$0]  %s717, 4096, %s719, %s708, 256, 256, 16
        $region76: #{tpu_custom_call.1} parent=39 // pred_fallthru
          _
        // Predicated region
        $region77: #{tpu_custom_call.1} parent=39 // pred_check
          %p725 = pneg %p376
        $region78: #{tpu_custom_call.1} parent=39 // pred_check_branch
          %727 = sbr.rel (%p725) target = $region80
        $region79: #{tpu_custom_call.1} parent=39 // pred_region
          %p728 = scmp.lt.s32.totalorder %s50, 1
          %s729 = scalar_select %p728, %s50, 1
          %s730 = smul.addr %s729, 4
          %s731 = scalar_lea.vmem %s13, %s730
        $region80: #{tpu_custom_call.1} parent=39 // pred_fallthru
          _
        // Predicated region
        $region81: #{tpu_custom_call.1} parent=39 // pred_check
          %p732 = pneg %p402
        $region82: #{tpu_custom_call.1} parent=39 // pred_check_branch
          %734 = sbr.rel (%p732) target = $region84
        $region83: #{tpu_custom_call.1} parent=39 // pred_region
          %s735 = sand.u32 %s42, 1
          %s736 = scalar_lea.sflag [#allocation18], %s735
          %s737 = sand.u32 %s392, 1
          %s738 = smul.addr %s737, 256
          %s739 = scalar_lea.vmem [#allocation19], %s738
          %s741 = ssub.s32 4096, 4096
          %742 = vsyncadd %s736, %s741
          %s743 = smul.addr %s50, 64
          %s744 = smul.addr %s743, 64
          %s745 = scalar_lea.hbm %s14, %s744
          %s746 = sshll.u32 %s739, 4
          %s747 = int_to_ptr.vmem [resolvable:$true] %s746
          %752 = dma.hbm_to_vmem [thread:$0]  %s745, 4096, %s747, %s736, 64, 64, 4
        $region84: #{tpu_custom_call.1} parent=39 // pred_fallthru
          _
        // Predicated region
        $region85: #{tpu_custom_call.1} parent=39 // pred_check
          %p753 = pneg %p428
        $region86: #{tpu_custom_call.1} parent=39 // pred_check_branch
          %755 = sbr.rel (%p753) target = $region88
        $region87: #{tpu_custom_call.1} parent=39 // pred_region
          %p756 = scmp.lt.s32.totalorder %s50, 1
          %s757 = scalar_select %p756, %s50, 1
          %s758 = scalar_lea.vmem %s15, %s757
        $region88: #{tpu_custom_call.1} parent=39 // pred_fallthru
          _
      $region40: #{tpu_custom_call.1} parent=5 // pred_fallthru
        _
      %p759 = scmp.le.s32.totalorder 1, %s42
      %p760 = scmp.lt.s32.totalorder %s42, 3
      %p761 = pnand %p759, %p760
      %p762 = pneg %p761
      // Predicated region
      $region89: #{tpu_custom_call.1} parent=5 // pred_check
        _
      $region90: #{tpu_custom_call.1} parent=5 // pred_check_branch
        %764 = sbr.rel (%p761) target = $region92
      $region91: #{tpu_custom_call.1} parent=5 // pred_region
        %s765 = ssub.s32 %s42, 1
        // Predicated region
        $region93: #{tpu_custom_call.1} parent=91 // pred_check
          %p766 = pneg %p80
        $region94: #{tpu_custom_call.1} parent=91 // pred_check_branch
          %768 = sbr.rel (%p766) target = $region96
        $region95: #{tpu_custom_call.1} parent=91 // pred_region
          %769 = dma.done [#allocation6], 128
        $region96: #{tpu_custom_call.1} parent=91 // pred_fallthru
          _
        // Predicated region
        $region97: #{tpu_custom_call.1} parent=91 // pred_check
          %p770 = pneg %p101
        $region98: #{tpu_custom_call.1} parent=91 // pred_check_branch
          %772 = sbr.rel (%p770) target = $region100
        $region99: #{tpu_custom_call.1} parent=91 // pred_region
          %773 = dma.done [#allocation9], 256
        $region100: #{tpu_custom_call.1} parent=91 // pred_fallthru
          _
        // Predicated region
        $region101: #{tpu_custom_call.1} parent=91 // pred_check
          %p774 = pneg %p122
        $region102: #{tpu_custom_call.1} parent=91 // pred_check_branch
          %776 = sbr.rel (%p774) target = $region104
        $region103: #{tpu_custom_call.1} parent=91 // pred_region
          %777 = dma.done [#allocation9], 256
        $region104: #{tpu_custom_call.1} parent=91 // pred_fallthru
          _
        %s778 = sand.u32 %s47, 1
        %s779 = scalar_lea.sflag [#allocation12], %s778
        %s780 = sand.u32 %s161, 1
        %s781 = scalar_lea.vmem [#allocation11], %s780
        // Predicated region
        $region105: #{tpu_custom_call.1} parent=91 // pred_check
          %p782 = pneg %p174
        $region106: #{tpu_custom_call.1} parent=91 // pred_check_branch
          %784 = sbr.rel (%p782) target = $region108
        $region107: #{tpu_custom_call.1} parent=91 // pred_region
          %785 = dma.done %s779, 16
        $region108: #{tpu_custom_call.1} parent=91 // pred_fallthru
          _
        %s786 = sand.u32 %s47, 1
        %s787 = scalar_lea.sflag [#allocation12], %s786
        %s788 = sand.u32 %s187, 1
        %s789 = smul.addr %s788, 192
        %s790 = scalar_lea.vmem [#allocation13], %s789
        // Predicated region
        $region109: #{tpu_custom_call.1} parent=91 // pred_check
          %p791 = pneg %p200
        $region110: #{tpu_custom_call.1} parent=91 // pred_check_branch
          %793 = sbr.rel (%p791) target = $region112
        $region111: #{tpu_custom_call.1} parent=91 // pred_region
          %794 = dma.done %s787, 3072
        $region112: #{tpu_custom_call.1} parent=91 // pred_fallthru
          _
        %s795 = sand.u32 %s47, 1
        %s796 = scalar_lea.sflag [#allocation15], %s795
        %s797 = sand.u32 %s239, 1
        %s798 = smul.addr %s797, 64
        %s799 = scalar_lea.vmem [#allocation14], %s798
        // Predicated region
        $region113: #{tpu_custom_call.1} parent=91 // pred_check
          %p800 = pneg %p252
        $region114: #{tpu_custom_call.1} parent=91 // pred_check_branch
          %802 = sbr.rel (%p800) target = $region116
        $region115: #{tpu_custom_call.1} parent=91 // pred_region
          %803 = dma.done %s796, 1024
        $region116: #{tpu_custom_call.1} parent=91 // pred_fallthru
          _
        %s804 = sand.u32 %s47, 1
        %s805 = scalar_lea.sflag [#allocation15], %s804
        %s806 = sand.u32 %s265, 1
        %s807 = scalar_lea.vmem [#allocation16], %s806
        // Predicated region
        $region117: #{tpu_custom_call.1} parent=91 // pred_check
          %p808 = pneg %p278
        $region118: #{tpu_custom_call.1} parent=91 // pred_check_branch
          %810 = sbr.rel (%p808) target = $region120
        $region119: #{tpu_custom_call.1} parent=91 // pred_region
          %811 = dma.done %s805, 16
        $region120: #{tpu_custom_call.1} parent=91 // pred_fallthru
          _
        %s812 = sand.u32 %s47, 1
        %s813 = scalar_lea.sflag [#allocation18], %s812
        %s814 = sand.u32 %s343, 1
        %s815 = smul.addr %s814, 256
        %s816 = scalar_lea.vmem [#allocation17], %s815
        // Predicated region
        $region121: #{tpu_custom_call.1} parent=91 // pred_check
          %p817 = pneg %p356
        $region122: #{tpu_custom_call.1} parent=91 // pred_check_branch
          %819 = sbr.rel (%p817) target = $region124
        $region123: #{tpu_custom_call.1} parent=91 // pred_region
          %820 = dma.done %s813, 4096
        $region124: #{tpu_custom_call.1} parent=91 // pred_fallthru
          _
        %s821 = sand.u32 %s47, 1
        %s822 = scalar_lea.sflag [#allocation18], %s821
        %s823 = sand.u32 %s395, 1
        %s824 = smul.addr %s823, 256
        %s825 = scalar_lea.vmem [#allocation19], %s824
        // Predicated region
        $region125: #{tpu_custom_call.1} parent=91 // pred_check
          %p826 = pneg %p408
        $region126: #{tpu_custom_call.1} parent=91 // pred_check_branch
          %828 = sbr.rel (%p826) target = $region128
        $region127: #{tpu_custom_call.1} parent=91 // pred_region
          %829 = dma.done %s822, 4096
        $region128: #{tpu_custom_call.1} parent=91 // pred_fallthru
          _
        // Predicated region
        $region129: #{tpu_custom_call.1} parent=91 // pred_check
          %p830 = pneg %p497
        $region130: #{tpu_custom_call.1} parent=91 // pred_check_branch
          %832 = sbr.rel (%p830) target = $region132
        $region131: #{tpu_custom_call.1} parent=91 // pred_region
          %833 = dma.done [#allocation21], 1024
        $region132: #{tpu_custom_call.1} parent=91 // pred_fallthru
          _
        %p834 = pneg %p80
        %p835 = pneg %p77
        %p836 = pneg %p101
        %p837 = pneg %p98
        %p838 = pneg %p122
        %p839 = pneg %p119
        %p840 = scmp.lt.s32.totalorder %s52, 1
        %s841 = scalar_select %p840, %s52, 1
        %s842 = scalar_lea.vmem %s4, %s841
        %p843 = pneg %p148
        %p844 = pneg %p145
        %s845 = sand.u32 %s47, 1
        %s846 = scalar_lea.sflag [#allocation12], %s845
        %s847 = sand.u32 %s161, 1
        %s848 = scalar_lea.vmem [#allocation11], %s847
        %p849 = pneg %p174
        %p850 = pneg %p171
        %s851 = sand.u32 %s47, 1
        %s852 = scalar_lea.sflag [#allocation12], %s851
        %s853 = sand.u32 %s187, 1
        %s854 = smul.addr %s853, 192
        %s855 = scalar_lea.vmem [#allocation13], %s854
        %p856 = pneg %p200
        %p857 = pneg %p197
        %p858 = scmp.lt.s32.totalorder %s52, 1
        %s859 = scalar_select %p858, %s52, 1
        %s860 = smul.addr %s859, 3
        %s861 = scalar_lea.vmem %s7, %s860
        %p862 = pneg %p226
        %p863 = pneg %p223
        %s864 = sand.u32 %s47, 1
        %s865 = scalar_lea.sflag [#allocation15], %s864
        %s866 = sand.u32 %s239, 1
        %s867 = smul.addr %s866, 64
        %s868 = scalar_lea.vmem [#allocation14], %s867
        %p869 = pneg %p252
        %p870 = pneg %p249
        %s871 = sand.u32 %s47, 1
        %s872 = scalar_lea.sflag [#allocation15], %s871
        %s873 = sand.u32 %s265, 1
        %s874 = scalar_lea.vmem [#allocation16], %s873
        %p875 = pneg %p278
        %p876 = pneg %p275
        %p877 = scmp.lt.s32.totalorder %s52, 1
        %s878 = scalar_select %p877, %s52, 1
        %s879 = scalar_lea.vmem %s10, %s878
        %p880 = pneg %p304
        %p881 = pneg %p301
        %p882 = scmp.lt.s32.totalorder %s52, 1
        %s883 = scalar_select %p882, %s52, 1
        %s884 = scalar_lea.vmem %s11, %s883
        %p885 = pneg %p330
        %p886 = pneg %p327
        %s887 = sand.u32 %s47, 1
        %s888 = scalar_lea.sflag [#allocation18], %s887
        %s889 = sand.u32 %s343, 1
        %s890 = smul.addr %s889, 256
        %s891 = scalar_lea.vmem [#allocation17], %s890
        %p892 = pneg %p356
        %p893 = pneg %p353
        %p894 = scmp.lt.s32.totalorder %s52, 1
        %s895 = scalar_select %p894, %s52, 1
        %s896 = smul.addr %s895, 4
        %s897 = scalar_lea.vmem %s13, %s896
        %p898 = pneg %p382
        %p899 = pneg %p379
        %s900 = sand.u32 %s47, 1
        %s901 = scalar_lea.sflag [#allocation18], %s900
        %s902 = sand.u32 %s395, 1
        %s903 = smul.addr %s902, 256
        %s904 = scalar_lea.vmem [#allocation19], %s903
        %p905 = pneg %p408
        %p906 = pneg %p405
        %p907 = scmp.lt.s32.totalorder %s52, 1
        %s908 = scalar_select %p907, %s52, 1
        %s909 = scalar_lea.vmem %s15, %s908
        %p910 = pneg %p434
        %p911 = pneg %p431
        %p912 = pneg %p455
        %p913 = pneg %p452
        %p914 = pneg %p476
        %p915 = pneg %p473
        %p916 = pneg %p497
        %p917 = pneg %p494
        %p918 = pneg %p523
        %p919 = pneg %p520
        %s920 = smul.u32 2, %s51
        %p921 = scmp.lt.s32.totalorder %s52, 1
        %s922 = scalar_select %p921, %s52, 1
        %s923 = scalar_lea.vmem %s4, %s922
        %p924 = scmp.lt.s32.totalorder %s52, 1
        %s925 = scalar_select %p924, %s52, 1
        %s926 = smul.addr %s925, 3
        %s927 = scalar_lea.vmem %s7, %s926
        %p928 = scmp.lt.s32.totalorder %s52, 1
        %s929 = scalar_select %p928, %s52, 1
        %s930 = scalar_lea.vmem %s10, %s929
        %p931 = scmp.lt.s32.totalorder %s52, 1
        %s932 = scalar_select %p931, %s52, 1
        %s933 = scalar_lea.vmem %s11, %s932
        %p934 = scmp.lt.s32.totalorder %s52, 1
        %s935 = scalar_select %p934, %s52, 1
        %s936 = smul.addr %s935, 4
        %s937 = scalar_lea.vmem %s13, %s936
        %p938 = scmp.lt.s32.totalorder %s52, 1
        %s939 = scalar_select %p938, %s52, 1
        %s940 = scalar_lea.vmem %s15, %s939
        %v942 = vld [vmem:[#allocation10] sm:$0xff]
        %v943 = vld [vmem:[#allocation10 + $0x8] sm:$0xff]
        %vm944 = vcmp.ne.s32.totalorder %v942, 0
        %vm945 = vcmp.ne.s32.totalorder %v943, 0
        %p946 = scmp.eq.s32.totalorder %s52, 0
        // Predicated region
        $region133: #{tpu_custom_call.1} parent=91 // pred_check
          %p947 = pneg %p946
        $region134: #{tpu_custom_call.1} parent=91 // pred_check_branch
          %949 = sbr.rel (%p947) target = $region136
        $region135: #{tpu_custom_call.1} parent=91 // pred_region
          %v950 = vld [vmem:[#allocation5] sm:$0xf]
          %v951 = vld [vmem:[#allocation5 + $0x4] sm:$0xf]
          %v952 = vunpack.c.l.bf16 %v950
          %v953 = vunpack.c.l.bf16 %v951
          %v954 = vld [vmem:[#allocation8] sm:$0xff]
          %v955 = vld [vmem:[#allocation8 + $0x8] sm:$0xff]
          %v956 = vadd.f32 %v952, %v954
          %v957 = vadd.f32 %v953, %v955
          %958 = vst [vmem:[#allocation2] sm:$0xff] %v956
          %959 = vst [vmem:[#allocation2 + $0x8] sm:$0xff] %v957
        $region136: #{tpu_custom_call.1} parent=91 // pred_fallthru
          _
        %v960 = vld [vmem:[%s923] sm:$0x1]
        %v961 = vld [vmem:[%s781] sm:$0x1]
        %v962 = vld [vmem:[%s790] sm:$0xff]
        %v963 = vld [vmem:[%s790 + $0x8] sm:$0xf]
        %v964 = vld [vmem:[%s790 + $0xc] sm:$0xff]
        %v965 = vld [vmem:[%s790 + $0x14] sm:$0xf]
        %v966 = vld [vmem:[%s790 + $0x18] sm:$0xff]
        %v967 = vld [vmem:[%s790 + $0x20] sm:$0xf]
        %v968 = vld [vmem:[%s790 + $0x24] sm:$0xff]
        %v969 = vld [vmem:[%s790 + $0x2c] sm:$0xf]
        %v970 = vld [vmem:[%s790 + $0x30] sm:$0xff]
        %v971 = vld [vmem:[%s790 + $0x38] sm:$0xf]
        %v972 = vld [vmem:[%s790 + $0x3c] sm:$0xff]
        %v973 = vld [vmem:[%s790 + $0x44] sm:$0xf]
        %v974 = vld [vmem:[%s790 + $0x48] sm:$0xff]
        %v975 = vld [vmem:[%s790 + $0x50] sm:$0xf]
        %v976 = vld [vmem:[%s790 + $0x54] sm:$0xff]
        %v977 = vld [vmem:[%s790 + $0x5c] sm:$0xf]
        %v978 = vld [vmem:[%s790 + $0x60] sm:$0xff]
        %v979 = vld [vmem:[%s790 + $0x68] sm:$0xf]
        %v980 = vld [vmem:[%s790 + $0x6c] sm:$0xff]
        %v981 = vld [vmem:[%s790 + $0x74] sm:$0xf]
        %v982 = vld [vmem:[%s790 + $0x78] sm:$0xff]
        %v983 = vld [vmem:[%s790 + $0x80] sm:$0xf]
        %v984 = vld [vmem:[%s790 + $0x84] sm:$0xff]
        %v985 = vld [vmem:[%s790 + $0x8c] sm:$0xf]
        %v986 = vld [vmem:[%s790 + $0x90] sm:$0xff]
        %v987 = vld [vmem:[%s790 + $0x98] sm:$0xf]
        %v988 = vld [vmem:[%s790 + $0x9c] sm:$0xff]
        %v989 = vld [vmem:[%s790 + $0xa4] sm:$0xf]
        %v990 = vld [vmem:[%s790 + $0xa8] sm:$0xff]
        %v991 = vld [vmem:[%s790 + $0xb0] sm:$0xf]
        %v992 = vld [vmem:[%s790 + $0xb4] sm:$0xff]
        %v993 = vld [vmem:[%s790 + $0xbc] sm:$0xf]
        %v994 = vld [vmem:[%s927] sm:$0x7]
        %v995 = vld [vmem:[%s799] sm:$0xf]
        %v996 = vld [vmem:[%s799 + $0x4] sm:$0xf]
        %v997 = vld [vmem:[%s799 + $0x8] sm:$0xf]
        %v998 = vld [vmem:[%s799 + $0xc] sm:$0xf]
        %v999 = vld [vmem:[%s799 + $0x10] sm:$0xf]
        %v1000 = vld [vmem:[%s799 + $0x14] sm:$0xf]
        %v1001 = vld [vmem:[%s799 + $0x18] sm:$0xf]
        %v1002 = vld [vmem:[%s799 + $0x1c] sm:$0xf]
        %v1003 = vld [vmem:[%s799 + $0x20] sm:$0xf]
        %v1004 = vld [vmem:[%s799 + $0x24] sm:$0xf]
        %v1005 = vld [vmem:[%s799 + $0x28] sm:$0xf]
        %v1006 = vld [vmem:[%s799 + $0x2c] sm:$0xf]
        %v1007 = vld [vmem:[%s799 + $0x30] sm:$0xf]
        %v1008 = vld [vmem:[%s799 + $0x34] sm:$0xf]
        %v1009 = vld [vmem:[%s799 + $0x38] sm:$0xf]
        %v1010 = vld [vmem:[%s799 + $0x3c] sm:$0xf]
        %v1011 = vld [vmem:[%s807] sm:$0x1]
        %v1012 = vld [vmem:[%s930] sm:$0x1]
        %v1013 = vld [vmem:[%s933] sm:$0x1]
        %v1014 = vld [vmem:[%s816] sm:$0xff]
        %v1015 = vld [vmem:[%s816 + $0x8] sm:$0xff]
        %v1016 = vld [vmem:[%s816 + $0x10] sm:$0xff]
        %v1017 = vld [vmem:[%s816 + $0x18] sm:$0xff]
        %v1018 = vld [vmem:[%s816 + $0x20] sm:$0xff]
        %v1019 = vld [vmem:[%s816 + $0x28] sm:$0xff]
        %v1020 = vld [vmem:[%s816 + $0x30] sm:$0xff]
        %v1021 = vld [vmem:[%s816 + $0x38] sm:$0xff]
        %v1022 = vld [vmem:[%s816 + $0x40] sm:$0xff]
        %v1023 = vld [vmem:[%s816 + $0x48] sm:$0xff]
        %v1024 = vld [vmem:[%s816 + $0x50] sm:$0xff]
        %v1025 = vld [vmem:[%s816 + $0x58] sm:$0xff]
        %v1026 = vld [vmem:[%s816 + $0x60] sm:$0xff]
        %v1027 = vld [vmem:[%s816 + $0x68] sm:$0xff]
        %v1028 = vld [vmem:[%s816 + $0x70] sm:$0xff]
        %v1029 = vld [vmem:[%s816 + $0x78] sm:$0xff]
        %v1030 = vld [vmem:[%s816 + $0x80] sm:$0xff]
        %v1031 = vld [vmem:[%s816 + $0x88] sm:$0xff]
        %v1032 = vld [vmem:[%s816 + $0x90] sm:$0xff]
        %v1033 = vld [vmem:[%s816 + $0x98] sm:$0xff]
        %v1034 = vld [vmem:[%s816 + $0xa0] sm:$0xff]
        %v1035 = vld [vmem:[%s816 + $0xa8] sm:$0xff]
        %v1036 = vld [vmem:[%s816 + $0xb0] sm:$0xff]
        %v1037 = vld [vmem:[%s816 + $0xb8] sm:$0xff]
        %v1038 = vld [vmem:[%s816 + $0xc0] sm:$0xff]
        %v1039 = vld [vmem:[%s816 + $0xc8] sm:$0xff]
        %v1040 = vld [vmem:[%s816 + $0xd0] sm:$0xff]
        %v1041 = vld [vmem:[%s816 + $0xd8] sm:$0xff]
        %v1042 = vld [vmem:[%s816 + $0xe0] sm:$0xff]
        %v1043 = vld [vmem:[%s816 + $0xe8] sm:$0xff]
        %v1044 = vld [vmem:[%s816 + $0xf0] sm:$0xff]
        %v1045 = vld [vmem:[%s816 + $0xf8] sm:$0xff]
        %v1046 = vld [vmem:[%s937] sm:$0xf]
        %v1047 = vld [vmem:[%s825] sm:$0xf]
        %v1048 = vld [vmem:[%s825 + $0x4] sm:$0xf]
        %v1049 = vld [vmem:[%s825 + $0x8] sm:$0xf]
        %v1050 = vld [vmem:[%s825 + $0xc] sm:$0xf]
        %v1051 = vld [vmem:[%s825 + $0x10] sm:$0xf]
        %v1052 = vld [vmem:[%s825 + $0x14] sm:$0xf]
        %v1053 = vld [vmem:[%s825 + $0x18] sm:$0xf]
        %v1054 = vld [vmem:[%s825 + $0x1c] sm:$0xf]
        %v1055 = vld [vmem:[%s825 + $0x20] sm:$0xf]
        %v1056 = vld [vmem:[%s825 + $0x24] sm:$0xf]
        %v1057 = vld [vmem:[%s825 + $0x28] sm:$0xf]
        %v1058 = vld [vmem:[%s825 + $0x2c] sm:$0xf]
        %v1059 = vld [vmem:[%s825 + $0x30] sm:$0xf]
        %v1060 = vld [vmem:[%s825 + $0x34] sm:$0xf]
        %v1061 = vld [vmem:[%s825 + $0x38] sm:$0xf]
        %v1062 = vld [vmem:[%s825 + $0x3c] sm:$0xf]
        %v1063 = vld [vmem:[%s825 + $0x40] sm:$0xf]
        %v1064 = vld [vmem:[%s825 + $0x44] sm:$0xf]
        %v1065 = vld [vmem:[%s825 + $0x48] sm:$0xf]
        %v1066 = vld [vmem:[%s825 + $0x4c] sm:$0xf]
        %v1067 = vld [vmem:[%s825 + $0x50] sm:$0xf]
        %v1068 = vld [vmem:[%s825 + $0x54] sm:$0xf]
        %v1069 = vld [vmem:[%s825 + $0x58] sm:$0xf]
        %v1070 = vld [vmem:[%s825 + $0x5c] sm:$0xf]
        %v1071 = vld [vmem:[%s825 + $0x60] sm:$0xf]
        %v1072 = vld [vmem:[%s825 + $0x64] sm:$0xf]
        %v1073 = vld [vmem:[%s825 + $0x68] sm:$0xf]
        %v1074 = vld [vmem:[%s825 + $0x6c] sm:$0xf]
        %v1075 = vld [vmem:[%s825 + $0x70] sm:$0xf]
        %v1076 = vld [vmem:[%s825 + $0x74] sm:$0xf]
        %v1077 = vld [vmem:[%s825 + $0x78] sm:$0xf]
        %v1078 = vld [vmem:[%s825 + $0x7c] sm:$0xf]
        %v1079 = vld [vmem:[%s825 + $0x80] sm:$0xf]
        %v1080 = vld [vmem:[%s825 + $0x84] sm:$0xf]
        %v1081 = vld [vmem:[%s825 + $0x88] sm:$0xf]
        %v1082 = vld [vmem:[%s825 + $0x8c] sm:$0xf]
        %v1083 = vld [vmem:[%s825 + $0x90] sm:$0xf]
        %v1084 = vld [vmem:[%s825 + $0x94] sm:$0xf]
        %v1085 = vld [vmem:[%s825 + $0x98] sm:$0xf]
        %v1086 = vld [vmem:[%s825 + $0x9c] sm:$0xf]
        %v1087 = vld [vmem:[%s825 + $0xa0] sm:$0xf]
        %v1088 = vld [vmem:[%s825 + $0xa4] sm:$0xf]
        %v1089 = vld [vmem:[%s825 + $0xa8] sm:$0xf]
        %v1090 = vld [vmem:[%s825 + $0xac] sm:$0xf]
        %v1091 = vld [vmem:[%s825 + $0xb0] sm:$0xf]
        %v1092 = vld [vmem:[%s825 + $0xb4] sm:$0xf]
        %v1093 = vld [vmem:[%s825 + $0xb8] sm:$0xf]
        %v1094 = vld [vmem:[%s825 + $0xbc] sm:$0xf]
        %v1095 = vld [vmem:[%s825 + $0xc0] sm:$0xf]
        %v1096 = vld [vmem:[%s825 + $0xc4] sm:$0xf]
        %v1097 = vld [vmem:[%s825 + $0xc8] sm:$0xf]
        %v1098 = vld [vmem:[%s825 + $0xcc] sm:$0xf]
        %v1099 = vld [vmem:[%s825 + $0xd0] sm:$0xf]
        %v1100 = vld [vmem:[%s825 + $0xd4] sm:$0xf]
        %v1101 = vld [vmem:[%s825 + $0xd8] sm:$0xf]
        %v1102 = vld [vmem:[%s825 + $0xdc] sm:$0xf]
        %v1103 = vld [vmem:[%s825 + $0xe0] sm:$0xf]
        %v1104 = vld [vmem:[%s825 + $0xe4] sm:$0xf]
        %v1105 = vld [vmem:[%s825 + $0xe8] sm:$0xf]
        %v1106 = vld [vmem:[%s825 + $0xec] sm:$0xf]
        %v1107 = vld [vmem:[%s825 + $0xf0] sm:$0xf]
        %v1108 = vld [vmem:[%s825 + $0xf4] sm:$0xf]
        %v1109 = vld [vmem:[%s825 + $0xf8] sm:$0xf]
        %v1110 = vld [vmem:[%s825 + $0xfc] sm:$0xf]
        %v1111 = vld [vmem:[%s940] sm:$0x1]
        %v1112 = vld [vmem:[#allocation2] sm:$0xff]
        %v1113 = vld [vmem:[#allocation2 + $0x8] sm:$0xff]
        %1114 = vadd.xlane.f32.xlu0 %v1112
        %v1115 = vpop.xlane.xlu0 %1114
        %1116 = vadd.xlane.f32.xlu0 %v1113
        %v1117 = vpop.xlane.xlu0 %1116
        %v1118 = vrcp.pop 128.0
        %v1119 = vmul.f32 %v1115, %v1118
        %v1120 = vmul.f32 %v1117, %v1118
        %v1121 = vsub.f32 %v1112, %v1119
        %v1122 = vsub.f32 %v1113, %v1120
        %v1123 = vmul.f32 %v1121, %v1121
        %v1124 = vmul.f32 %v1122, %v1122
        %1125 = vadd.xlane.f32.xlu0 %v1123
        %v1126 = vpop.xlane.xlu0 %1125
        %1127 = vadd.xlane.f32.xlu0 %v1124
        %v1128 = vpop.xlane.xlu0 %1127
        %v1129 = vmul.f32 %v1126, %v1118
        %v1130 = vmul.f32 %v1128, %v1118
        %v1131 = vadd.f32 %v1129, 1e-05
        %v1132 = vadd.f32 %v1130, 1e-05
        %v1133 = vrsqrt.pop %v1131
        %v1134 = vrsqrt.pop %v1132
        %v1135 = vmul.f32 %v1121, %v1133
        %v1136 = vmul.f32 %v1122, %v1134
        %v1138 = vlaneseq
        %v1139 = vshrl.u32 %v1138, 7
        %v1140 = vsub.s32 0, %v1139
        %v1141 = vrot.slane %v960, %v1140
        %v1143 = vmul.f32 %v1135, %v1141
        %v1144 = vmul.f32 %v1136, %v1141
        %v1146 = vlaneseq
        %v1147 = vshrl.u32 %v1146, 7
        %v1148 = vsub.s32 0, %v1147
        %v1149 = vrot.slane %v961, %v1148
        %v1151 = vadd.f32 %v1143, %v1149
        %v1152 = vadd.f32 %v1144, %v1149
        %v1153 = vpack.c.bf16 %v1152, %v1151
        %v1155 = vlaneseq
        %v1156 = vshrl.u32 %v1155, 7
        %v1157 = vsub.s32 0, %v1156
        %v1158 = vrot.slane %v994, %v1157
        %v1159 = vlaneseq
        %v1160 = vshrl.u32 %v1159, 7
        %v1161 = vsub.s32 1, %v1160
        %v1162 = vrot.slane %v994, %v1161
        %v1163 = vlaneseq
        %v1164 = vshrl.u32 %v1163, 7
        %v1165 = vsub.s32 2, %v1164
        %v1166 = vrot.slane %v994, %v1165
        %v1202 = vunpack.c.l.b16 %v962
        %v1203 = vunpack.c.h.b16 %v962
        %v1204 = vunpack.c.l.b16 %v963
        %v1205 = vunpack.c.l.b16 %v964
        %v1206 = vunpack.c.h.b16 %v964
        %v1207 = vunpack.c.l.b16 %v965
        %v1208 = vunpack.c.l.b16 %v966
        %v1209 = vunpack.c.h.b16 %v966
        %v1210 = vunpack.c.l.b16 %v967
        %v1211 = vunpack.c.l.b16 %v968
        %v1212 = vunpack.c.h.b16 %v968
        %v1213 = vunpack.c.l.b16 %v969
        %v1214 = vunpack.c.l.b16 %v970
        %v1215 = vunpack.c.h.b16 %v970
        %v1216 = vunpack.c.l.b16 %v971
        %v1217 = vunpack.c.l.b16 %v972
        %v1218 = vunpack.c.h.b16 %v972
        %v1219 = vunpack.c.l.b16 %v973
        %v1220 = vunpack.c.l.b16 %v974
        %v1221 = vunpack.c.h.b16 %v974
        %v1222 = vunpack.c.l.b16 %v975
        %v1223 = vunpack.c.l.b16 %v976
        %v1224 = vunpack.c.h.b16 %v976
        %v1225 = vunpack.c.l.b16 %v977
        %v1226 = vunpack.c.l.b16 %v978
        %v1227 = vunpack.c.h.b16 %v978
        %v1228 = vunpack.c.l.b16 %v979
        %v1229 = vunpack.c.l.b16 %v980
        %v1230 = vunpack.c.h.b16 %v980
        %v1231 = vunpack.c.l.b16 %v981
        %v1232 = vunpack.c.l.b16 %v982
        %v1233 = vunpack.c.h.b16 %v982
        %v1234 = vunpack.c.l.b16 %v983
        %v1235 = vunpack.c.l.b16 %v984
        %v1236 = vunpack.c.h.b16 %v984
        %v1237 = vunpack.c.l.b16 %v985
        %v1238 = vunpack.c.l.b16 %v986
        %v1239 = vunpack.c.h.b16 %v986
        %v1240 = vunpack.c.l.b16 %v987
        %v1241 = vunpack.c.l.b16 %v988
        %v1242 = vunpack.c.h.b16 %v988
        %v1243 = vunpack.c.l.b16 %v989
        %v1244 = vunpack.c.l.b16 %v990
        %v1245 = vunpack.c.h.b16 %v990
        %v1246 = vunpack.c.l.b16 %v991
        %v1247 = vunpack.c.l.b16 %v992
        %v1248 = vunpack.c.h.b16 %v992
        %v1249 = vunpack.c.l.b16 %v993
        %v1250 = vpack.c.b16 %v1205, %v1202
        %v1251 = vpack.c.b16 %v1206, %v1203
        %v1252 = vpack.c.b16 %v1207, %v1204
        %v1253 = vpack.c.b16 %v1211, %v1208
        %v1254 = vpack.c.b16 %v1212, %v1209
        %v1255 = vpack.c.b16 %v1213, %v1210
        %v1256 = vpack.c.b16 %v1217, %v1214
        %v1257 = vpack.c.b16 %v1218, %v1215
        %v1258 = vpack.c.b16 %v1219, %v1216
        %v1259 = vpack.c.b16 %v1223, %v1220
        %v1260 = vpack.c.b16 %v1224, %v1221
        %v1261 = vpack.c.b16 %v1225, %v1222
        %v1262 = vpack.c.b16 %v1229, %v1226
        %v1263 = vpack.c.b16 %v1230, %v1227
        %v1264 = vpack.c.b16 %v1231, %v1228
        %v1265 = vpack.c.b16 %v1235, %v1232
        %v1266 = vpack.c.b16 %v1236, %v1233
        %v1267 = vpack.c.b16 %v1237, %v1234
        %v1268 = vpack.c.b16 %v1241, %v1238
        %v1269 = vpack.c.b16 %v1242, %v1239
        %v1270 = vpack.c.b16 %v1243, %v1240
        %v1271 = vpack.c.b16 %v1247, %v1244
        %v1272 = vpack.c.b16 %v1248, %v1245
        %v1273 = vpack.c.b16 %v1249, %v1246
        %1298 = vmatprep.subr.bf16.mxu0 %v1272
        %1299 = vmatpush1.bf16.msra.mxu0 %v1271
        %1300 = vmatprep.subr.bf16.mxu0 %v1269
        %1301 = vmatpush1.bf16.msra.mxu0 %v1268
        %1302 = vmatprep.subr.bf16.mxu0 %v1266
        %1303 = vmatpush1.bf16.msra.mxu0 %v1265
        %1304 = vmatprep.subr.bf16.mxu0 %v1263
        %1305 = vmatpush1.bf16.msra.mxu0 %v1262
        %1306 = vmatprep.subr.bf16.mxu0 %v1260
        %1307 = vmatpush1.bf16.msra.mxu0 %v1259
        %1308 = vmatprep.subr.bf16.mxu0 %v1257
        %1309 = vmatpush1.bf16.msra.mxu0 %v1256
        %1310 = vmatprep.subr.bf16.mxu0 %v1254
        %1311 = vmatpush1.bf16.msra.mxu0 %v1253
        %1312 = vmatprep.subr.bf16.mxu0 %v1251
        %1313 = vmatpush1.bf16.msra.mxu0 %v1250
        %1314 = vmatprep.subr.bf16.mxu0 0
        %1315 = vmatpush2.bf16.msra.mxu0 0
        %1316 = vmatprep.subr.bf16.mxu0 0
        %1317 = vmatpush2.bf16.msra.mxu0 0
        %1318 = vmatprep.subr.bf16.mxu0 0
        %1319 = vmatpush2.bf16.msra.mxu0 0
        %1320 = vmatprep.subr.bf16.mxu0 0
        %1321 = vmatpush2.bf16.msra.mxu0 0
        %1322 = vmatprep.subr.bf16.mxu0 0
        %1323 = vmatpush2.bf16.msra.mxu0 0
        %1324 = vmatprep.subr.bf16.mxu0 0
        %1325 = vmatpush2.bf16.msra.mxu0 0
        %1326 = vmatprep.subr.bf16.mxu0 0
        %1327 = vmatpush2.bf16.msra.mxu0 0
        %1328 = vmatprep.subr.bf16.mxu0 0
        %1329 = vmatpush2.bf16.msra.mxu0 0
        %1330 = vmatprep.mubr.bf16.mxu0 0
        %1331 = vmatmul.mubr.bf16.gmra.mxu0 %v1153
        %v1332 = vpop.f32.mrf.mxu0
        %v1333 = vadd.f32 %v1158, %v1332
        %v1334 = vpop.f32.mrf.mxu0
        %v1335 = vadd.f32 %v1162, %v1334
        %v1336 = vpop.f32.mrf.mxu0
        %v1337 = vadd.f32 %v1158, %v1336
        %v1338 = vpop.f32.mrf.mxu0
        %v1339 = vadd.f32 %v1162, %v1338
        %1340 = vdwg.mxu0
        %1341 = vmatprep.subr.bf16.mxu0 0
        %1342 = vmatpush1.bf16.msra.mxu0 %v1273
        %1343 = vmatprep.subr.bf16.mxu0 0
        %1344 = vmatpush1.bf16.msra.mxu0 %v1270
        %1345 = vmatprep.subr.bf16.mxu0 0
        %1346 = vmatpush1.bf16.msra.mxu0 %v1267
        %1347 = vmatprep.subr.bf16.mxu0 0
        %1348 = vmatpush1.bf16.msra.mxu0 %v1264
        %1349 = vmatprep.subr.bf16.mxu0 0
        %1350 = vmatpush1.bf16.msra.mxu0 %v1261
        %1351 = vmatprep.subr.bf16.mxu0 0
        %1352 = vmatpush1.bf16.msra.mxu0 %v1258
        %1353 = vmatprep.subr.bf16.mxu0 0
        %1354 = vmatpush1.bf16.msra.mxu0 %v1255
        %1355 = vmatprep.subr.bf16.mxu0 0
        %1356 = vmatpush1.bf16.msra.mxu0 %v1252
        %1357 = vmatprep.subr.bf16.mxu0 0
        %1358 = vmatpush2.bf16.msra.mxu0 0
        %1359 = vmatprep.subr.bf16.mxu0 0
        %1360 = vmatpush2.bf16.msra.mxu0 0
        %1361 = vmatprep.subr.bf16.mxu0 0
        %1362 = vmatpush2.bf16.msra.mxu0 0
        %1363 = vmatprep.subr.bf16.mxu0 0
        %1364 = vmatpush2.bf16.msra.mxu0 0
        %1365 = vmatprep.subr.bf16.mxu0 0
        %1366 = vmatpush2.bf16.msra.mxu0 0
        %1367 = vmatprep.subr.bf16.mxu0 0
        %1368 = vmatpush2.bf16.msra.mxu0 0
        %1369 = vmatprep.subr.bf16.mxu0 0
        %1370 = vmatpush2.bf16.msra.mxu0 0
        %1371 = vmatprep.subr.bf16.mxu0 0
        %1372 = vmatpush2.bf16.msra.mxu0 0
        %1373 = vmatprep.mubr.bf16.mxu0 0
        %1374 = vmatmul.mubr.bf16.gmra.mxu0 %v1153
        %v1375 = vpop.f32.mrf.mxu0
        %v1376 = vadd.f32 %v1166, %v1375
        %v1377 = vpop.f32.mrf.mxu0
        %v1378 = vpop.f32.mrf.mxu0
        %v1379 = vadd.f32 %v1166, %v1378
        %v1380 = vpop.f32.mrf.mxu0
        %1381 = vdwg.mxu0
        %v1382 = vpack.c.bf16 %v1337, %v1333
        %v1383 = vpack.c.bf16 %v1339, %v1335
        %vm1384 = vcmask 261120
        %v1386 = vsel %vm1384, %v1382, 0
        %v1389 = vsel %vm1384, %v1383, 0
        %1391 = vmatprep.subr.bf16.mxu0 0
        %1392 = vmatpush1.bf16.xpose.msra.mxu0 0
        %1393 = vmatprep.subr.bf16.mxu0 0
        %1394 = vmatpush1.bf16.xpose.msra.mxu0 0
        %1395 = vmatprep.subr.bf16.mxu0 0
        %1396 = vmatpush1.bf16.xpose.msra.mxu0 0
        %1397 = vmatprep.subr.bf16.mxu0 0
        %1398 = vmatpush1.bf16.xpose.msra.mxu0 0
        %1399 = vmatprep.subr.bf16.mxu0 0
        %1400 = vmatpush1.bf16.xpose.msra.mxu0 0
        %1401 = vmatprep.subr.bf16.mxu0 0
        %1402 = vmatpush1.bf16.xpose.msra.mxu0 0
        %1403 = vmatprep.subr.bf16.mxu0 0
        %1404 = vmatpush1.bf16.xpose.msra.mxu0 0
        %1405 = vmatprep.subr.bf16.mxu0 0
        %1406 = vmatpush1.bf16.xpose.msra.mxu0 %v1389
        %1407 = vmatprep.subr.bf16.mxu0 0
        %1408 = vmatpush2.bf16.xpose.msra.mxu0 0
        %1409 = vmatprep.subr.bf16.mxu0 0
        %1410 = vmatpush2.bf16.xpose.msra.mxu0 0
        %1411 = vmatprep.subr.bf16.mxu0 0
        %1412 = vmatpush2.bf16.xpose.msra.mxu0 0
        %1413 = vmatprep.subr.bf16.mxu0 0
        %1414 = vmatpush2.bf16.xpose.msra.mxu0 0
        %1415 = vmatprep.subr.bf16.mxu0 0
        %1416 = vmatpush2.bf16.xpose.msra.mxu0 0
        %1417 = vmatprep.subr.bf16.mxu0 0
        %1418 = vmatpush2.bf16.xpose.msra.mxu0 0
        %1419 = vmatprep.subr.bf16.mxu0 0
        %1420 = vmatpush2.bf16.xpose.msra.mxu0 0
        %1421 = vmatprep.subr.bf16.mxu0 0
        %1422 = vmatpush2.bf16.xpose.msra.mxu0 0
        %1423 = vmatprep.mubr.bf16.mxu0 0
        %1424 = vmatmul.mubr.bf16.gmra.mxu0 %v1386
        %v1425 = vpop.f32.mrf.mxu0
        %v1426 = vadd.f32 0.0, %v1425
        %v1427 = vpop.f32.mrf.mxu0
        %v1428 = vpop.f32.mrf.mxu0
        %v1429 = vadd.f32 0.0, %v1428
        %v1430 = vpop.f32.mrf.mxu0
        %1431 = vdwg.mxu0
        %v1432 = vmul.f32 %v1426, 0.17677669
        %v1433 = vmul.f32 %v1429, 0.17677669
        %v1434 = vsel %vm944, %v1432, -1e+30
        %v1435 = vsel %vm945, %v1433, -1e+30
        %vm1436 = vcmask 130048
        %v1437 = vsel %vm1436, %v1434, -inf
        %1438 = vmax.xlane.f32.xlu0 %v1437
        %v1439 = vpop.xlane.xlu0 %1438
        %v1440 = vsel %vm1436, %v1435, -inf
        %1441 = vmax.xlane.f32.xlu0 %v1440
        %v1442 = vpop.xlane.xlu0 %1441
        %v1443 = vsub.f32 %v1434, %v1439
        %v1444 = vsub.f32 %v1435, %v1442
        %v1445 = vmul.f32 %v1443, 1.442695
        %v1446 = vpow.pop %v1445
        %v1447 = vmul.f32 %v1444, 1.442695
        %v1448 = vpow.pop %v1447
        %v1449 = vsel %vm1436, %v1446, 0.0
        %1450 = vadd.xlane.f32.xlu0 %v1449
        %v1451 = vpop.xlane.xlu0 %1450
        %v1452 = vsel %vm1436, %v1448, 0.0
        %1453 = vadd.xlane.f32.xlu0 %v1452
        %v1454 = vpop.xlane.xlu0 %1453
        %v1455 = vrcp.pop %v1451
        %v1456 = vrcp.pop %v1454
        %v1457 = vmul.f32 %v1446, %v1455
        %v1458 = vmul.f32 %v1448, %v1456
        %v1459 = vpack.c.bf16 %v1458, %v1457
        %v1460 = vpack.c.bf16 %v1379, %v1376
        %v1462 = vsel %vm1436, %v1459, 0
        %1464 = vmatprep.subr.bf16.mxu0 0
        %1465 = vmatpush1.bf16.msra.mxu0 0
        %1466 = vmatprep.subr.bf16.mxu0 0
        %1467 = vmatpush1.bf16.msra.mxu0 0
        %1468 = vmatprep.subr.bf16.mxu0 0
        %1469 = vmatpush1.bf16.msra.mxu0 0
        %1470 = vmatprep.subr.bf16.mxu0 0
        %1471 = vmatpush1.bf16.msra.mxu0 0
        %1472 = vmatprep.subr.bf16.mxu0 0
        %1473 = vmatpush1.bf16.msra.mxu0 0
        %1474 = vmatprep.subr.bf16.mxu0 0
        %1475 = vmatpush1.bf16.msra.mxu0 0
        %1476 = vmatprep.subr.bf16.mxu0 0
        %1477 = vmatpush1.bf16.msra.mxu0 0
        %1478 = vmatprep.subr.bf16.mxu0 0
        %1479 = vmatpush1.bf16.msra.mxu0 %v1460
        %1480 = vmatprep.subr.bf16.mxu0 0
        %1481 = vmatpush2.bf16.msra.mxu0 0
        %1482 = vmatprep.subr.bf16.mxu0 0
        %1483 = vmatpush2.bf16.msra.mxu0 0
        %1484 = vmatprep.subr.bf16.mxu0 0
        %1485 = vmatpush2.bf16.msra.mxu0 0
        %1486 = vmatprep.subr.bf16.mxu0 0
        %1487 = vmatpush2.bf16.msra.mxu0 0
        %1488 = vmatprep.subr.bf16.mxu0 0
        %1489 = vmatpush2.bf16.msra.mxu0 0
        %1490 = vmatprep.subr.bf16.mxu0 0
        %1491 = vmatpush2.bf16.msra.mxu0 0
        %1492 = vmatprep.subr.bf16.mxu0 0
        %1493 = vmatpush2.bf16.msra.mxu0 0
        %1494 = vmatprep.subr.bf16.mxu0 0
        %1495 = vmatpush2.bf16.msra.mxu0 0
        %1496 = vmatprep.mubr.bf16.mxu0 0
        %1497 = vmatmul.mubr.bf16.gmra.mxu0 %v1462
        %v1498 = vpop.f32.mrf.mxu0
        %v1499 = vadd.f32 0.0, %v1498
        %v1500 = vpop.f32.mrf.mxu0
        %v1501 = vpop.f32.mrf.mxu0
        %v1502 = vadd.f32 0.0, %v1501
        %v1503 = vpop.f32.mrf.mxu0
        %1504 = vdwg.mxu0
        %1506 = vrot.lane.b32.xlu0 %v1382, 96
        %v1507 = vpop.permute.xlu0 %1506
        %1509 = vrot.lane.b32.xlu0 %v1383, 96
        %v1510 = vpop.permute.xlu0 %1509
        %v1512 = vsel %vm1384, %v1507, 0
        %v1515 = vsel %vm1384, %v1510, 0
        %1517 = vmatprep.subr.bf16.mxu0 0
        %1518 = vmatpush1.bf16.xpose.msra.mxu0 0
        %1519 = vmatprep.subr.bf16.mxu0 0
        %1520 = vmatpush1.bf16.xpose.msra.mxu0 0
        %1521 = vmatprep.subr.bf16.mxu0 0
        %1522 = vmatpush1.bf16.xpose.msra.mxu0 0
        %1523 = vmatprep.subr.bf16.mxu0 0
        %1524 = vmatpush1.bf16.xpose.msra.mxu0 0
        %1525 = vmatprep.subr.bf16.mxu0 0
        %1526 = vmatpush1.bf16.xpose.msra.mxu0 0
        %1527 = vmatprep.subr.bf16.mxu0 0
        %1528 = vmatpush1.bf16.xpose.msra.mxu0 0
        %1529 = vmatprep.subr.bf16.mxu0 0
        %1530 = vmatpush1.bf16.xpose.msra.mxu0 0
        %1531 = vmatprep.subr.bf16.mxu0 0
        %1532 = vmatpush1.bf16.xpose.msra.mxu0 %v1515
        %1533 = vmatprep.subr.bf16.mxu0 0
        %1534 = vmatpush2.bf16.xpose.msra.mxu0 0
        %1535 = vmatprep.subr.bf16.mxu0 0
        %1536 = vmatpush2.bf16.xpose.msra.mxu0 0
        %1537 = vmatprep.subr.bf16.mxu0 0
        %1538 = vmatpush2.bf16.xpose.msra.mxu0 0
        %1539 = vmatprep.subr.bf16.mxu0 0
        %1540 = vmatpush2.bf16.xpose.msra.mxu0 0
        %1541 = vmatprep.subr.bf16.mxu0 0
        %1542 = vmatpush2.bf16.xpose.msra.mxu0 0
        %1543 = vmatprep.subr.bf16.mxu0 0
        %1544 = vmatpush2.bf16.xpose.msra.mxu0 0
        %1545 = vmatprep.subr.bf16.mxu0 0
        %1546 = vmatpush2.bf16.xpose.msra.mxu0 0
        %1547 = vmatprep.subr.bf16.mxu0 0
        %1548 = vmatpush2.bf16.xpose.msra.mxu0 0
        %1549 = vmatprep.mubr.bf16.mxu0 0
        %1550 = vmatmul.mubr.bf16.gmra.mxu0 %v1512
        %v1551 = vpop.f32.mrf.mxu0
        %v1552 = vadd.f32 0.0, %v1551
        %v1553 = vpop.f32.mrf.mxu0
        %v1554 = vpop.f32.mrf.mxu0
        %v1555 = vadd.f32 0.0, %v1554
        %v1556 = vpop.f32.mrf.mxu0
        %1557 = vdwg.mxu0
        %v1558 = vmul.f32 %v1552, 0.17677669
        %v1559 = vmul.f32 %v1555, 0.17677669
        %v1560 = vsel %vm944, %v1558, -1e+30
        %v1561 = vsel %vm945, %v1559, -1e+30
        %v1562 = vsel %vm1436, %v1560, -inf
        %1563 = vmax.xlane.f32.xlu0 %v1562
        %v1564 = vpop.xlane.xlu0 %1563
        %v1565 = vsel %vm1436, %v1561, -inf
        %1566 = vmax.xlane.f32.xlu0 %v1565
        %v1567 = vpop.xlane.xlu0 %1566
        %v1568 = vsub.f32 %v1560, %v1564
        %v1569 = vsub.f32 %v1561, %v1567
        %v1570 = vmul.f32 %v1568, 1.442695
        %v1571 = vpow.pop %v1570
        %v1572 = vmul.f32 %v1569, 1.442695
        %v1573 = vpow.pop %v1572
        %v1574 = vsel %vm1436, %v1571, 0.0
        %1575 = vadd.xlane.f32.xlu0 %v1574
        %v1576 = vpop.xlane.xlu0 %1575
        %v1577 = vsel %vm1436, %v1573, 0.0
        %1578 = vadd.xlane.f32.xlu0 %v1577
        %v1579 = vpop.xlane.xlu0 %1578
        %v1580 = vrcp.pop %v1576
        %v1581 = vrcp.pop %v1579
        %v1582 = vmul.f32 %v1571, %v1580
        %v1583 = vmul.f32 %v1573, %v1581
        %v1584 = vpack.c.bf16 %v1583, %v1582
        %1586 = vrot.lane.b32.xlu0 %v1460, 96
        %v1587 = vpop.permute.xlu0 %1586
        %v1590 = vsel %vm1436, %v1584, 0
        %1592 = vmatprep.subr.bf16.mxu0 0
        %1593 = vmatpush1.bf16.msra.mxu0 0
        %1594 = vmatprep.subr.bf16.mxu0 0
        %1595 = vmatpush1.bf16.msra.mxu0 0
        %1596 = vmatprep.subr.bf16.mxu0 0
        %1597 = vmatpush1.bf16.msra.mxu0 0
        %1598 = vmatprep.subr.bf16.mxu0 0
        %1599 = vmatpush1.bf16.msra.mxu0 0
        %1600 = vmatprep.subr.bf16.mxu0 0
        %1601 = vmatpush1.bf16.msra.mxu0 0
        %1602 = vmatprep.subr.bf16.mxu0 0
        %1603 = vmatpush1.bf16.msra.mxu0 0
        %1604 = vmatprep.subr.bf16.mxu0 0
        %1605 = vmatpush1.bf16.msra.mxu0 0
        %1606 = vmatprep.subr.bf16.mxu0 0
        %1607 = vmatpush1.bf16.msra.mxu0 %v1587
        %1608 = vmatprep.subr.bf16.mxu0 0
        %1609 = vmatpush2.bf16.msra.mxu0 0
        %1610 = vmatprep.subr.bf16.mxu0 0
        %1611 = vmatpush2.bf16.msra.mxu0 0
        %1612 = vmatprep.subr.bf16.mxu0 0
        %1613 = vmatpush2.bf16.msra.mxu0 0
        %1614 = vmatprep.subr.bf16.mxu0 0
        %1615 = vmatpush2.bf16.msra.mxu0 0
        %1616 = vmatprep.subr.bf16.mxu0 0
        %1617 = vmatpush2.bf16.msra.mxu0 0
        %1618 = vmatprep.subr.bf16.mxu0 0
        %1619 = vmatpush2.bf16.msra.mxu0 0
        %1620 = vmatprep.subr.bf16.mxu0 0
        %1621 = vmatpush2.bf16.msra.mxu0 0
        %1622 = vmatprep.subr.bf16.mxu0 0
        %1623 = vmatpush2.bf16.msra.mxu0 0
        %1624 = vmatprep.mubr.bf16.mxu0 0
        %1625 = vmatmul.mubr.bf16.gmra.mxu0 %v1590
        %v1626 = vpop.f32.mrf.mxu0
        %v1627 = vadd.f32 0.0, %v1626
        %v1628 = vpop.f32.mrf.mxu0
        %v1629 = vpop.f32.mrf.mxu0
        %v1630 = vadd.f32 0.0, %v1629
        %v1631 = vpop.f32.mrf.mxu0
        %1632 = vdwg.mxu0
        %1633 = vrot.lane.b32.xlu0 %v1382, 64
        %v1634 = vpop.permute.xlu0 %1633
        %1635 = vrot.lane.b32.xlu0 %v1383, 64
        %v1636 = vpop.permute.xlu0 %1635
        %v1638 = vsel %vm1384, %v1634, 0
        %v1641 = vsel %vm1384, %v1636, 0
        %1643 = vmatprep.subr.bf16.mxu0 0
        %1644 = vmatpush1.bf16.xpose.msra.mxu0 0
        %1645 = vmatprep.subr.bf16.mxu0 0
        %1646 = vmatpush1.bf16.xpose.msra.mxu0 0
        %1647 = vmatprep.subr.bf16.mxu0 0
        %1648 = vmatpush1.bf16.xpose.msra.mxu0 0
        %1649 = vmatprep.subr.bf16.mxu0 0
        %1650 = vmatpush1.bf16.xpose.msra.mxu0 0
        %1651 = vmatprep.subr.bf16.mxu0 0
        %1652 = vmatpush1.bf16.xpose.msra.mxu0 0
        %1653 = vmatprep.subr.bf16.mxu0 0
        %1654 = vmatpush1.bf16.xpose.msra.mxu0 0
        %1655 = vmatprep.subr.bf16.mxu0 0
        %1656 = vmatpush1.bf16.xpose.msra.mxu0 0
        %1657 = vmatprep.subr.bf16.mxu0 0
        %1658 = vmatpush1.bf16.xpose.msra.mxu0 %v1641
        %1659 = vmatprep.subr.bf16.mxu0 0
        %1660 = vmatpush2.bf16.xpose.msra.mxu0 0
        %1661 = vmatprep.subr.bf16.mxu0 0
        %1662 = vmatpush2.bf16.xpose.msra.mxu0 0
        %1663 = vmatprep.subr.bf16.mxu0 0
        %1664 = vmatpush2.bf16.xpose.msra.mxu0 0
        %1665 = vmatprep.subr.bf16.mxu0 0
        %1666 = vmatpush2.bf16.xpose.msra.mxu0 0
        %1667 = vmatprep.subr.bf16.mxu0 0
        %1668 = vmatpush2.bf16.xpose.msra.mxu0 0
        %1669 = vmatprep.subr.bf16.mxu0 0
        %1670 = vmatpush2.bf16.xpose.msra.mxu0 0
        %1671 = vmatprep.subr.bf16.mxu0 0
        %1672 = vmatpush2.bf16.xpose.msra.mxu0 0
        %1673 = vmatprep.subr.bf16.mxu0 0
        %1674 = vmatpush2.bf16.xpose.msra.mxu0 0
        %1675 = vmatprep.mubr.bf16.mxu0 0
        %1676 = vmatmul.mubr.bf16.gmra.mxu0 %v1638
        %v1677 = vpop.f32.mrf.mxu0
        %v1678 = vadd.f32 0.0, %v1677
        %v1679 = vpop.f32.mrf.mxu0
        %v1680 = vpop.f32.mrf.mxu0
        %v1681 = vadd.f32 0.0, %v1680
        %v1682 = vpop.f32.mrf.mxu0
        %1683 = vdwg.mxu0
        %v1684 = vmul.f32 %v1678, 0.17677669
        %v1685 = vmul.f32 %v1681, 0.17677669
        %v1686 = vsel %vm944, %v1684, -1e+30
        %v1687 = vsel %vm945, %v1685, -1e+30
        %v1688 = vsel %vm1436, %v1686, -inf
        %1689 = vmax.xlane.f32.xlu0 %v1688
        %v1690 = vpop.xlane.xlu0 %1689
        %v1691 = vsel %vm1436, %v1687, -inf
        %1692 = vmax.xlane.f32.xlu0 %v1691
        %v1693 = vpop.xlane.xlu0 %1692
        %v1694 = vsub.f32 %v1686, %v1690
        %v1695 = vsub.f32 %v1687, %v1693
        %v1696 = vmul.f32 %v1694, 1.442695
        %v1697 = vpow.pop %v1696
        %v1698 = vmul.f32 %v1695, 1.442695
        %v1699 = vpow.pop %v1698
        %v1700 = vsel %vm1436, %v1697, 0.0
        %1701 = vadd.xlane.f32.xlu0 %v1700
        %v1702 = vpop.xlane.xlu0 %1701
        %v1703 = vsel %vm1436, %v1699, 0.0
        %1704 = vadd.xlane.f32.xlu0 %v1703
        %v1705 = vpop.xlane.xlu0 %1704
        %v1706 = vrcp.pop %v1702
        %v1707 = vrcp.pop %v1705
        %v1708 = vmul.f32 %v1697, %v1706
        %v1709 = vmul.f32 %v1699, %v1707
        %v1710 = vpack.c.bf16 %v1709, %v1708
        %1711 = vrot.lane.b32.xlu0 %v1460, 64
        %v1712 = vpop.permute.xlu0 %1711
        %v1715 = vsel %vm1436, %v1710, 0
        %1717 = vmatprep.subr.bf16.mxu0 0
        %1718 = vmatpush1.bf16.msra.mxu0 0
        %1719 = vmatprep.subr.bf16.mxu0 0
        %1720 = vmatpush1.bf16.msra.mxu0 0
        %1721 = vmatprep.subr.bf16.mxu0 0
        %1722 = vmatpush1.bf16.msra.mxu0 0
        %1723 = vmatprep.subr.bf16.mxu0 0
        %1724 = vmatpush1.bf16.msra.mxu0 0
        %1725 = vmatprep.subr.bf16.mxu0 0
        %1726 = vmatpush1.bf16.msra.mxu0 0
        %1727 = vmatprep.subr.bf16.mxu0 0
        %1728 = vmatpush1.bf16.msra.mxu0 0
        %1729 = vmatprep.subr.bf16.mxu0 0
        %1730 = vmatpush1.bf16.msra.mxu0 0
        %1731 = vmatprep.subr.bf16.mxu0 0
        %1732 = vmatpush1.bf16.msra.mxu0 %v1712
        %1733 = vmatprep.subr.bf16.mxu0 0
        %1734 = vmatpush2.bf16.msra.mxu0 0
        %1735 = vmatprep.subr.bf16.mxu0 0
        %1736 = vmatpush2.bf16.msra.mxu0 0
        %1737 = vmatprep.subr.bf16.mxu0 0
        %1738 = vmatpush2.bf16.msra.mxu0 0
        %1739 = vmatprep.subr.bf16.mxu0 0
        %1740 = vmatpush2.bf16.msra.mxu0 0
        %1741 = vmatprep.subr.bf16.mxu0 0
        %1742 = vmatpush2.bf16.msra.mxu0 0
        %1743 = vmatprep.subr.bf16.mxu0 0
        %1744 = vmatpush2.bf16.msra.mxu0 0
        %1745 = vmatprep.subr.bf16.mxu0 0
        %1746 = vmatpush2.bf16.msra.mxu0 0
        %1747 = vmatprep.subr.bf16.mxu0 0
        %1748 = vmatpush2.bf16.msra.mxu0 0
        %1749 = vmatprep.mubr.bf16.mxu0 0
        %1750 = vmatmul.mubr.bf16.gmra.mxu0 %v1715
        %v1751 = vpop.f32.mrf.mxu0
        %v1752 = vadd.f32 0.0, %v1751
        %v1753 = vpop.f32.mrf.mxu0
        %v1754 = vpop.f32.mrf.mxu0
        %v1755 = vadd.f32 0.0, %v1754
        %v1756 = vpop.f32.mrf.mxu0
        %1757 = vdwg.mxu0
        %1758 = vrot.lane.b32.xlu0 %v1382, 32
        %v1759 = vpop.permute.xlu0 %1758
        %1760 = vrot.lane.b32.xlu0 %v1383, 32
        %v1761 = vpop.permute.xlu0 %1760
        %v1763 = vsel %vm1384, %v1759, 0
        %v1766 = vsel %vm1384, %v1761, 0
        %1768 = vmatprep.subr.bf16.mxu0 0
        %1769 = vmatpush1.bf16.xpose.msra.mxu0 0
        %1770 = vmatprep.subr.bf16.mxu0 0
        %1771 = vmatpush1.bf16.xpose.msra.mxu0 0
        %1772 = vmatprep.subr.bf16.mxu0 0
        %1773 = vmatpush1.bf16.xpose.msra.mxu0 0
        %1774 = vmatprep.subr.bf16.mxu0 0
        %1775 = vmatpush1.bf16.xpose.msra.mxu0 0
        %1776 = vmatprep.subr.bf16.mxu0 0
        %1777 = vmatpush1.bf16.xpose.msra.mxu0 0
        %1778 = vmatprep.subr.bf16.mxu0 0
        %1779 = vmatpush1.bf16.xpose.msra.mxu0 0
        %1780 = vmatprep.subr.bf16.mxu0 0
        %1781 = vmatpush1.bf16.xpose.msra.mxu0 0
        %1782 = vmatprep.subr.bf16.mxu0 0
        %1783 = vmatpush1.bf16.xpose.msra.mxu0 %v1766
        %1784 = vmatprep.subr.bf16.mxu0 0
        %1785 = vmatpush2.bf16.xpose.msra.mxu0 0
        %1786 = vmatprep.subr.bf16.mxu0 0
        %1787 = vmatpush2.bf16.xpose.msra.mxu0 0
        %1788 = vmatprep.subr.bf16.mxu0 0
        %1789 = vmatpush2.bf16.xpose.msra.mxu0 0
        %1790 = vmatprep.subr.bf16.mxu0 0
        %1791 = vmatpush2.bf16.xpose.msra.mxu0 0
        %1792 = vmatprep.subr.bf16.mxu0 0
        %1793 = vmatpush2.bf16.xpose.msra.mxu0 0
        %1794 = vmatprep.subr.bf16.mxu0 0
        %1795 = vmatpush2.bf16.xpose.msra.mxu0 0
        %1796 = vmatprep.subr.bf16.mxu0 0
        %1797 = vmatpush2.bf16.xpose.msra.mxu0 0
        %1798 = vmatprep.subr.bf16.mxu0 0
        %1799 = vmatpush2.bf16.xpose.msra.mxu0 0
        %1800 = vmatprep.mubr.bf16.mxu0 0
        %1801 = vmatmul.mubr.bf16.gmra.mxu0 %v1763
        %v1802 = vpop.f32.mrf.mxu0
        %v1803 = vadd.f32 0.0, %v1802
        %v1804 = vpop.f32.mrf.mxu0
        %v1805 = vpop.f32.mrf.mxu0
        %v1806 = vadd.f32 0.0, %v1805
        %v1807 = vpop.f32.mrf.mxu0
        %1808 = vdwg.mxu0
        %v1809 = vmul.f32 %v1803, 0.17677669
        %v1810 = vmul.f32 %v1806, 0.17677669
        %v1811 = vsel %vm944, %v1809, -1e+30
        %v1812 = vsel %vm945, %v1810, -1e+30
        %v1813 = vsel %vm1436, %v1811, -inf
        %1814 = vmax.xlane.f32.xlu0 %v1813
        %v1815 = vpop.xlane.xlu0 %1814
        %v1816 = vsel %vm1436, %v1812, -inf
        %1817 = vmax.xlane.f32.xlu0 %v1816
        %v1818 = vpop.xlane.xlu0 %1817
        %v1819 = vsub.f32 %v1811, %v1815
        %v1820 = vsub.f32 %v1812, %v1818
        %v1821 = vmul.f32 %v1819, 1.442695
        %v1822 = vpow.pop %v1821
        %v1823 = vmul.f32 %v1820, 1.442695
        %v1824 = vpow.pop %v1823
        %v1825 = vsel %vm1436, %v1822, 0.0
        %1826 = vadd.xlane.f32.xlu0 %v1825
        %v1827 = vpop.xlane.xlu0 %1826
        %v1828 = vsel %vm1436, %v1824, 0.0
        %1829 = vadd.xlane.f32.xlu0 %v1828
        %v1830 = vpop.xlane.xlu0 %1829
        %v1831 = vrcp.pop %v1827
        %v1832 = vrcp.pop %v1830
        %v1833 = vmul.f32 %v1822, %v1831
        %v1834 = vmul.f32 %v1824, %v1832
        %v1835 = vpack.c.bf16 %v1834, %v1833
        %1836 = vrot.lane.b32.xlu0 %v1460, 32
        %v1837 = vpop.permute.xlu0 %1836
        %v1840 = vsel %vm1436, %v1835, 0
        %1842 = vmatprep.subr.bf16.mxu0 0
        %1843 = vmatpush1.bf16.msra.mxu0 0
        %1844 = vmatprep.subr.bf16.mxu0 0
        %1845 = vmatpush1.bf16.msra.mxu0 0
        %1846 = vmatprep.subr.bf16.mxu0 0
        %1847 = vmatpush1.bf16.msra.mxu0 0
        %1848 = vmatprep.subr.bf16.mxu0 0
        %1849 = vmatpush1.bf16.msra.mxu0 0
        %1850 = vmatprep.subr.bf16.mxu0 0
        %1851 = vmatpush1.bf16.msra.mxu0 0
        %1852 = vmatprep.subr.bf16.mxu0 0
        %1853 = vmatpush1.bf16.msra.mxu0 0
        %1854 = vmatprep.subr.bf16.mxu0 0
        %1855 = vmatpush1.bf16.msra.mxu0 0
        %1856 = vmatprep.subr.bf16.mxu0 0
        %1857 = vmatpush1.bf16.msra.mxu0 %v1837
        %1858 = vmatprep.subr.bf16.mxu0 0
        %1859 = vmatpush2.bf16.msra.mxu0 0
        %1860 = vmatprep.subr.bf16.mxu0 0
        %1861 = vmatpush2.bf16.msra.mxu0 0
        %1862 = vmatprep.subr.bf16.mxu0 0
        %1863 = vmatpush2.bf16.msra.mxu0 0
        %1864 = vmatprep.subr.bf16.mxu0 0
        %1865 = vmatpush2.bf16.msra.mxu0 0
        %1866 = vmatprep.subr.bf16.mxu0 0
        %1867 = vmatpush2.bf16.msra.mxu0 0
        %1868 = vmatprep.subr.bf16.mxu0 0
        %1869 = vmatpush2.bf16.msra.mxu0 0
        %1870 = vmatprep.subr.bf16.mxu0 0
        %1871 = vmatpush2.bf16.msra.mxu0 0
        %1872 = vmatprep.subr.bf16.mxu0 0
        %1873 = vmatpush2.bf16.msra.mxu0 0
        %1874 = vmatprep.mubr.bf16.mxu0 0
        %1875 = vmatmul.mubr.bf16.gmra.mxu0 %v1840
        %v1876 = vpop.f32.mrf.mxu0
        %v1877 = vadd.f32 0.0, %v1876
        %v1878 = vpop.f32.mrf.mxu0
        %v1879 = vpop.f32.mrf.mxu0
        %v1880 = vadd.f32 0.0, %v1879
        %v1881 = vpop.f32.mrf.mxu0
        %1882 = vdwg.mxu0
        %1885 = vrot.lane.b32.xlu0 %v1627, 32
        %v1886 = vpop.permute.xlu0 %1885
        %1887 = vrot.lane.b32.xlu0 %v1630, 32
        %v1888 = vpop.permute.xlu0 %1887
        %1893 = vrot.lane.b32.xlu0 %v1752, 64
        %v1894 = vpop.permute.xlu0 %1893
        %1895 = vrot.lane.b32.xlu0 %v1755, 64
        %v1896 = vpop.permute.xlu0 %1895
        %1901 = vrot.lane.b32.xlu0 %v1877, 96
        %v1902 = vpop.permute.xlu0 %1901
        %1903 = vrot.lane.b32.xlu0 %v1880, 96
        %v1904 = vpop.permute.xlu0 %1903
        %v1907 = vsel %vm1384, %v1499, %v1886
        %v1908 = vsel %vm1384, %v1502, %v1888
        %vm1909 = vcmask 523264
        %v1910 = vsel %vm1909, %v1907, %v1894
        %v1911 = vsel %vm1909, %v1908, %v1896
        %vm1912 = vcmask 785408
        %v1913 = vsel %vm1912, %v1910, %v1902
        %v1914 = vsel %vm1912, %v1911, %v1904
        %v1915 = vpack.c.bf16 %v1914, %v1913
        %v1932 = vunpack.c.l.b16 %v995
        %v1933 = vunpack.c.l.b16 %v996
        %v1934 = vunpack.c.l.b16 %v997
        %v1935 = vunpack.c.l.b16 %v998
        %v1936 = vunpack.c.l.b16 %v999
        %v1937 = vunpack.c.l.b16 %v1000
        %v1938 = vunpack.c.l.b16 %v1001
        %v1939 = vunpack.c.l.b16 %v1002
        %v1940 = vunpack.c.l.b16 %v1003
        %v1941 = vunpack.c.l.b16 %v1004
        %v1942 = vunpack.c.l.b16 %v1005
        %v1943 = vunpack.c.l.b16 %v1006
        %v1944 = vunpack.c.l.b16 %v1007
        %v1945 = vunpack.c.l.b16 %v1008
        %v1946 = vunpack.c.l.b16 %v1009
        %v1947 = vunpack.c.l.b16 %v1010
        %v1948 = vpack.c.b16 %v1933, %v1932
        %v1949 = vpack.c.b16 %v1935, %v1934
        %v1950 = vpack.c.b16 %v1937, %v1936
        %v1951 = vpack.c.b16 %v1939, %v1938
        %v1952 = vpack.c.b16 %v1941, %v1940
        %v1953 = vpack.c.b16 %v1943, %v1942
        %v1954 = vpack.c.b16 %v1945, %v1944
        %v1955 = vpack.c.b16 %v1947, %v1946
        %1964 = vmatprep.subr.bf16.mxu0 0
        %1965 = vmatpush1.bf16.msra.mxu0 %v1955
        %1966 = vmatprep.subr.bf16.mxu0 0
        %1967 = vmatpush1.bf16.msra.mxu0 %v1954
        %1968 = vmatprep.subr.bf16.mxu0 0
        %1969 = vmatpush1.bf16.msra.mxu0 %v1953
        %1970 = vmatprep.subr.bf16.mxu0 0
        %1971 = vmatpush1.bf16.msra.mxu0 %v1952
        %1972 = vmatprep.subr.bf16.mxu0 0
        %1973 = vmatpush1.bf16.msra.mxu0 %v1951
        %1974 = vmatprep.subr.bf16.mxu0 0
        %1975 = vmatpush1.bf16.msra.mxu0 %v1950
        %1976 = vmatprep.subr.bf16.mxu0 0
        %1977 = vmatpush1.bf16.msra.mxu0 %v1949
        %1978 = vmatprep.subr.bf16.mxu0 0
        %1979 = vmatpush1.bf16.msra.mxu0 %v1948
        %1980 = vmatprep.subr.bf16.mxu0 0
        %1981 = vmatpush2.bf16.msra.mxu0 0
        %1982 = vmatprep.subr.bf16.mxu0 0
        %1983 = vmatpush2.bf16.msra.mxu0 0
        %1984 = vmatprep.subr.bf16.mxu0 0
        %1985 = vmatpush2.bf16.msra.mxu0 0
        %1986 = vmatprep.subr.bf16.mxu0 0
        %1987 = vmatpush2.bf16.msra.mxu0 0
        %1988 = vmatprep.subr.bf16.mxu0 0
        %1989 = vmatpush2.bf16.msra.mxu0 0
        %1990 = vmatprep.subr.bf16.mxu0 0
        %1991 = vmatpush2.bf16.msra.mxu0 0
        %1992 = vmatprep.subr.bf16.mxu0 0
        %1993 = vmatpush2.bf16.msra.mxu0 0
        %1994 = vmatprep.subr.bf16.mxu0 0
        %1995 = vmatpush2.bf16.msra.mxu0 0
        %1996 = vmatprep.mubr.bf16.mxu0 0
        %1997 = vmatmul.mubr.bf16.gmra.mxu0 %v1915
        %v1998 = vpop.f32.mrf.mxu0
        %v1999 = vadd.f32 0.0, %v1998
        %v2000 = vpop.f32.mrf.mxu0
        %v2001 = vpop.f32.mrf.mxu0
        %v2002 = vadd.f32 0.0, %v2001
        %v2003 = vpop.f32.mrf.mxu0
        %2004 = vdwg.mxu0
        %v2005 = vadd.f32 %v1112, %v1999
        %v2006 = vadd.f32 %v1113, %v2002
        %v2008 = vlaneseq
        %v2009 = vshrl.u32 %v2008, 7
        %v2010 = vsub.s32 0, %v2009
        %v2011 = vrot.slane %v1011, %v2010
        %v2013 = vadd.f32 %v2005, %v2011
        %v2014 = vadd.f32 %v2006, %v2011
        %2015 = vadd.xlane.f32.xlu0 %v2013
        %v2016 = vpop.xlane.xlu0 %2015
        %2017 = vadd.xlane.f32.xlu0 %v2014
        %v2018 = vpop.xlane.xlu0 %2017
        %v2019 = vmul.f32 %v2016, %v1118
        %v2020 = vmul.f32 %v2018, %v1118
        %v2021 = vsub.f32 %v2013, %v2019
        %v2022 = vsub.f32 %v2014, %v2020
        %v2023 = vmul.f32 %v2021, %v2021
        %v2024 = vmul.f32 %v2022, %v2022
        %2025 = vadd.xlane.f32.xlu0 %v2023
        %v2026 = vpop.xlane.xlu0 %2025
        %2027 = vadd.xlane.f32.xlu0 %v2024
        %v2028 = vpop.xlane.xlu0 %2027
        %v2029 = vmul.f32 %v2026, %v1118
        %v2030 = vmul.f32 %v2028, %v1118
        %v2031 = vadd.f32 %v2029, 1e-05
        %v2032 = vadd.f32 %v2030, 1e-05
        %v2033 = vrsqrt.pop %v2031
        %v2034 = vrsqrt.pop %v2032
        %v2035 = vmul.f32 %v2021, %v2033
        %v2036 = vmul.f32 %v2022, %v2034
        %v2038 = vlaneseq
        %v2039 = vshrl.u32 %v2038, 7
        %v2040 = vsub.s32 0, %v2039
        %v2041 = vrot.slane %v1012, %v2040
        %v2043 = vmul.f32 %v2035, %v2041
        %v2044 = vmul.f32 %v2036, %v2041
        %v2046 = vlaneseq
        %v2047 = vshrl.u32 %v2046, 7
        %v2048 = vsub.s32 0, %v2047
        %v2049 = vrot.slane %v1013, %v2048
        %v2051 = vadd.f32 %v2043, %v2049
        %v2052 = vadd.f32 %v2044, %v2049
        %v2053 = vpack.c.bf16 %v2052, %v2051
        %v2055 = vlaneseq
        %v2056 = vshrl.u32 %v2055, 7
        %v2057 = vsub.s32 0, %v2056
        %v2058 = vrot.slane %v1046, %v2057
        %v2059 = vlaneseq
        %v2060 = vshrl.u32 %v2059, 7
        %v2061 = vsub.s32 1, %v2060
        %v2062 = vrot.slane %v1046, %v2061
        %v2063 = vlaneseq
        %v2064 = vshrl.u32 %v2063, 7
        %v2065 = vsub.s32 2, %v2064
        %v2066 = vrot.slane %v1046, %v2065
        %v2067 = vlaneseq
        %v2068 = vshrl.u32 %v2067, 7
        %v2069 = vsub.s32 3, %v2068
        %v2070 = vrot.slane %v1046, %v2069
        %v2107 = vunpack.c.l.b16 %v1014
        %v2108 = vunpack.c.h.b16 %v1014
        %v2109 = vunpack.c.l.b16 %v1015
        %v2110 = vunpack.c.h.b16 %v1015
        %v2111 = vunpack.c.l.b16 %v1016
        %v2112 = vunpack.c.h.b16 %v1016
        %v2113 = vunpack.c.l.b16 %v1017
        %v2114 = vunpack.c.h.b16 %v1017
        %v2115 = vunpack.c.l.b16 %v1018
        %v2116 = vunpack.c.h.b16 %v1018
        %v2117 = vunpack.c.l.b16 %v1019
        %v2118 = vunpack.c.h.b16 %v1019
        %v2119 = vunpack.c.l.b16 %v1020
        %v2120 = vunpack.c.h.b16 %v1020
        %v2121 = vunpack.c.l.b16 %v1021
        %v2122 = vunpack.c.h.b16 %v1021
        %v2123 = vunpack.c.l.b16 %v1022
        %v2124 = vunpack.c.h.b16 %v1022
        %v2125 = vunpack.c.l.b16 %v1023
        %v2126 = vunpack.c.h.b16 %v1023
        %v2127 = vunpack.c.l.b16 %v1024
        %v2128 = vunpack.c.h.b16 %v1024
        %v2129 = vunpack.c.l.b16 %v1025
        %v2130 = vunpack.c.h.b16 %v1025
        %v2131 = vunpack.c.l.b16 %v1026
        %v2132 = vunpack.c.h.b16 %v1026
        %v2133 = vunpack.c.l.b16 %v1027
        %v2134 = vunpack.c.h.b16 %v1027
        %v2135 = vunpack.c.l.b16 %v1028
        %v2136 = vunpack.c.h.b16 %v1028
        %v2137 = vunpack.c.l.b16 %v1029
        %v2138 = vunpack.c.h.b16 %v1029
        %v2139 = vunpack.c.l.b16 %v1030
        %v2140 = vunpack.c.h.b16 %v1030
        %v2141 = vunpack.c.l.b16 %v1031
        %v2142 = vunpack.c.h.b16 %v1031
        %v2143 = vunpack.c.l.b16 %v1032
        %v2144 = vunpack.c.h.b16 %v1032
        %v2145 = vunpack.c.l.b16 %v1033
        %v2146 = vunpack.c.h.b16 %v1033
        %v2147 = vunpack.c.l.b16 %v1034
        %v2148 = vunpack.c.h.b16 %v1034
        %v2149 = vunpack.c.l.b16 %v1035
        %v2150 = vunpack.c.h.b16 %v1035
        %v2151 = vunpack.c.l.b16 %v1036
        %v2152 = vunpack.c.h.b16 %v1036
        %v2153 = vunpack.c.l.b16 %v1037
        %v2154 = vunpack.c.h.b16 %v1037
        %v2155 = vunpack.c.l.b16 %v1038
        %v2156 = vunpack.c.h.b16 %v1038
        %v2157 = vunpack.c.l.b16 %v1039
        %v2158 = vunpack.c.h.b16 %v1039
        %v2159 = vunpack.c.l.b16 %v1040
        %v2160 = vunpack.c.h.b16 %v1040
        %v2161 = vunpack.c.l.b16 %v1041
        %v2162 = vunpack.c.h.b16 %v1041
        %v2163 = vunpack.c.l.b16 %v1042
        %v2164 = vunpack.c.h.b16 %v1042
        %v2165 = vunpack.c.l.b16 %v1043
        %v2166 = vunpack.c.h.b16 %v1043
        %v2167 = vunpack.c.l.b16 %v1044
        %v2168 = vunpack.c.h.b16 %v1044
        %v2169 = vunpack.c.l.b16 %v1045
        %v2170 = vunpack.c.h.b16 %v1045
        %v2171 = vpack.c.b16 %v2111, %v2107
        %v2172 = vpack.c.b16 %v2112, %v2108
        %v2173 = vpack.c.b16 %v2113, %v2109
        %v2174 = vpack.c.b16 %v2114, %v2110
        %v2175 = vpack.c.b16 %v2119, %v2115
        %v2176 = vpack.c.b16 %v2120, %v2116
        %v2177 = vpack.c.b16 %v2121, %v2117
        %v2178 = vpack.c.b16 %v2122, %v2118
        %v2179 = vpack.c.b16 %v2127, %v2123
        %v2180 = vpack.c.b16 %v2128, %v2124
        %v2181 = vpack.c.b16 %v2129, %v2125
        %v2182 = vpack.c.b16 %v2130, %v2126
        %v2183 = vpack.c.b16 %v2135, %v2131
        %v2184 = vpack.c.b16 %v2136, %v2132
        %v2185 = vpack.c.b16 %v2137, %v2133
        %v2186 = vpack.c.b16 %v2138, %v2134
        %v2187 = vpack.c.b16 %v2143, %v2139
        %v2188 = vpack.c.b16 %v2144, %v2140
        %v2189 = vpack.c.b16 %v2145, %v2141
        %v2190 = vpack.c.b16 %v2146, %v2142
        %v2191 = vpack.c.b16 %v2151, %v2147
        %v2192 = vpack.c.b16 %v2152, %v2148
        %v2193 = vpack.c.b16 %v2153, %v2149
        %v2194 = vpack.c.b16 %v2154, %v2150
        %v2195 = vpack.c.b16 %v2159, %v2155
        %v2196 = vpack.c.b16 %v2160, %v2156
        %v2197 = vpack.c.b16 %v2161, %v2157
        %v2198 = vpack.c.b16 %v2162, %v2158
        %v2199 = vpack.c.b16 %v2167, %v2163
        %v2200 = vpack.c.b16 %v2168, %v2164
        %v2201 = vpack.c.b16 %v2169, %v2165
        %v2202 = vpack.c.b16 %v2170, %v2166
        %2235 = vmatprep.subr.bf16.mxu0 %v2200
        %2236 = vmatpush1.bf16.msra.mxu0 %v2199
        %2237 = vmatprep.subr.bf16.mxu0 %v2196
        %2238 = vmatpush1.bf16.msra.mxu0 %v2195
        %2239 = vmatprep.subr.bf16.mxu0 %v2192
        %2240 = vmatpush1.bf16.msra.mxu0 %v2191
        %2241 = vmatprep.subr.bf16.mxu0 %v2188
        %2242 = vmatpush1.bf16.msra.mxu0 %v2187
        %2243 = vmatprep.subr.bf16.mxu0 %v2184
        %2244 = vmatpush1.bf16.msra.mxu0 %v2183
        %2245 = vmatprep.subr.bf16.mxu0 %v2180
        %2246 = vmatpush1.bf16.msra.mxu0 %v2179
        %2247 = vmatprep.subr.bf16.mxu0 %v2176
        %2248 = vmatpush1.bf16.msra.mxu0 %v2175
        %2249 = vmatprep.subr.bf16.mxu0 %v2172
        %2250 = vmatpush1.bf16.msra.mxu0 %v2171
        %2251 = vmatprep.subr.bf16.mxu0 0
        %2252 = vmatpush2.bf16.msra.mxu0 0
        %2253 = vmatprep.subr.bf16.mxu0 0
        %2254 = vmatpush2.bf16.msra.mxu0 0
        %2255 = vmatprep.subr.bf16.mxu0 0
        %2256 = vmatpush2.bf16.msra.mxu0 0
        %2257 = vmatprep.subr.bf16.mxu0 0
        %2258 = vmatpush2.bf16.msra.mxu0 0
        %2259 = vmatprep.subr.bf16.mxu0 0
        %2260 = vmatpush2.bf16.msra.mxu0 0
        %2261 = vmatprep.subr.bf16.mxu0 0
        %2262 = vmatpush2.bf16.msra.mxu0 0
        %2263 = vmatprep.subr.bf16.mxu0 0
        %2264 = vmatpush2.bf16.msra.mxu0 0
        %2265 = vmatprep.subr.bf16.mxu0 0
        %2266 = vmatpush2.bf16.msra.mxu0 0
        %2267 = vmatprep.mubr.bf16.mxu0 0
        %2268 = vmatmul.mubr.bf16.gmra.mxu0 %v2053
        %v2269 = vpop.f32.mrf.mxu0
        %v2270 = vadd.f32 %v2058, %v2269
        %v2271 = vpop.f32.mrf.mxu0
        %v2272 = vadd.f32 %v2062, %v2271
        %v2273 = vpop.f32.mrf.mxu0
        %v2274 = vadd.f32 %v2058, %v2273
        %v2275 = vpop.f32.mrf.mxu0
        %v2276 = vadd.f32 %v2062, %v2275
        %2277 = vdwg.mxu0
        %2278 = vmatprep.subr.bf16.mxu0 %v2202
        %2279 = vmatpush1.bf16.msra.mxu0 %v2201
        %2280 = vmatprep.subr.bf16.mxu0 %v2198
        %2281 = vmatpush1.bf16.msra.mxu0 %v2197
        %2282 = vmatprep.subr.bf16.mxu0 %v2194
        %2283 = vmatpush1.bf16.msra.mxu0 %v2193
        %2284 = vmatprep.subr.bf16.mxu0 %v2190
        %2285 = vmatpush1.bf16.msra.mxu0 %v2189
        %2286 = vmatprep.subr.bf16.mxu0 %v2186
        %2287 = vmatpush1.bf16.msra.mxu0 %v2185
        %2288 = vmatprep.subr.bf16.mxu0 %v2182
        %2289 = vmatpush1.bf16.msra.mxu0 %v2181
        %2290 = vmatprep.subr.bf16.mxu0 %v2178
        %2291 = vmatpush1.bf16.msra.mxu0 %v2177
        %2292 = vmatprep.subr.bf16.mxu0 %v2174
        %2293 = vmatpush1.bf16.msra.mxu0 %v2173
        %2294 = vmatprep.subr.bf16.mxu0 0
        %2295 = vmatpush2.bf16.msra.mxu0 0
        %2296 = vmatprep.subr.bf16.mxu0 0
        %2297 = vmatpush2.bf16.msra.mxu0 0
        %2298 = vmatprep.subr.bf16.mxu0 0
        %2299 = vmatpush2.bf16.msra.mxu0 0
        %2300 = vmatprep.subr.bf16.mxu0 0
        %2301 = vmatpush2.bf16.msra.mxu0 0
        %2302 = vmatprep.subr.bf16.mxu0 0
        %2303 = vmatpush2.bf16.msra.mxu0 0
        %2304 = vmatprep.subr.bf16.mxu0 0
        %2305 = vmatpush2.bf16.msra.mxu0 0
        %2306 = vmatprep.subr.bf16.mxu0 0
        %2307 = vmatpush2.bf16.msra.mxu0 0
        %2308 = vmatprep.subr.bf16.mxu0 0
        %2309 = vmatpush2.bf16.msra.mxu0 0
        %2310 = vmatprep.mubr.bf16.mxu0 0
        %2311 = vmatmul.mubr.bf16.gmra.mxu0 %v2053
        %v2312 = vpop.f32.mrf.mxu0
        %v2313 = vadd.f32 %v2066, %v2312
        %v2314 = vpop.f32.mrf.mxu0
        %v2315 = vadd.f32 %v2070, %v2314
        %v2316 = vpop.f32.mrf.mxu0
        %v2317 = vadd.f32 %v2066, %v2316
        %v2318 = vpop.f32.mrf.mxu0
        %v2319 = vadd.f32 %v2070, %v2318
        %2320 = vdwg.mxu0
        %v2321 = vmul.f32 %v2270, -1.702
        %v2322 = vmul.f32 %v2272, -1.702
        %v2323 = vmul.f32 %v2313, -1.702
        %v2324 = vmul.f32 %v2315, -1.702
        %v2325 = vmul.f32 %v2274, -1.702
        %v2326 = vmul.f32 %v2276, -1.702
        %v2327 = vmul.f32 %v2317, -1.702
        %v2328 = vmul.f32 %v2319, -1.702
        %v2329 = vmul.f32 %v2321, 1.442695
        %v2330 = vpow.pop %v2329
        %v2331 = vmul.f32 %v2322, 1.442695
        %v2332 = vpow.pop %v2331
        %v2333 = vmul.f32 %v2323, 1.442695
        %v2334 = vpow.pop %v2333
        %v2335 = vmul.f32 %v2324, 1.442695
        %v2336 = vpow.pop %v2335
        %v2337 = vmul.f32 %v2325, 1.442695
        %v2338 = vpow.pop %v2337
        %v2339 = vmul.f32 %v2326, 1.442695
        %v2340 = vpow.pop %v2339
        %v2341 = vmul.f32 %v2327, 1.442695
        %v2342 = vpow.pop %v2341
        %v2343 = vmul.f32 %v2328, 1.442695
        %v2344 = vpow.pop %v2343
        %v2345 = vadd.f32 %v2330, 1.0
        %v2346 = vadd.f32 %v2332, 1.0
        %v2347 = vadd.f32 %v2334, 1.0
        %v2348 = vadd.f32 %v2336, 1.0
        %v2349 = vadd.f32 %v2338, 1.0
        %v2350 = vadd.f32 %v2340, 1.0
        %v2351 = vadd.f32 %v2342, 1.0
        %v2352 = vadd.f32 %v2344, 1.0
        %v2353 = vrcp.pop %v2345
        %v2354 = vrcp.pop %v2346
        %v2355 = vrcp.pop %v2347
        %v2356 = vrcp.pop %v2348
        %v2357 = vrcp.pop %v2349
        %v2358 = vrcp.pop %v2350
        %v2359 = vrcp.pop %v2351
        %v2360 = vrcp.pop %v2352
        %v2361 = vmul.f32 %v2270, %v2353
        %v2362 = vmul.f32 %v2272, %v2354
        %v2363 = vmul.f32 %v2313, %v2355
        %v2364 = vmul.f32 %v2315, %v2356
        %v2365 = vmul.f32 %v2274, %v2357
        %v2366 = vmul.f32 %v2276, %v2358
        %v2367 = vmul.f32 %v2317, %v2359
        %v2368 = vmul.f32 %v2319, %v2360
        %v2369 = vpack.c.bf16 %v2365, %v2361
        %v2370 = vpack.c.bf16 %v2366, %v2362
        %v2371 = vpack.c.bf16 %v2367, %v2363
        %v2372 = vpack.c.bf16 %v2368, %v2364
        %v2437 = vunpack.c.l.b16 %v1047
        %v2438 = vunpack.c.l.b16 %v1048
        %v2439 = vunpack.c.l.b16 %v1049
        %v2440 = vunpack.c.l.b16 %v1050
        %v2441 = vunpack.c.l.b16 %v1051
        %v2442 = vunpack.c.l.b16 %v1052
        %v2443 = vunpack.c.l.b16 %v1053
        %v2444 = vunpack.c.l.b16 %v1054
        %v2445 = vunpack.c.l.b16 %v1055
        %v2446 = vunpack.c.l.b16 %v1056
        %v2447 = vunpack.c.l.b16 %v1057
        %v2448 = vunpack.c.l.b16 %v1058
        %v2449 = vunpack.c.l.b16 %v1059
        %v2450 = vunpack.c.l.b16 %v1060
        %v2451 = vunpack.c.l.b16 %v1061
        %v2452 = vunpack.c.l.b16 %v1062
        %v2453 = vunpack.c.l.b16 %v1063
        %v2454 = vunpack.c.l.b16 %v1064
        %v2455 = vunpack.c.l.b16 %v1065
        %v2456 = vunpack.c.l.b16 %v1066
        %v2457 = vunpack.c.l.b16 %v1067
        %v2458 = vunpack.c.l.b16 %v1068
        %v2459 = vunpack.c.l.b16 %v1069
        %v2460 = vunpack.c.l.b16 %v1070
        %v2461 = vunpack.c.l.b16 %v1071
        %v2462 = vunpack.c.l.b16 %v1072
        %v2463 = vunpack.c.l.b16 %v1073
        %v2464 = vunpack.c.l.b16 %v1074
        %v2465 = vunpack.c.l.b16 %v1075
        %v2466 = vunpack.c.l.b16 %v1076
        %v2467 = vunpack.c.l.b16 %v1077
        %v2468 = vunpack.c.l.b16 %v1078
        %v2469 = vunpack.c.l.b16 %v1079
        %v2470 = vunpack.c.l.b16 %v1080
        %v2471 = vunpack.c.l.b16 %v1081
        %v2472 = vunpack.c.l.b16 %v1082
        %v2473 = vunpack.c.l.b16 %v1083
        %v2474 = vunpack.c.l.b16 %v1084
        %v2475 = vunpack.c.l.b16 %v1085
        %v2476 = vunpack.c.l.b16 %v1086
        %v2477 = vunpack.c.l.b16 %v1087
        %v2478 = vunpack.c.l.b16 %v1088
        %v2479 = vunpack.c.l.b16 %v1089
        %v2480 = vunpack.c.l.b16 %v1090
        %v2481 = vunpack.c.l.b16 %v1091
        %v2482 = vunpack.c.l.b16 %v1092
        %v2483 = vunpack.c.l.b16 %v1093
        %v2484 = vunpack.c.l.b16 %v1094
        %v2485 = vunpack.c.l.b16 %v1095
        %v2486 = vunpack.c.l.b16 %v1096
        %v2487 = vunpack.c.l.b16 %v1097
        %v2488 = vunpack.c.l.b16 %v1098
        %v2489 = vunpack.c.l.b16 %v1099
        %v2490 = vunpack.c.l.b16 %v1100
        %v2491 = vunpack.c.l.b16 %v1101
        %v2492 = vunpack.c.l.b16 %v1102
        %v2493 = vunpack.c.l.b16 %v1103
        %v2494 = vunpack.c.l.b16 %v1104
        %v2495 = vunpack.c.l.b16 %v1105
        %v2496 = vunpack.c.l.b16 %v1106
        %v2497 = vunpack.c.l.b16 %v1107
        %v2498 = vunpack.c.l.b16 %v1108
        %v2499 = vunpack.c.l.b16 %v1109
        %v2500 = vunpack.c.l.b16 %v1110
        %v2501 = vpack.c.b16 %v2438, %v2437
        %v2502 = vpack.c.b16 %v2440, %v2439
        %v2503 = vpack.c.b16 %v2442, %v2441
        %v2504 = vpack.c.b16 %v2444, %v2443
        %v2505 = vpack.c.b16 %v2446, %v2445
        %v2506 = vpack.c.b16 %v2448, %v2447
        %v2507 = vpack.c.b16 %v2450, %v2449
        %v2508 = vpack.c.b16 %v2452, %v2451
        %v2509 = vpack.c.b16 %v2454, %v2453
        %v2510 = vpack.c.b16 %v2456, %v2455
        %v2511 = vpack.c.b16 %v2458, %v2457
        %v2512 = vpack.c.b16 %v2460, %v2459
        %v2513 = vpack.c.b16 %v2462, %v2461
        %v2514 = vpack.c.b16 %v2464, %v2463
        %v2515 = vpack.c.b16 %v2466, %v2465
        %v2516 = vpack.c.b16 %v2468, %v2467
        %v2517 = vpack.c.b16 %v2470, %v2469
        %v2518 = vpack.c.b16 %v2472, %v2471
        %v2519 = vpack.c.b16 %v2474, %v2473
        %v2520 = vpack.c.b16 %v2476, %v2475
        %v2521 = vpack.c.b16 %v2478, %v2477
        %v2522 = vpack.c.b16 %v2480, %v2479
        %v2523 = vpack.c.b16 %v2482, %v2481
        %v2524 = vpack.c.b16 %v2484, %v2483
        %v2525 = vpack.c.b16 %v2486, %v2485
        %v2526 = vpack.c.b16 %v2488, %v2487
        %v2527 = vpack.c.b16 %v2490, %v2489
        %v2528 = vpack.c.b16 %v2492, %v2491
        %v2529 = vpack.c.b16 %v2494, %v2493
        %v2530 = vpack.c.b16 %v2496, %v2495
        %v2531 = vpack.c.b16 %v2498, %v2497
        %v2532 = vpack.c.b16 %v2500, %v2499
        %2565 = vmatprep.subr.bf16.mxu0 0
        %2566 = vmatpush1.bf16.msra.mxu0 %v2508
        %2567 = vmatprep.subr.bf16.mxu0 0
        %2568 = vmatpush1.bf16.msra.mxu0 %v2507
        %2569 = vmatprep.subr.bf16.mxu0 0
        %2570 = vmatpush1.bf16.msra.mxu0 %v2506
        %2571 = vmatprep.subr.bf16.mxu0 0
        %2572 = vmatpush1.bf16.msra.mxu0 %v2505
        %2573 = vmatprep.subr.bf16.mxu0 0
        %2574 = vmatpush1.bf16.msra.mxu0 %v2504
        %2575 = vmatprep.subr.bf16.mxu0 0
        %2576 = vmatpush1.bf16.msra.mxu0 %v2503
        %2577 = vmatprep.subr.bf16.mxu0 0
        %2578 = vmatpush1.bf16.msra.mxu0 %v2502
        %2579 = vmatprep.subr.bf16.mxu0 0
        %2580 = vmatpush1.bf16.msra.mxu0 %v2501
        %2581 = vmatprep.subr.bf16.mxu0 0
        %2582 = vmatpush2.bf16.msra.mxu0 %v2516
        %2583 = vmatprep.subr.bf16.mxu0 0
        %2584 = vmatpush2.bf16.msra.mxu0 %v2515
        %2585 = vmatprep.subr.bf16.mxu0 0
        %2586 = vmatpush2.bf16.msra.mxu0 %v2514
        %2587 = vmatprep.subr.bf16.mxu0 0
        %2588 = vmatpush2.bf16.msra.mxu0 %v2513
        %2589 = vmatprep.subr.bf16.mxu0 0
        %2590 = vmatpush2.bf16.msra.mxu0 %v2512
        %2591 = vmatprep.subr.bf16.mxu0 0
        %2592 = vmatpush2.bf16.msra.mxu0 %v2511
        %2593 = vmatprep.subr.bf16.mxu0 0
        %2594 = vmatpush2.bf16.msra.mxu0 %v2510
        %2595 = vmatprep.subr.bf16.mxu0 0
        %2596 = vmatpush2.bf16.msra.mxu0 %v2509
        %2597 = vmatprep.mubr.bf16.mxu0 %v2370
        %2598 = vmatmul.mubr.bf16.gmra.mxu0 %v2369
        %v2599 = vpop.f32.mrf.mxu0
        %v2600 = vadd.f32 0.0, %v2599
        %v2601 = vpop.f32.mrf.mxu0
        %v2602 = vpop.f32.mrf.mxu0
        %v2603 = vadd.f32 0.0, %v2602
        %v2604 = vpop.f32.mrf.mxu0
        %2605 = vdwg.mxu0
        %2606 = vmatprep.subr.bf16.mxu0 0
        %2607 = vmatpush1.bf16.msra.mxu0 %v2524
        %2608 = vmatprep.subr.bf16.mxu0 0
        %2609 = vmatpush1.bf16.msra.mxu0 %v2523
        %2610 = vmatprep.subr.bf16.mxu0 0
        %2611 = vmatpush1.bf16.msra.mxu0 %v2522
        %2612 = vmatprep.subr.bf16.mxu0 0
        %2613 = vmatpush1.bf16.msra.mxu0 %v2521
        %2614 = vmatprep.subr.bf16.mxu0 0
        %2615 = vmatpush1.bf16.msra.mxu0 %v2520
        %2616 = vmatprep.subr.bf16.mxu0 0
        %2617 = vmatpush1.bf16.msra.mxu0 %v2519
        %2618 = vmatprep.subr.bf16.mxu0 0
        %2619 = vmatpush1.bf16.msra.mxu0 %v2518
        %2620 = vmatprep.subr.bf16.mxu0 0
        %2621 = vmatpush1.bf16.msra.mxu0 %v2517
        %2622 = vmatprep.subr.bf16.mxu0 0
        %2623 = vmatpush2.bf16.msra.mxu0 %v2532
        %2624 = vmatprep.subr.bf16.mxu0 0
        %2625 = vmatpush2.bf16.msra.mxu0 %v2531
        %2626 = vmatprep.subr.bf16.mxu0 0
        %2627 = vmatpush2.bf16.msra.mxu0 %v2530
        %2628 = vmatprep.subr.bf16.mxu0 0
        %2629 = vmatpush2.bf16.msra.mxu0 %v2529
        %2630 = vmatprep.subr.bf16.mxu0 0
        %2631 = vmatpush2.bf16.msra.mxu0 %v2528
        %2632 = vmatprep.subr.bf16.mxu0 0
        %2633 = vmatpush2.bf16.msra.mxu0 %v2527
        %2634 = vmatprep.subr.bf16.mxu0 0
        %2635 = vmatpush2.bf16.msra.mxu0 %v2526
        %2636 = vmatprep.subr.bf16.mxu0 0
        %2637 = vmatpush2.bf16.msra.mxu0 %v2525
        %2638 = vmatprep.mubr.bf16.mxu0 %v2372
        %2639 = vmatmul.mubr.bf16.gmra.mxu0 %v2371
        %v2640 = vpop.f32.mrf.mxu0
        %v2641 = vadd.f32 %v2600, %v2640
        %v2642 = vpop.f32.mrf.mxu0
        %v2643 = vpop.f32.mrf.mxu0
        %v2644 = vadd.f32 %v2603, %v2643
        %v2645 = vpop.f32.mrf.mxu0
        %2646 = vdwg.mxu0
        %v2647 = vadd.f32 %v2013, %v2641
        %v2648 = vadd.f32 %v2014, %v2644
        %v2650 = vlaneseq
        %v2651 = vshrl.u32 %v2650, 7
        %v2652 = vsub.s32 0, %v2651
        %v2653 = vrot.slane %v1111, %v2652
        %v2655 = vadd.f32 %v2647, %v2653
        %v2656 = vadd.f32 %v2648, %v2653
        %2657 = vst [vmem:[#allocation2] sm:$0xff] %v2655
        %2658 = vst [vmem:[#allocation2 + $0x8] sm:$0xff] %v2656
        %p2659 = scmp.eq.s32.totalorder %s52, 1
        // Predicated region
        $region137: #{tpu_custom_call.1} parent=91 // pred_check
          %p2660 = pneg %p2659
        $region138: #{tpu_custom_call.1} parent=91 // pred_check_branch
          %2662 = sbr.rel (%p2660) target = $region140
        $region139: #{tpu_custom_call.1} parent=91 // pred_region
          %v2663 = vlaneseq
          %v2664 = vshrl.u32 %v2663, 7
          %v2665 = vadd.s32 %v2664, 8
          %s2666 = smul.u32 %s51, 2
          %s2667 = sld [smem:[#allocation4 + %s2666]]
          %v2668 = vstv %s2667
          %vm2669 = vcmp.eq.s32.totalorder %v2664, %v2668
          %vm2670 = vcmp.eq.s32.totalorder %v2665, %v2668
          %v2671 = vsel %vm2669, 1, 0
          %v2672 = vsel %vm2670, 1, 0
          %v2673 = vcvt.s32.f32 %v2671
          %v2674 = vcvt.s32.f32 %v2672
          %v2675 = vmul.f32 %v2673, %v2655
          %v2676 = vmul.f32 %v2674, %v2656
          %v2677 = vadd.f32 %v2675, %v2676
          %v2678 = vrot.slane %v2677, 4
          %v2679 = vadd.f32 %v2677, %v2678
          %v2680 = vrot.slane %v2679, 2
          %v2681 = vadd.f32 %v2679, %v2680
          %v2682 = vrot.slane %v2681, 1
          %v2683 = vadd.f32 %v2681, %v2682
          %s2684 = sadd.s32 %s2666, 1
          %s2685 = sld [smem:[#allocation4 + %s2684]]
          %s2686 = sadd.s32 %s2685, 8
          %v2687 = vstv %s2686
          %vm2688 = vcmp.eq.s32.totalorder %v2664, %v2687
          %vm2689 = vcmp.eq.s32.totalorder %v2665, %v2687
          %v2690 = vsel %vm2688, 1, 0
          %v2691 = vsel %vm2689, 1, 0
          %v2692 = vcvt.s32.f32 %v2690
          %v2693 = vcvt.s32.f32 %v2691
          %v2694 = vmul.f32 %v2692, %v2655
          %v2695 = vmul.f32 %v2693, %v2656
          %v2696 = vadd.f32 %v2694, %v2695
          %v2697 = vrot.slane %v2696, 4
          %v2698 = vadd.f32 %v2696, %v2697
          %v2699 = vrot.slane %v2698, 2
          %v2700 = vadd.f32 %v2698, %v2699
          %v2701 = vrot.slane %v2700, 1
          %v2702 = vadd.f32 %v2700, %v2701
          %vm2703 = vcmask 1040384
          %v2704 = vsel %vm2703, %v2683, %v2702
          %v2705 = vld [vmem:[%s16] sm:$0x1]
          %v2706 = vld [vmem:[%s17] sm:$0x1]
          %v2707 = vld [vmem:[#allocation20] sm:$0xf]
          %v2708 = vld [vmem:[#allocation20 + $0x4] sm:$0xf]
          %v2709 = vld [vmem:[#allocation20 + $0x8] sm:$0xf]
          %v2710 = vld [vmem:[#allocation20 + $0xc] sm:$0xf]
          %v2711 = vld [vmem:[#allocation20 + $0x10] sm:$0xf]
          %v2712 = vld [vmem:[#allocation20 + $0x14] sm:$0xf]
          %v2713 = vld [vmem:[#allocation20 + $0x18] sm:$0xf]
          %v2714 = vld [vmem:[#allocation20 + $0x1c] sm:$0xf]
          %v2715 = vld [vmem:[#allocation20 + $0x20] sm:$0xf]
          %v2716 = vld [vmem:[#allocation20 + $0x24] sm:$0xf]
          %v2717 = vld [vmem:[#allocation20 + $0x28] sm:$0xf]
          %v2718 = vld [vmem:[#allocation20 + $0x2c] sm:$0xf]
          %v2719 = vld [vmem:[#allocation20 + $0x30] sm:$0xf]
          %v2720 = vld [vmem:[#allocation20 + $0x34] sm:$0xf]
          %v2721 = vld [vmem:[#allocation20 + $0x38] sm:$0xf]
          %v2722 = vld [vmem:[#allocation20 + $0x3c] sm:$0xf]
          %vm2723 = vcmask 1041408
          %v2724 = vsel %vm2723, %v2704, 0.0
          %2725 = vadd.xlane.f32.xlu0 %v2724
          %v2726 = vpop.xlane.xlu0 %2725
          %v2727 = vmul.f32 %v2726, %v1118
          %v2728 = vsub.f32 %v2704, %v2727
          %v2729 = vmul.f32 %v2728, %v2728
          %v2730 = vsel %vm2723, %v2729, 0.0
          %2731 = vadd.xlane.f32.xlu0 %v2730
          %v2732 = vpop.xlane.xlu0 %2731
          %v2733 = vmul.f32 %v2732, %v1118
          %v2734 = vadd.f32 %v2733, 1e-05
          %v2735 = vrsqrt.pop %v2734
          %v2736 = vmul.f32 %v2728, %v2735
          %v2738 = vlaneseq
          %v2739 = vshrl.u32 %v2738, 7
          %v2740 = vsub.s32 0, %v2739
          %v2741 = vrot.slane %v2705, %v2740
          %v2743 = vmul.f32 %v2736, %v2741
          %v2745 = vlaneseq
          %v2746 = vshrl.u32 %v2745, 7
          %v2747 = vsub.s32 0, %v2746
          %v2748 = vrot.slane %v2706, %v2747
          %v2750 = vadd.f32 %v2743, %v2748
          %v2751 = vpack.c.bf16 %v2750, %v2750
          %v2768 = vunpack.c.l.b16 %v2707
          %v2769 = vunpack.c.l.b16 %v2708
          %v2770 = vunpack.c.l.b16 %v2709
          %v2771 = vunpack.c.l.b16 %v2710
          %v2772 = vunpack.c.l.b16 %v2711
          %v2773 = vunpack.c.l.b16 %v2712
          %v2774 = vunpack.c.l.b16 %v2713
          %v2775 = vunpack.c.l.b16 %v2714
          %v2776 = vunpack.c.l.b16 %v2715
          %v2777 = vunpack.c.l.b16 %v2716
          %v2778 = vunpack.c.l.b16 %v2717
          %v2779 = vunpack.c.l.b16 %v2718
          %v2780 = vunpack.c.l.b16 %v2719
          %v2781 = vunpack.c.l.b16 %v2720
          %v2782 = vunpack.c.l.b16 %v2721
          %v2783 = vunpack.c.l.b16 %v2722
          %v2784 = vpack.c.b16 %v2769, %v2768
          %v2785 = vpack.c.b16 %v2771, %v2770
          %v2786 = vpack.c.b16 %v2773, %v2772
          %v2787 = vpack.c.b16 %v2775, %v2774
          %v2788 = vpack.c.b16 %v2777, %v2776
          %v2789 = vpack.c.b16 %v2779, %v2778
          %v2790 = vpack.c.b16 %v2781, %v2780
          %v2791 = vpack.c.b16 %v2783, %v2782
          %2800 = vmatprep.subr.bf16.mxu0 0
          %2801 = vmatpush1.bf16.msra.mxu0 %v2791
          %2802 = vmatprep.subr.bf16.mxu0 0
          %2803 = vmatpush1.bf16.msra.mxu0 %v2790
          %2804 = vmatprep.subr.bf16.mxu0 0
          %2805 = vmatpush1.bf16.msra.mxu0 %v2789
          %2806 = vmatprep.subr.bf16.mxu0 0
          %2807 = vmatpush1.bf16.msra.mxu0 %v2788
          %2808 = vmatprep.subr.bf16.mxu0 0
          %2809 = vmatpush1.bf16.msra.mxu0 %v2787
          %2810 = vmatprep.subr.bf16.mxu0 0
          %2811 = vmatpush1.bf16.msra.mxu0 %v2786
          %2812 = vmatprep.subr.bf16.mxu0 0
          %2813 = vmatpush1.bf16.msra.mxu0 %v2785
          %2814 = vmatprep.subr.bf16.mxu0 0
          %2815 = vmatpush1.bf16.msra.mxu0 %v2784
          %2816 = vmatprep.subr.bf16.mxu0 0
          %2817 = vmatpush2.bf16.msra.mxu0 0
          %2818 = vmatprep.subr.bf16.mxu0 0
          %2819 = vmatpush2.bf16.msra.mxu0 0
          %2820 = vmatprep.subr.bf16.mxu0 0
          %2821 = vmatpush2.bf16.msra.mxu0 0
          %2822 = vmatprep.subr.bf16.mxu0 0
          %2823 = vmatpush2.bf16.msra.mxu0 0
          %2824 = vmatprep.subr.bf16.mxu0 0
          %2825 = vmatpush2.bf16.msra.mxu0 0
          %2826 = vmatprep.subr.bf16.mxu0 0
          %2827 = vmatpush2.bf16.msra.mxu0 0
          %2828 = vmatprep.subr.bf16.mxu0 0
          %2829 = vmatpush2.bf16.msra.mxu0 0
          %2830 = vmatprep.subr.bf16.mxu0 0
          %2831 = vmatpush2.bf16.msra.mxu0 0
          %2832 = vmatprep.mubr.bf16.mxu0 0
          %2833 = vmatmul.mubr.bf16.gmra.mxu0 %v2751
          %v2834 = vpop.f32.mrf.mxu0
          %v2835 = vadd.f32 0.0, %v2834
          %v2836 = vpop.f32.mrf.mxu0
          %v2837 = vpop.f32.mrf.mxu0
          %v2838 = vpop.f32.mrf.mxu0
          %2839 = vdwg.mxu0
          %2840 = vst [vmem:[#allocation22] sm:$0x3] %v2835
        $region140: #{tpu_custom_call.1} parent=91 // pred_fallthru
          _
        // Predicated region
        $region141: #{tpu_custom_call.1} parent=91 // pred_check
          %p2841 = pneg %p520
        $region142: #{tpu_custom_call.1} parent=91 // pred_check_branch
          %2843 = sbr.rel (%p2841) target = $region144
        $region143: #{tpu_custom_call.1} parent=91 // pred_region
          %s2845 = ssub.s32 32, 32
          %2846 = vsyncadd [#allocation7], %s2845
          %s2847 = smul.addr %s51, 32
          %s2848 = scalar_lea.hbm %s19, %s2847
          %s2850 = sshll.u32 [#allocation22], 4
          %s2851 = int_to_ptr.vmem [resolvable:$true] %s2850
          %2853 = dma.vmem_to_hbm [thread:$0]  %s2851, 32, %s2848, [#allocation7]
        $region144: #{tpu_custom_call.1} parent=91 // pred_fallthru
          _
        // Predicated region
        $region145: #{tpu_custom_call.1} parent=91 // pred_check
          %p2854 = pneg %p520
        $region146: #{tpu_custom_call.1} parent=91 // pred_check_branch
          %2856 = sbr.rel (%p2854) target = $region148
        $region147: #{tpu_custom_call.1} parent=91 // pred_region
          %2857 = dma.done [#allocation7], 32
        $region148: #{tpu_custom_call.1} parent=91 // pred_fallthru
          _
      $region92: #{tpu_custom_call.1} parent=5 // pred_fallthru
        _
      %p2858 = scmp.le.s32.totalorder 2, %s42
      // Predicated region
      $region149: #{tpu_custom_call.1} parent=5 // pred_check
        %p2859 = pneg %p2858
      $region150: #{tpu_custom_call.1} parent=5 // pred_check_branch
        %2861 = sbr.rel (%p2859) target = $region152
      $region151: #{tpu_custom_call.1} parent=5 // pred_region
        %s2862 = ssub.s32 %s42, 2
      $region152: #{tpu_custom_call.1} parent=5 // pred_fallthru
        _
    $region6: #{tpu_custom_call.1} parent=1 // loop_footer
      %s46 = sadd.s32 1, %s42
    $region7: #{tpu_custom_call.1} parent=1 // loop_footer_branch
      %41 = sbr.rel target = $region3
    $region8: #{tpu_custom_call.1} parent=1 // loop_exit
      _
    %2863 = vsyncpa [#allocation6], 1
    %s2864 = scalar_lea.sflag [#allocation6], 1
    %2865 = vsyncpa %s2864, 1
    %2866 = vsyncpa [#allocation9], 1
    %2867 = vsyncpa [#allocation12], 1
    %s2868 = scalar_lea.sflag [#allocation12], 1
    %2869 = vsyncpa %s2868, 1
    %2870 = vsyncpa [#allocation15], 1
    %s2871 = scalar_lea.sflag [#allocation15], 1
    %2872 = vsyncpa %s2871, 1
    %2873 = vsyncpa [#allocation18], 1
    %s2874 = scalar_lea.sflag [#allocation18], 1
    %2875 = vsyncpa %s2874, 1
    %2876 = vsyncpa [#allocation21], 1
    %2877 = vsyncpa [#allocation7], 1
    %s2878 = scalar_lea.sflag [#allocation7], 1
    %2879 = vsyncpa %s2878, 1

</llo_original>
